<compile_context>
chip_gen: v7x
topology: tpu7x:2x2x1
jax: 0.10.0
libtpu: 0.0.40
codegen_flags: <defaults>
</compile_context>

<pallas_src>
import jax
import jax.numpy as jnp
from jax.experimental import pallas as pl
from jax.experimental.pallas import tpu as pltpu

C_PAD = 128                                   # lane-dense channel padding
CONV_DEFS = [(7, 3, 1, 96), (3, 1, 96, 96), (3, 1, 96, 64), (3, 1, 64, 48)]
#             (kernel, stride, cin, cout)
NEG_SLOPE = 0.01                              # PyTorch LeakyReLU default
BN_EPS = 1e-5


def _leaky_relu(y):
    return jnp.where(y > 0.0, y, NEG_SLOPE * y)


# ----------------------------------------------------------------------------
# Fused conv-layer kernel: one BN group (one of patch_a / patch_b halves)
#   y = LeakyReLU( BN_train( X @ W ) )
# ----------------------------------------------------------------------------
def _conv_bn_lrelu_kernel(x_ref, w_ref, g_ref, b_ref, o_ref):
    # x_ref: (1, h, K) bf16   w_ref: (K, Cp) bf16   g/b: (1, Cp) f32
    y = jnp.dot(x_ref[0], w_ref[...], preferred_element_type=jnp.float32)
    mean = jnp.mean(y, axis=0, keepdims=True)
    var = jnp.mean((y - mean) ** 2, axis=0, keepdims=True)   # biased, like PyTorch
    y = (y - mean) * jax.lax.rsqrt(var + BN_EPS)
    y = y * g_ref[...] + b_ref[...]
    y = _leaky_relu(y)
    o_ref[0] = y.astype(o_ref.dtype)


def conv_bn_lrelu(cols, w, gamma, beta):
    """cols: (2, h, K) bf16 (two BN groups), w: (K, Cp) bf16 -> (2, h, Cp) bf16."""
    _, h, K = cols.shape
    Cp = w.shape[1]
    return pl.pallas_call(
        _conv_bn_lrelu_kernel,
        out_shape=jax.ShapeDtypeStruct((2, h, Cp), jnp.bfloat16),
        grid=(2,),
        in_specs=[
            pl.BlockSpec((1, h, K), lambda i: (i, 0, 0)),
            pl.BlockSpec((K, Cp), lambda i: (0, 0)),
            pl.BlockSpec((1, Cp), lambda i: (0, 0)),
            pl.BlockSpec((1, Cp), lambda i: (0, 0)),
        ],
        out_specs=pl.BlockSpec((1, h, Cp), lambda i: (i, 0, 0)),
        compiler_params=pltpu.CompilerParams(dimension_semantics=("parallel",)),
    )(cols, w, gamma, beta)


# ----------------------------------------------------------------------------
# Fully fused offset_net kernel: 7 Linear layers (+ one BatchNorm1d) in one call
# ----------------------------------------------------------------------------
def _offset_net_kernel(x_ref, w1_ref, b1_ref, ws_ref, bs_ref, g_ref, be_ref, o_ref):
    # Layer 1 (din may differ from 128 because of the folded flatten/concat).
    y = jnp.dot(x_ref[...], w1_ref[...], preferred_element_type=jnp.float32)
    y = _leaky_relu(y + b1_ref[...])
    # Layers 2..7; index 1 == original layer 3 (BatchNorm1d, bias dropped),
    # index 5 == final layer (no activation).
    for l in range(6):
        y = jnp.dot(y.astype(jnp.bfloat16), ws_ref[l],
                    preferred_element_type=jnp.float32)
        if l == 1:
            mean = jnp.mean(y, axis=0, keepdims=True)
            var = jnp.mean((y - mean) ** 2, axis=0, keepdims=True)
            y = (y - mean) * jax.lax.rsqrt(var + BN_EPS)
            y = y * g_ref[...] + be_ref[...]
        else:
            y = y + bs_ref[l]
        if l != 5:
            y = _leaky_relu(y)
    o_ref[...] = y


def offset_net(x0, w1, b1, ws, bs, g3, be3):
    N, K0 = x0.shape
    Cp = w1.shape[1]
    L = ws.shape[0]
    return pl.pallas_call(
        _offset_net_kernel,
        out_shape=jax.ShapeDtypeStruct((N, Cp), jnp.float32),
        grid=(1,),
        in_specs=[
            pl.BlockSpec((N, K0), lambda i: (0, 0)),
            pl.BlockSpec((K0, Cp), lambda i: (0, 0)),
            pl.BlockSpec((1, Cp), lambda i: (0, 0)),
            pl.BlockSpec((L, Cp, Cp), lambda i: (0, 0, 0)),
            pl.BlockSpec((L, 1, Cp), lambda i: (0, 0, 0)),
            pl.BlockSpec((1, Cp), lambda i: (0, 0)),
            pl.BlockSpec((1, Cp), lambda i: (0, 0)),
        ],
        out_specs=pl.BlockSpec((N, Cp), lambda i: (0, 0)),
    )(x0, w1, b1, ws, bs, g3, be3)


# ----------------------------------------------------------------------------
# im2col glue (plain JAX).  Columns ordered (ki, kj, c) to match weight reshape.
# TODO(synk): for much larger patch sizes, loop over the k*k taps inside the
# kernel (or use lax.conv_general_dilated_patches) to avoid the im2col blowup.
# ----------------------------------------------------------------------------
def _im2col(x, k, stride):
    N, H, W, C = x.shape
    OH = (H - k) // stride + 1
    OW = (W - k) // stride + 1
    cols = []
    for i in range(k):
        for j in range(k):
            cols.append(jax.lax.slice(
                x, (0, i, j, 0),
                (N, i + (OH - 1) * stride + 1, j + (OW - 1) * stride + 1, C),
                (1, stride, stride, 1)))
    patches = jnp.stack(cols, axis=3)                 # (N, OH, OW, k*k, C)
    return patches.reshape(N * OH * OW, k * k * C), OH, OW


# ----------------------------------------------------------------------------
# Forward pass
# ----------------------------------------------------------------------------
def el_paro_net_bigger(params, patch_a, patch_b):
    conv_ws, conv_gs, conv_bs, (w1, b1, ws, bs, g3, be3) = params
    N = patch_a.shape[0]

    # Run both patches through the shared conv stack as one 2N batch; BN stats
    # stay per-half via the grid dimension inside conv_bn_lrelu.
    x = jnp.concatenate([patch_a, patch_b], axis=0)           # (2N, 1, P, P)
    x = jnp.transpose(x, (0, 2, 3, 1)).astype(jnp.bfloat16)   # NHWC, bf16 operands

    for (k, stride, _cin, _cout), w, g, b in zip(CONV_DEFS, conv_ws, conv_gs, conv_bs):
        cols, OH, OW = _im2col(x, k, stride)
        cols = cols.reshape(2, N * OH * OW, cols.shape[1])
        y = conv_bn_lrelu(cols, w, g, b)                      # (2, N*OH*OW, C_PAD)
        x = y.reshape(2 * N, OH, OW, w.shape[1])

    fs = x.shape[1]
    # NHWC->NCHW flatten permutation and the (feat_a, feat_b) concat are folded
    # into w1, so just flatten NHWC (padded channels) and concat the halves.
    feat = x.reshape(2, N, fs * fs * C_PAD)
    x0 = jnp.concatenate([feat[0], feat[1]], axis=1)          # (N, 2*fs*fs*C_PAD)

    out = offset_net(x0, w1, b1, ws, bs, g3, be3)             # (N, 128)
    return out[:, :6]


# ----------------------------------------------------------------------------
# Parameter construction + one-time padding / layout folding
# ----------------------------------------------------------------------------
def _fold_first_linear(w1, b1, fs, c_real, c_pad, out_pad):
    """Fold NCHW-flatten + concat(feat_a, feat_b) into the first linear weight."""
    din, dout = w1.shape                     # din == 2 * fs*fs*c_real
    feat_real = fs * fs * c_real
    feat_pad = fs * fs * c_pad
    half = jnp.arange(2)[:, None, None, None]
    h = jnp.arange(fs)[None, :, None, None]
    w = jnp.arange(fs)[None, None, :, None]
    c = jnp.arange(c_real)[None, None, None, :]
    src = (half * feat_real + c * (fs * fs) + h * fs + w).ravel()   # NCHW index
    dst = (half * feat_pad + h * (fs * c_pad) + w * c_pad + c).ravel()  # NHWC-padded
    w1_eff = jnp.zeros((2 * feat_pad, out_pad), jnp.float32)
    w1_eff = w1_eff.at[dst, :dout].set(w1[src, :])
    b1_eff = jnp.zeros((1, out_pad), jnp.float32).at[0, :dout].set(b1)
    return w1_eff, b1_eff


def make_params(key, patch_size):
    keys = iter(jax.random.split(key, 32))

    conv_ws, conv_gs, conv_bs = [], [], []
    for li, (k, _stride, cin, cout) in enumerate(CONV_DEFS):
        fan_in = k * k * cin
        w = jax.random.normal(next(keys), (k, k, cin, cout), jnp.float32) / jnp.sqrt(fan_in)
        # Conv2d bias omitted: a per-channel constant is exactly cancelled by the
        # mean subtraction of the following train-mode BatchNorm2d.
        cin_pad = cin if li == 0 else C_PAD   # activations carry C_PAD channels
        wp = jnp.zeros((k, k, cin_pad, C_PAD), jnp.float32).at[:, :, :cin, :cout].set(w)
        conv_ws.append(wp.reshape(k * k * cin_pad, C_PAD).astype(jnp.bfloat16))
        conv_gs.append(jnp.zeros((1, C_PAD), jnp.float32).at[0, :cout].set(1.0))
        conv_bs.append(jnp.zeros((1, C_PAD), jnp.float32))    # BN beta init = 0

    fs = int((patch_size - 6) / 3 - 2 - 2 - 2)
    feature_size = fs * fs * 48
    input_size = feature_size * 2
    assert input_size <= C_PAD, "offset-net fusion assumes all hidden dims <= 128"
    # TODO(synk): for larger patch sizes (input_size > 128) pad each linear layer
    # to its own ceil-to-128 width instead of one uniform 128-wide weight stack.

    lin_defs = [
        (input_size, input_size, False, True),
        (input_size, input_size, False, True),
        (input_size, input_size // 2, True, True),       # BatchNorm1d here
        (input_size // 2, input_size // 2, False, True),
        (input_size // 2, input_size // 2, False, True),
        (input_size // 2, input_size // 4, False, True),
        (input_size // 4, 6, False, False),
    ]
    w1 = b1 = g3 = be3 = None
    lws, lbs = [], []
    for idx, (din, dout, use_bn, _use_act) in enumerate(lin_defs):
        w = jax.random.normal(next(keys), (din, dout), jnp.float32) / jnp.sqrt(din)
        b = jax.random.normal(next(keys), (dout,), jnp.float32) * 0.1
        if idx == 0:
            w1f, b1f = _fold_first_linear(w, b, fs, 48, C_PAD, C_PAD)
            w1 = w1f.astype(jnp.bfloat16)
            b1 = b1f
        else:
            wp = jnp.zeros((C_PAD, C_PAD), jnp.float32).at[:din, :dout].set(w)
            lws.append(wp.astype(jnp.bfloat16))
            if use_bn:
                # Linear bias before BatchNorm1d is cancelled by mean subtraction.
                lbs.append(jnp.zeros((1, C_PAD), jnp.float32))
                g3 = jnp.zeros((1, C_PAD), jnp.float32).at[0, :dout].set(1.0)
                be3 = jnp.zeros((1, C_PAD), jnp.float32)
            else:
                lbs.append(jnp.zeros((1, C_PAD), jnp.float32).at[0, :dout].set(b))

    ws = jnp.stack(lws)            # (6, 128, 128) bf16
    bs = jnp.stack(lbs)            # (6, 1, 128) f32
    off = (w1, b1, ws, bs, g3, be3)
    return (tuple(conv_ws), tuple(conv_gs), tuple(conv_bs), off)


# ----------------------------------------------------------------------------
if __name__ == "__main__":
    patch_size = 27   # -> feature spatial 1x1, feature_size=48, input_size=96
    batch = 2

    key = jax.random.PRNGKey(0)
    kp, ka, kb = jax.random.split(key, 3)
    params = make_params(kp, patch_size)

    patch_a = jax.random.normal(ka, (batch, 1, patch_size, patch_size), jnp.float32)
    patch_b = jax.random.normal(kb, (batch, 1, patch_size, patch_size), jnp.float32)

    fwd = jax.jit(el_paro_net_bigger)
    out = jax.block_until_ready(fwd(params, patch_a, patch_b))

    assert out.shape == (batch, 6), out.shape
    assert bool(jnp.all(jnp.isfinite(out)))
    print("KERNEL_OK")
</pallas_src>

<mosaic_0001>
module attributes {stable_mosaic.version = 11 : i64} {
  func.func @_conv_bn_lrelu_kernel(%arg0: i32, %arg1: memref<1x98x49xbf16, #tpu.memory_space<vmem>>, %arg2: memref<49x128xbf16, #tpu.memory_space<vmem>>, %arg3: memref<1x128xf32, #tpu.memory_space<vmem>>, %arg4: memref<1x128xf32, #tpu.memory_space<vmem>>, %arg5: memref<1x98x128xbf16, #tpu.memory_space<vmem>>) attributes {dimension_semantics = [#tpu.dimension_semantics<parallel>], iteration_bounds = array<i64: 2>, scalar_prefetch = 0 : i64, scratch_operands = 0 : i64, tpu.core_type = #tpu.core_type<tc>, window_params = [{transform_indices = @transform_0, window_bounds = array<i64: 1, 98, 49>}, {pipeline_mode = #tpu.pipeline_mode<synchronous>, transform_indices = @transform_1, window_bounds = array<i64: 49, 128>}, {pipeline_mode = #tpu.pipeline_mode<synchronous>, transform_indices = @transform_2, window_bounds = array<i64: 1, 128>}, {pipeline_mode = #tpu.pipeline_mode<synchronous>, transform_indices = @transform_3, window_bounds = array<i64: 1, 128>}, {transform_indices = @transform_4, window_bounds = array<i64: 1, 98, 128>}]} {
    %c0 = arith.constant 0 : index
    %c0_0 = arith.constant 0 : index
    %c0_1 = arith.constant 0 : index
    %0 = vector.load %arg1[%c0, %c0_0, %c0_1] : memref<1x98x49xbf16, #tpu.memory_space<vmem>>, vector<1x98x49xbf16>
    %1 = vector.shape_cast %0 : vector<1x98x49xbf16> to vector<98x49xbf16>
    %c0_2 = arith.constant 0 : index
    %c0_3 = arith.constant 0 : index
    %2 = vector.load %arg2[%c0_2, %c0_3] : memref<49x128xbf16, #tpu.memory_space<vmem>>, vector<49x128xbf16>
    %cst = arith.constant dense<0.000000e+00> : vector<98x128xf32>
    %3 = tpu.matmul %1, %2, %cst {dimension_numbers = #tpu.dot_dimension_numbers<[1], [0], [0], [1], [0, 0, 1, 1], [], []>} : vector<98x49xbf16>, vector<49x128xbf16>, vector<98x128xf32> -> vector<98x128xf32>
    %cst_4 = arith.constant dense<0.000000e+00> : vector<128xf32>
    %4 = vector.multi_reduction <add>, %3, %cst_4 [0] : vector<98x128xf32> to vector<128xf32>
    %5 = vector.shape_cast %4 : vector<128xf32> to vector<1x128xf32>
    %cst_5 = arith.constant 9.800000e+01 : f32
    %6 = vector.broadcast %cst_5 : f32 to vector<1x128xf32>
    %7 = arith.divf %5, %6 : vector<1x128xf32>
    %8 = vector.broadcast %7 : vector<1x128xf32> to vector<98x128xf32>
    %9 = arith.subf %3, %8 : vector<98x128xf32>
    %10 = arith.mulf %9, %9 : vector<98x128xf32>
    %cst_6 = arith.constant dense<0.000000e+00> : vector<128xf32>
    %11 = vector.multi_reduction <add>, %10, %cst_6 [0] : vector<98x128xf32> to vector<128xf32>
    %12 = vector.shape_cast %11 : vector<128xf32> to vector<1x128xf32>
    %cst_7 = arith.constant 9.800000e+01 : f32
    %13 = vector.broadcast %cst_7 : f32 to vector<1x128xf32>
    %14 = arith.divf %12, %13 : vector<1x128xf32>
    %15 = vector.broadcast %7 : vector<1x128xf32> to vector<98x128xf32>
    %16 = arith.subf %3, %15 : vector<98x128xf32>
    %cst_8 = arith.constant 9.99999974E-6 : f32
    %17 = vector.broadcast %cst_8 : f32 to vector<1x128xf32>
    %18 = arith.addf %14, %17 : vector<1x128xf32>
    %19 = math.rsqrt %18 : vector<1x128xf32>
    %20 = vector.broadcast %19 : vector<1x128xf32> to vector<98x128xf32>
    %21 = arith.mulf %16, %20 : vector<98x128xf32>
    %c0_9 = arith.constant 0 : index
    %c0_10 = arith.constant 0 : index
    %22 = vector.load %arg3[%c0_9, %c0_10] : memref<1x128xf32, #tpu.memory_space<vmem>>, vector<1x128xf32>
    %23 = vector.broadcast %22 : vector<1x128xf32> to vector<98x128xf32>
    %24 = arith.mulf %21, %23 : vector<98x128xf32>
    %c0_11 = arith.constant 0 : index
    %c0_12 = arith.constant 0 : index
    %25 = vector.load %arg4[%c0_11, %c0_12] : memref<1x128xf32, #tpu.memory_space<vmem>>, vector<1x128xf32>
    %26 = vector.broadcast %25 : vector<1x128xf32> to vector<98x128xf32>
    %27 = arith.addf %24, %26 : vector<98x128xf32>
    %cst_13 = arith.constant 0.000000e+00 : f32
    %28 = vector.broadcast %cst_13 : f32 to vector<98x128xf32>
    %29 = arith.cmpf ogt, %27, %28 : vector<98x128xf32>
    %cst_14 = arith.constant 0.00999999977 : f32
    %30 = vector.broadcast %cst_14 : f32 to vector<98x128xf32>
    %31 = arith.mulf %30, %27 : vector<98x128xf32>
    %32 = arith.select %29, %27, %31 : vector<98x128xi1>, vector<98x128xf32>
    %33 = arith.truncf %32 : vector<98x128xf32> to vector<98x128xbf16>
    %c0_15 = arith.constant 0 : index
    %c0_16 = arith.constant 0 : index
    %c0_17 = arith.constant 0 : index
    %34 = vector.load %arg5[%c0_15, %c0_16, %c0_17] : memref<1x98x128xbf16, #tpu.memory_space<vmem>>, vector<1x98x128xbf16>
    %35 = vector.shape_cast %34 : vector<1x98x128xbf16> to vector<98x128xbf16>
    %36 = vector.shape_cast %33 : vector<98x128xbf16> to vector<1x98x128xbf16>
    tpu.vector_store %arg5[%c0_15, %c0_16, %c0_17], %36 {strides = array<i32>} : memref<1x98x128xbf16, #tpu.memory_space<vmem>>, vector<1x98x128xbf16>,
    return
  }
  func.func @transform_0(%arg0: i32) -> (i32, i32, i32) {
    %c0_i32 = arith.constant 0 : i32
    %c0_i32_0 = arith.constant 0 : i32
    %c0_i32_1 = arith.constant 0 : i32
    return %arg0, %c0_i32, %c0_i32_0 : i32, i32, i32
  }
  func.func @transform_1(%arg0: i32) -> (i32, i32) {
    %c0_i32 = arith.constant 0 : i32
    %c0_i32_0 = arith.constant 0 : i32
    %c0_i32_1 = arith.constant 0 : i32
    return %c0_i32, %c0_i32_0 : i32, i32
  }
  func.func @transform_2(%arg0: i32) -> (i32, i32) {
    %c0_i32 = arith.constant 0 : i32
    %c0_i32_0 = arith.constant 0 : i32
    %c0_i32_1 = arith.constant 0 : i32
    return %c0_i32, %c0_i32_0 : i32, i32
  }
  func.func @transform_3(%arg0: i32) -> (i32, i32) {
    %c0_i32 = arith.constant 0 : i32
    %c0_i32_0 = arith.constant 0 : i32
    %c0_i32_1 = arith.constant 0 : i32
    return %c0_i32, %c0_i32_0 : i32, i32
  }
  func.func @transform_4(%arg0: i32) -> (i32, i32, i32) {
    %c0_i32 = arith.constant 0 : i32
    %c0_i32_0 = arith.constant 0 : i32
    %c0_i32_1 = arith.constant 0 : i32
    return %arg0, %c0_i32, %c0_i32_0 : i32, i32, i32
  }
}

module attributes {stable_mosaic.version = 11 : i64} {
  func.func @_conv_bn_lrelu_kernel(%arg0: i32, %arg1: memref<1x50x1152xbf16, #tpu.memory_space<vmem>>, %arg2: memref<1152x128xbf16, #tpu.memory_space<vmem>>, %arg3: memref<1x128xf32, #tpu.memory_space<vmem>>, %arg4: memref<1x128xf32, #tpu.memory_space<vmem>>, %arg5: memref<1x50x128xbf16, #tpu.memory_space<vmem>>) attributes {dimension_semantics = [#tpu.dimension_semantics<parallel>], iteration_bounds = array<i64: 2>, scalar_prefetch = 0 : i64, scratch_operands = 0 : i64, tpu.core_type = #tpu.core_type<tc>, window_params = [{transform_indices = @transform_0, window_bounds = array<i64: 1, 50, 1152>}, {pipeline_mode = #tpu.pipeline_mode<synchronous>, transform_indices = @transform_1, window_bounds = array<i64: 1152, 128>}, {pipeline_mode = #tpu.pipeline_mode<synchronous>, transform_indices = @transform_2, window_bounds = array<i64: 1, 128>}, {pipeline_mode = #tpu.pipeline_mode<synchronous>, transform_indices = @transform_3, window_bounds = array<i64: 1, 128>}, {transform_indices = @transform_4, window_bounds = array<i64: 1, 50, 128>}]} {
    %c0 = arith.constant 0 : index
    %c0_0 = arith.constant 0 : index
    %c0_1 = arith.constant 0 : index
    %0 = vector.load %arg1[%c0, %c0_0, %c0_1] : memref<1x50x1152xbf16, #tpu.memory_space<vmem>>, vector<1x50x1152xbf16>
    %1 = vector.shape_cast %0 : vector<1x50x1152xbf16> to vector<50x1152xbf16>
    %c0_2 = arith.constant 0 : index
    %c0_3 = arith.constant 0 : index
    %2 = vector.load %arg2[%c0_2, %c0_3] : memref<1152x128xbf16, #tpu.memory_space<vmem>>, vector<1152x128xbf16>
    %cst = arith.constant dense<0.000000e+00> : vector<50x128xf32>
    %3 = tpu.matmul %1, %2, %cst {dimension_numbers = #tpu.dot_dimension_numbers<[1], [0], [0], [1], [0, 0, 1, 1], [], []>} : vector<50x1152xbf16>, vector<1152x128xbf16>, vector<50x128xf32> -> vector<50x128xf32>
    %cst_4 = arith.constant dense<0.000000e+00> : vector<128xf32>
    %4 = vector.multi_reduction <add>, %3, %cst_4 [0] : vector<50x128xf32> to vector<128xf32>
    %5 = vector.shape_cast %4 : vector<128xf32> to vector<1x128xf32>
    %cst_5 = arith.constant 5.000000e+01 : f32
    %6 = vector.broadcast %cst_5 : f32 to vector<1x128xf32>
    %7 = arith.divf %5, %6 : vector<1x128xf32>
    %8 = vector.broadcast %7 : vector<1x128xf32> to vector<50x128xf32>
    %9 = arith.subf %3, %8 : vector<50x128xf32>
    %10 = arith.mulf %9, %9 : vector<50x128xf32>
    %cst_6 = arith.constant dense<0.000000e+00> : vector<128xf32>
    %11 = vector.multi_reduction <add>, %10, %cst_6 [0] : vector<50x128xf32> to vector<128xf32>
    %12 = vector.shape_cast %11 : vector<128xf32> to vector<1x128xf32>
    %cst_7 = arith.constant 5.000000e+01 : f32
    %13 = vector.broadcast %cst_7 : f32 to vector<1x128xf32>
    %14 = arith.divf %12, %13 : vector<1x128xf32>
    %15 = vector.broadcast %7 : vector<1x128xf32> to vector<50x128xf32>
    %16 = arith.subf %3, %15 : vector<50x128xf32>
    %cst_8 = arith.constant 9.99999974E-6 : f32
    %17 = vector.broadcast %cst_8 : f32 to vector<1x128xf32>
    %18 = arith.addf %14, %17 : vector<1x128xf32>
    %19 = math.rsqrt %18 : vector<1x128xf32>
    %20 = vector.broadcast %19 : vector<1x128xf32> to vector<50x128xf32>
    %21 = arith.mulf %16, %20 : vector<50x128xf32>
    %c0_9 = arith.constant 0 : index
    %c0_10 = arith.constant 0 : index
    %22 = vector.load %arg3[%c0_9, %c0_10] : memref<1x128xf32, #tpu.memory_space<vmem>>, vector<1x128xf32>
    %23 = vector.broadcast %22 : vector<1x128xf32> to vector<50x128xf32>
    %24 = arith.mulf %21, %23 : vector<50x128xf32>
    %c0_11 = arith.constant 0 : index
    %c0_12 = arith.constant 0 : index
    %25 = vector.load %arg4[%c0_11, %c0_12] : memref<1x128xf32, #tpu.memory_space<vmem>>, vector<1x128xf32>
    %26 = vector.broadcast %25 : vector<1x128xf32> to vector<50x128xf32>
    %27 = arith.addf %24, %26 : vector<50x128xf32>
    %cst_13 = arith.constant 0.000000e+00 : f32
    %28 = vector.broadcast %cst_13 : f32 to vector<50x128xf32>
    %29 = arith.cmpf ogt, %27, %28 : vector<50x128xf32>
    %cst_14 = arith.constant 0.00999999977 : f32
    %30 = vector.broadcast %cst_14 : f32 to vector<50x128xf32>
    %31 = arith.mulf %30, %27 : vector<50x128xf32>
    %32 = arith.select %29, %27, %31 : vector<50x128xi1>, vector<50x128xf32>
    %33 = arith.truncf %32 : vector<50x128xf32> to vector<50x128xbf16>
    %c0_15 = arith.constant 0 : index
    %c0_16 = arith.constant 0 : index
    %c0_17 = arith.constant 0 : index
    %34 = vector.load %arg5[%c0_15, %c0_16, %c0_17] : memref<1x50x128xbf16, #tpu.memory_space<vmem>>, vector<1x50x128xbf16>
    %35 = vector.shape_cast %34 : vector<1x50x128xbf16> to vector<50x128xbf16>
    %36 = vector.shape_cast %33 : vector<50x128xbf16> to vector<1x50x128xbf16>
    tpu.vector_store %arg5[%c0_15, %c0_16, %c0_17], %36 {strides = array<i32>} : memref<1x50x128xbf16, #tpu.memory_space<vmem>>, vector<1x50x128xbf16>,
    return
  }
  func.func @transform_0(%arg0: i32) -> (i32, i32, i32) {
    %c0_i32 = arith.constant 0 : i32
    %c0_i32_0 = arith.constant 0 : i32
    %c0_i32_1 = arith.constant 0 : i32
    return %arg0, %c0_i32, %c0_i32_0 : i32, i32, i32
  }
  func.func @transform_1(%arg0: i32) -> (i32, i32) {
    %c0_i32 = arith.constant 0 : i32
    %c0_i32_0 = arith.constant 0 : i32
    %c0_i32_1 = arith.constant 0 : i32
    return %c0_i32, %c0_i32_0 : i32, i32
  }
  func.func @transform_2(%arg0: i32) -> (i32, i32) {
    %c0_i32 = arith.constant 0 : i32
    %c0_i32_0 = arith.constant 0 : i32
    %c0_i32_1 = arith.constant 0 : i32
    return %c0_i32, %c0_i32_0 : i32, i32
  }
  func.func @transform_3(%arg0: i32) -> (i32, i32) {
    %c0_i32 = arith.constant 0 : i32
    %c0_i32_0 = arith.constant 0 : i32
    %c0_i32_1 = arith.constant 0 : i32
    return %c0_i32, %c0_i32_0 : i32, i32
  }
  func.func @transform_4(%arg0: i32) -> (i32, i32, i32) {
    %c0_i32 = arith.constant 0 : i32
    %c0_i32_0 = arith.constant 0 : i32
    %c0_i32_1 = arith.constant 0 : i32
    return %arg0, %c0_i32, %c0_i32_0 : i32, i32, i32
  }
}

module attributes {stable_mosaic.version = 11 : i64} {
  func.func @_conv_bn_lrelu_kernel(%arg0: i32, %arg1: memref<1x18x1152xbf16, #tpu.memory_space<vmem>>, %arg2: memref<1152x128xbf16, #tpu.memory_space<vmem>>, %arg3: memref<1x128xf32, #tpu.memory_space<vmem>>, %arg4: memref<1x128xf32, #tpu.memory_space<vmem>>, %arg5: memref<1x18x128xbf16, #tpu.memory_space<vmem>>) attributes {dimension_semantics = [#tpu.dimension_semantics<parallel>], iteration_bounds = array<i64: 2>, scalar_prefetch = 0 : i64, scratch_operands = 0 : i64, tpu.core_type = #tpu.core_type<tc>, window_params = [{transform_indices = @transform_0, window_bounds = array<i64: 1, 18, 1152>}, {pipeline_mode = #tpu.pipeline_mode<synchronous>, transform_indices = @transform_1, window_bounds = array<i64: 1152, 128>}, {pipeline_mode = #tpu.pipeline_mode<synchronous>, transform_indices = @transform_2, window_bounds = array<i64: 1, 128>}, {pipeline_mode = #tpu.pipeline_mode<synchronous>, transform_indices = @transform_3, window_bounds = array<i64: 1, 128>}, {transform_indices = @transform_4, window_bounds = array<i64: 1, 18, 128>}]} {
    %c0 = arith.constant 0 : index
    %c0_0 = arith.constant 0 : index
    %c0_1 = arith.constant 0 : index
    %0 = vector.load %arg1[%c0, %c0_0, %c0_1] : memref<1x18x1152xbf16, #tpu.memory_space<vmem>>, vector<1x18x1152xbf16>
    %1 = vector.shape_cast %0 : vector<1x18x1152xbf16> to vector<18x1152xbf16>
    %c0_2 = arith.constant 0 : index
    %c0_3 = arith.constant 0 : index
    %2 = vector.load %arg2[%c0_2, %c0_3] : memref<1152x128xbf16, #tpu.memory_space<vmem>>, vector<1152x128xbf16>
    %cst = arith.constant dense<0.000000e+00> : vector<18x128xf32>
    %3 = tpu.matmul %1, %2, %cst {dimension_numbers = #tpu.dot_dimension_numbers<[1], [0], [0], [1], [0, 0, 1, 1], [], []>} : vector<18x1152xbf16>, vector<1152x128xbf16>, vector<18x128xf32> -> vector<18x128xf32>
    %cst_4 = arith.constant dense<0.000000e+00> : vector<128xf32>
    %4 = vector.multi_reduction <add>, %3, %cst_4 [0] : vector<18x128xf32> to vector<128xf32>
    %5 = vector.shape_cast %4 : vector<128xf32> to vector<1x128xf32>
    %cst_5 = arith.constant 1.800000e+01 : f32
    %6 = vector.broadcast %cst_5 : f32 to vector<1x128xf32>
    %7 = arith.divf %5, %6 : vector<1x128xf32>
    %8 = vector.broadcast %7 : vector<1x128xf32> to vector<18x128xf32>
    %9 = arith.subf %3, %8 : vector<18x128xf32>
    %10 = arith.mulf %9, %9 : vector<18x128xf32>
    %cst_6 = arith.constant dense<0.000000e+00> : vector<128xf32>
    %11 = vector.multi_reduction <add>, %10, %cst_6 [0] : vector<18x128xf32> to vector<128xf32>
    %12 = vector.shape_cast %11 : vector<128xf32> to vector<1x128xf32>
    %cst_7 = arith.constant 1.800000e+01 : f32
    %13 = vector.broadcast %cst_7 : f32 to vector<1x128xf32>
    %14 = arith.divf %12, %13 : vector<1x128xf32>
    %15 = vector.broadcast %7 : vector<1x128xf32> to vector<18x128xf32>
    %16 = arith.subf %3, %15 : vector<18x128xf32>
    %cst_8 = arith.constant 9.99999974E-6 : f32
    %17 = vector.broadcast %cst_8 : f32 to vector<1x128xf32>
    %18 = arith.addf %14, %17 : vector<1x128xf32>
    %19 = math.rsqrt %18 : vector<1x128xf32>
    %20 = vector.broadcast %19 : vector<1x128xf32> to vector<18x128xf32>
    %21 = arith.mulf %16, %20 : vector<18x128xf32>
    %c0_9 = arith.constant 0 : index
    %c0_10 = arith.constant 0 : index
    %22 = vector.load %arg3[%c0_9, %c0_10] : memref<1x128xf32, #tpu.memory_space<vmem>>, vector<1x128xf32>
    %23 = vector.broadcast %22 : vector<1x128xf32> to vector<18x128xf32>
    %24 = arith.mulf %21, %23 : vector<18x128xf32>
    %c0_11 = arith.constant 0 : index
    %c0_12 = arith.constant 0 : index
    %25 = vector.load %arg4[%c0_11, %c0_12] : memref<1x128xf32, #tpu.memory_space<vmem>>, vector<1x128xf32>
    %26 = vector.broadcast %25 : vector<1x128xf32> to vector<18x128xf32>
    %27 = arith.addf %24, %26 : vector<18x128xf32>
    %cst_13 = arith.constant 0.000000e+00 : f32
    %28 = vector.broadcast %cst_13 : f32 to vector<18x128xf32>
    %29 = arith.cmpf ogt, %27, %28 : vector<18x128xf32>
    %cst_14 = arith.constant 0.00999999977 : f32
    %30 = vector.broadcast %cst_14 : f32 to vector<18x128xf32>
    %31 = arith.mulf %30, %27 : vector<18x128xf32>
    %32 = arith.select %29, %27, %31 : vector<18x128xi1>, vector<18x128xf32>
    %33 = arith.truncf %32 : vector<18x128xf32> to vector<18x128xbf16>
    %c0_15 = arith.constant 0 : index
    %c0_16 = arith.constant 0 : index
    %c0_17 = arith.constant 0 : index
    %34 = vector.load %arg5[%c0_15, %c0_16, %c0_17] : memref<1x18x128xbf16, #tpu.memory_space<vmem>>, vector<1x18x128xbf16>
    %35 = vector.shape_cast %34 : vector<1x18x128xbf16> to vector<18x128xbf16>
    %36 = vector.shape_cast %33 : vector<18x128xbf16> to vector<1x18x128xbf16>
    tpu.vector_store %arg5[%c0_15, %c0_16, %c0_17], %36 {strides = array<i32>} : memref<1x18x128xbf16, #tpu.memory_space<vmem>>, vector<1x18x128xbf16>,
    return
  }
  func.func @transform_0(%arg0: i32) -> (i32, i32, i32) {
    %c0_i32 = arith.constant 0 : i32
    %c0_i32_0 = arith.constant 0 : i32
    %c0_i32_1 = arith.constant 0 : i32
    return %arg0, %c0_i32, %c0_i32_0 : i32, i32, i32
  }
  func.func @transform_1(%arg0: i32) -> (i32, i32) {
    %c0_i32 = arith.constant 0 : i32
    %c0_i32_0 = arith.constant 0 : i32
    %c0_i32_1 = arith.constant 0 : i32
    return %c0_i32, %c0_i32_0 : i32, i32
  }
  func.func @transform_2(%arg0: i32) -> (i32, i32) {
    %c0_i32 = arith.constant 0 : i32
    %c0_i32_0 = arith.constant 0 : i32
    %c0_i32_1 = arith.constant 0 : i32
    return %c0_i32, %c0_i32_0 : i32, i32
  }
  func.func @transform_3(%arg0: i32) -> (i32, i32) {
    %c0_i32 = arith.constant 0 : i32
    %c0_i32_0 = arith.constant 0 : i32
    %c0_i32_1 = arith.constant 0 : i32
    return %c0_i32, %c0_i32_0 : i32, i32
  }
  func.func @transform_4(%arg0: i32) -> (i32, i32, i32) {
    %c0_i32 = arith.constant 0 : i32
    %c0_i32_0 = arith.constant 0 : i32
    %c0_i32_1 = arith.constant 0 : i32
    return %arg0, %c0_i32, %c0_i32_0 : i32, i32, i32
  }
}

module attributes {stable_mosaic.version = 11 : i64} {
  func.func @_conv_bn_lrelu_kernel(%arg0: i32, %arg1: memref<1x2x1152xbf16, #tpu.memory_space<vmem>>, %arg2: memref<1152x128xbf16, #tpu.memory_space<vmem>>, %arg3: memref<1x128xf32, #tpu.memory_space<vmem>>, %arg4: memref<1x128xf32, #tpu.memory_space<vmem>>, %arg5: memref<1x2x128xbf16, #tpu.memory_space<vmem>>) attributes {dimension_semantics = [#tpu.dimension_semantics<parallel>], iteration_bounds = array<i64: 2>, scalar_prefetch = 0 : i64, scratch_operands = 0 : i64, tpu.core_type = #tpu.core_type<tc>, window_params = [{transform_indices = @transform_0, window_bounds = array<i64: 1, 2, 1152>}, {pipeline_mode = #tpu.pipeline_mode<synchronous>, transform_indices = @transform_1, window_bounds = array<i64: 1152, 128>}, {pipeline_mode = #tpu.pipeline_mode<synchronous>, transform_indices = @transform_2, window_bounds = array<i64: 1, 128>}, {pipeline_mode = #tpu.pipeline_mode<synchronous>, transform_indices = @transform_3, window_bounds = array<i64: 1, 128>}, {transform_indices = @transform_4, window_bounds = array<i64: 1, 2, 128>}]} {
    %c0 = arith.constant 0 : index
    %c0_0 = arith.constant 0 : index
    %c0_1 = arith.constant 0 : index
    %0 = vector.load %arg1[%c0, %c0_0, %c0_1] : memref<1x2x1152xbf16, #tpu.memory_space<vmem>>, vector<1x2x1152xbf16>
    %1 = vector.shape_cast %0 : vector<1x2x1152xbf16> to vector<2x1152xbf16>
    %c0_2 = arith.constant 0 : index
    %c0_3 = arith.constant 0 : index
    %2 = vector.load %arg2[%c0_2, %c0_3] : memref<1152x128xbf16, #tpu.memory_space<vmem>>, vector<1152x128xbf16>
    %cst = arith.constant dense<0.000000e+00> : vector<2x128xf32>
    %3 = tpu.matmul %1, %2, %cst {dimension_numbers = #tpu.dot_dimension_numbers<[1], [0], [0], [1], [0, 0, 1, 1], [], []>} : vector<2x1152xbf16>, vector<1152x128xbf16>, vector<2x128xf32> -> vector<2x128xf32>
    %cst_4 = arith.constant dense<0.000000e+00> : vector<128xf32>
    %4 = vector.multi_reduction <add>, %3, %cst_4 [0] : vector<2x128xf32> to vector<128xf32>
    %5 = vector.shape_cast %4 : vector<128xf32> to vector<1x128xf32>
    %cst_5 = arith.constant 2.000000e+00 : f32
    %6 = vector.broadcast %cst_5 : f32 to vector<1x128xf32>
    %7 = arith.divf %5, %6 : vector<1x128xf32>
    %8 = vector.broadcast %7 : vector<1x128xf32> to vector<2x128xf32>
    %9 = arith.subf %3, %8 : vector<2x128xf32>
    %10 = arith.mulf %9, %9 : vector<2x128xf32>
    %cst_6 = arith.constant dense<0.000000e+00> : vector<128xf32>
    %11 = vector.multi_reduction <add>, %10, %cst_6 [0] : vector<2x128xf32> to vector<128xf32>
    %12 = vector.shape_cast %11 : vector<128xf32> to vector<1x128xf32>
    %cst_7 = arith.constant 2.000000e+00 : f32
    %13 = vector.broadcast %cst_7 : f32 to vector<1x128xf32>
    %14 = arith.divf %12, %13 : vector<1x128xf32>
    %15 = vector.broadcast %7 : vector<1x128xf32> to vector<2x128xf32>
    %16 = arith.subf %3, %15 : vector<2x128xf32>
    %cst_8 = arith.constant 9.99999974E-6 : f32
    %17 = vector.broadcast %cst_8 : f32 to vector<1x128xf32>
    %18 = arith.addf %14, %17 : vector<1x128xf32>
    %19 = math.rsqrt %18 : vector<1x128xf32>
    %20 = vector.broadcast %19 : vector<1x128xf32> to vector<2x128xf32>
    %21 = arith.mulf %16, %20 : vector<2x128xf32>
    %c0_9 = arith.constant 0 : index
    %c0_10 = arith.constant 0 : index
    %22 = vector.load %arg3[%c0_9, %c0_10] : memref<1x128xf32, #tpu.memory_space<vmem>>, vector<1x128xf32>
    %23 = vector.broadcast %22 : vector<1x128xf32> to vector<2x128xf32>
    %24 = arith.mulf %21, %23 : vector<2x128xf32>
    %c0_11 = arith.constant 0 : index
    %c0_12 = arith.constant 0 : index
    %25 = vector.load %arg4[%c0_11, %c0_12] : memref<1x128xf32, #tpu.memory_space<vmem>>, vector<1x128xf32>
    %26 = vector.broadcast %25 : vector<1x128xf32> to vector<2x128xf32>
    %27 = arith.addf %24, %26 : vector<2x128xf32>
    %cst_13 = arith.constant 0.000000e+00 : f32
    %28 = vector.broadcast %cst_13 : f32 to vector<2x128xf32>
    %29 = arith.cmpf ogt, %27, %28 : vector<2x128xf32>
    %cst_14 = arith.constant 0.00999999977 : f32
    %30 = vector.broadcast %cst_14 : f32 to vector<2x128xf32>
    %31 = arith.mulf %30, %27 : vector<2x128xf32>
    %32 = arith.select %29, %27, %31 : vector<2x128xi1>, vector<2x128xf32>
    %33 = arith.truncf %32 : vector<2x128xf32> to vector<2x128xbf16>
    %c0_15 = arith.constant 0 : index
    %c0_16 = arith.constant 0 : index
    %c0_17 = arith.constant 0 : index
    %34 = vector.load %arg5[%c0_15, %c0_16, %c0_17] : memref<1x2x128xbf16, #tpu.memory_space<vmem>>, vector<1x2x128xbf16>
    %35 = vector.shape_cast %34 : vector<1x2x128xbf16> to vector<2x128xbf16>
    %36 = vector.shape_cast %33 : vector<2x128xbf16> to vector<1x2x128xbf16>
    tpu.vector_store %arg5[%c0_15, %c0_16, %c0_17], %36 {strides = array<i32>} : memref<1x2x128xbf16, #tpu.memory_space<vmem>>, vector<1x2x128xbf16>,
    return
  }
  func.func @transform_0(%arg0: i32) -> (i32, i32, i32) {
    %c0_i32 = arith.constant 0 : i32
    %c0_i32_0 = arith.constant 0 : i32
    %c0_i32_1 = arith.constant 0 : i32
    return %arg0, %c0_i32, %c0_i32_0 : i32, i32, i32
  }
  func.func @transform_1(%arg0: i32) -> (i32, i32) {
    %c0_i32 = arith.constant 0 : i32
    %c0_i32_0 = arith.constant 0 : i32
    %c0_i32_1 = arith.constant 0 : i32
    return %c0_i32, %c0_i32_0 : i32, i32
  }
  func.func @transform_2(%arg0: i32) -> (i32, i32) {
    %c0_i32 = arith.constant 0 : i32
    %c0_i32_0 = arith.constant 0 : i32
    %c0_i32_1 = arith.constant 0 : i32
    return %c0_i32, %c0_i32_0 : i32, i32
  }
  func.func @transform_3(%arg0: i32) -> (i32, i32) {
    %c0_i32 = arith.constant 0 : i32
    %c0_i32_0 = arith.constant 0 : i32
    %c0_i32_1 = arith.constant 0 : i32
    return %c0_i32, %c0_i32_0 : i32, i32
  }
  func.func @transform_4(%arg0: i32) -> (i32, i32, i32) {
    %c0_i32 = arith.constant 0 : i32
    %c0_i32_0 = arith.constant 0 : i32
    %c0_i32_1 = arith.constant 0 : i32
    return %arg0, %c0_i32, %c0_i32_0 : i32, i32, i32
  }
}

module attributes {stable_mosaic.version = 11 : i64} {
  func.func @_offset_net_kernel(%arg0: i32, %arg1: memref<2x256xbf16, #tpu.memory_space<vmem>>, %arg2: memref<256x128xbf16, #tpu.memory_space<vmem>>, %arg3: memref<1x128xf32, #tpu.memory_space<vmem>>, %arg4: memref<6x128x128xbf16, #tpu.memory_space<vmem>>, %arg5: memref<6x1x128xf32, #tpu.memory_space<vmem>>, %arg6: memref<1x128xf32, #tpu.memory_space<vmem>>, %arg7: memref<1x128xf32, #tpu.memory_space<vmem>>, %arg8: memref<2x128xf32, #tpu.memory_space<vmem>>) attributes {dimension_semantics = [#tpu.dimension_semantics<arbitrary>], iteration_bounds = array<i64: 1>, scalar_prefetch = 0 : i64, scratch_operands = 0 : i64, tpu.core_type = #tpu.core_type<tc>, window_params = [{pipeline_mode = #tpu.pipeline_mode<synchronous>, transform_indices = @transform_0, window_bounds = array<i64: 2, 256>}, {pipeline_mode = #tpu.pipeline_mode<synchronous>, transform_indices = @transform_1, window_bounds = array<i64: 256, 128>}, {pipeline_mode = #tpu.pipeline_mode<synchronous>, transform_indices = @transform_2, window_bounds = array<i64: 1, 128>}, {pipeline_mode = #tpu.pipeline_mode<synchronous>, transform_indices = @transform_3, window_bounds = array<i64: 6, 128, 128>}, {pipeline_mode = #tpu.pipeline_mode<synchronous>, transform_indices = @transform_4, window_bounds = array<i64: 6, 1, 128>}, {pipeline_mode = #tpu.pipeline_mode<synchronous>, transform_indices = @transform_5, window_bounds = array<i64: 1, 128>}, {pipeline_mode = #tpu.pipeline_mode<synchronous>, transform_indices = @transform_6, window_bounds = array<i64: 1, 128>}, {pipeline_mode = #tpu.pipeline_mode<synchronous>, transform_indices = @transform_7, window_bounds = array<i64: 2, 128>}]} {
    %c0 = arith.constant 0 : index
    %c0_0 = arith.constant 0 : index
    %0 = vector.load %arg1[%c0, %c0_0] : memref<2x256xbf16, #tpu.memory_space<vmem>>, vector<2x256xbf16>
    %c0_1 = arith.constant 0 : index
    %c0_2 = arith.constant 0 : index
    %1 = vector.load %arg2[%c0_1, %c0_2] : memref<256x128xbf16, #tpu.memory_space<vmem>>, vector<256x128xbf16>
    %cst = arith.constant dense<0.000000e+00> : vector<2x128xf32>
    %2 = tpu.matmul %0, %1, %cst {dimension_numbers = #tpu.dot_dimension_numbers<[1], [0], [0], [1], [0, 0, 1, 1], [], []>} : vector<2x256xbf16>, vector<256x128xbf16>, vector<2x128xf32> -> vector<2x128xf32>
    %c0_3 = arith.constant 0 : index
    %c0_4 = arith.constant 0 : index
    %3 = vector.load %arg3[%c0_3, %c0_4] : memref<1x128xf32, #tpu.memory_space<vmem>>, vector<1x128xf32>
    %4 = vector.broadcast %3 : vector<1x128xf32> to vector<2x128xf32>
    %5 = arith.addf %2, %4 : vector<2x128xf32>
    %cst_5 = arith.constant 0.000000e+00 : f32
    %6 = vector.broadcast %cst_5 : f32 to vector<2x128xf32>
    %7 = arith.cmpf ogt, %5, %6 : vector<2x128xf32>
    %cst_6 = arith.constant 0.00999999977 : f32
    %8 = vector.broadcast %cst_6 : f32 to vector<2x128xf32>
    %9 = arith.mulf %8, %5 : vector<2x128xf32>
    %10 = arith.select %7, %5, %9 : vector<2x128xi1>, vector<2x128xf32>
    %11 = arith.truncf %10 : vector<2x128xf32> to vector<2x128xbf16>
    %c0_7 = arith.constant 0 : index
    %c0_8 = arith.constant 0 : index
    %c0_9 = arith.constant 0 : index
    %12 = vector.load %arg4[%c0_7, %c0_8, %c0_9] : memref<6x128x128xbf16, #tpu.memory_space<vmem>>, vector<1x128x128xbf16>
    %13 = vector.shape_cast %12 : vector<1x128x128xbf16> to vector<128x128xbf16>
    %cst_10 = arith.constant dense<0.000000e+00> : vector<2x128xf32>
    %14 = tpu.matmul %11, %13, %cst_10 {dimension_numbers = #tpu.dot_dimension_numbers<[1], [0], [0], [1], [0, 0, 1, 1], [], []>} : vector<2x128xbf16>, vector<128x128xbf16>, vector<2x128xf32> -> vector<2x128xf32>
    %c0_11 = arith.constant 0 : index
    %c0_12 = arith.constant 0 : index
    %c0_13 = arith.constant 0 : index
    %15 = vector.load %arg5[%c0_11, %c0_12, %c0_13] : memref<6x1x128xf32, #tpu.memory_space<vmem>>, vector<1x1x128xf32>
    %16 = vector.shape_cast %15 : vector<1x1x128xf32> to vector<1x128xf32>
    %17 = vector.broadcast %16 : vector<1x128xf32> to vector<2x128xf32>
    %18 = arith.addf %14, %17 : vector<2x128xf32>
    %cst_14 = arith.constant 0.000000e+00 : f32
    %19 = vector.broadcast %cst_14 : f32 to vector<2x128xf32>
    %20 = arith.cmpf ogt, %18, %19 : vector<2x128xf32>
    %cst_15 = arith.constant 0.00999999977 : f32
    %21 = vector.broadcast %cst_15 : f32 to vector<2x128xf32>
    %22 = arith.mulf %21, %18 : vector<2x128xf32>
    %23 = arith.select %20, %18, %22 : vector<2x128xi1>, vector<2x128xf32>
    %24 = arith.truncf %23 : vector<2x128xf32> to vector<2x128xbf16>
    %c1 = arith.constant 1 : index
    %c0_16 = arith.constant 0 : index
    %c0_17 = arith.constant 0 : index
    %25 = vector.load %arg4[%c1, %c0_16, %c0_17] : memref<6x128x128xbf16, #tpu.memory_space<vmem>>, vector<1x128x128xbf16>
    %26 = vector.shape_cast %25 : vector<1x128x128xbf16> to vector<128x128xbf16>
    %cst_18 = arith.constant dense<0.000000e+00> : vector<2x128xf32>
    %27 = tpu.matmul %24, %26, %cst_18 {dimension_numbers = #tpu.dot_dimension_numbers<[1], [0], [0], [1], [0, 0, 1, 1], [], []>} : vector<2x128xbf16>, vector<128x128xbf16>, vector<2x128xf32> -> vector<2x128xf32>
    %cst_19 = arith.constant dense<0.000000e+00> : vector<128xf32>
    %28 = vector.multi_reduction <add>, %27, %cst_19 [0] : vector<2x128xf32> to vector<128xf32>
    %29 = vector.shape_cast %28 : vector<128xf32> to vector<1x128xf32>
    %cst_20 = arith.constant 2.000000e+00 : f32
    %30 = vector.broadcast %cst_20 : f32 to vector<1x128xf32>
    %31 = arith.divf %29, %30 : vector<1x128xf32>
    %32 = vector.broadcast %31 : vector<1x128xf32> to vector<2x128xf32>
    %33 = arith.subf %27, %32 : vector<2x128xf32>
    %34 = arith.mulf %33, %33 : vector<2x128xf32>
    %cst_21 = arith.constant dense<0.000000e+00> : vector<128xf32>
    %35 = vector.multi_reduction <add>, %34, %cst_21 [0] : vector<2x128xf32> to vector<128xf32>
    %36 = vector.shape_cast %35 : vector<128xf32> to vector<1x128xf32>
    %cst_22 = arith.constant 2.000000e+00 : f32
    %37 = vector.broadcast %cst_22 : f32 to vector<1x128xf32>
    %38 = arith.divf %36, %37 : vector<1x128xf32>
    %39 = vector.broadcast %31 : vector<1x128xf32> to vector<2x128xf32>
    %40 = arith.subf %27, %39 : vector<2x128xf32>
    %cst_23 = arith.constant 9.99999974E-6 : f32
    %41 = vector.broadcast %cst_23 : f32 to vector<1x128xf32>
    %42 = arith.addf %38, %41 : vector<1x128xf32>
    %43 = math.rsqrt %42 : vector<1x128xf32>
    %44 = vector.broadcast %43 : vector<1x128xf32> to vector<2x128xf32>
    %45 = arith.mulf %40, %44 : vector<2x128xf32>
    %c0_24 = arith.constant 0 : index
    %c0_25 = arith.constant 0 : index
    %46 = vector.load %arg6[%c0_24, %c0_25] : memref<1x128xf32, #tpu.memory_space<vmem>>, vector<1x128xf32>
    %47 = vector.broadcast %46 : vector<1x128xf32> to vector<2x128xf32>
    %48 = arith.mulf %45, %47 : vector<2x128xf32>
    %c0_26 = arith.constant 0 : index
    %c0_27 = arith.constant 0 : index
    %49 = vector.load %arg7[%c0_26, %c0_27] : memref<1x128xf32, #tpu.memory_space<vmem>>, vector<1x128xf32>
    %50 = vector.broadcast %49 : vector<1x128xf32> to vector<2x128xf32>
    %51 = arith.addf %48, %50 : vector<2x128xf32>
    %cst_28 = arith.constant 0.000000e+00 : f32
    %52 = vector.broadcast %cst_28 : f32 to vector<2x128xf32>
    %53 = arith.cmpf ogt, %51, %52 : vector<2x128xf32>
    %cst_29 = arith.constant 0.00999999977 : f32
    %54 = vector.broadcast %cst_29 : f32 to vector<2x128xf32>
    %55 = arith.mulf %54, %51 : vector<2x128xf32>
    %56 = arith.select %53, %51, %55 : vector<2x128xi1>, vector<2x128xf32>
    %57 = arith.truncf %56 : vector<2x128xf32> to vector<2x128xbf16>
    %c2 = arith.constant 2 : index
    %c0_30 = arith.constant 0 : index
    %c0_31 = arith.constant 0 : index
    %58 = vector.load %arg4[%c2, %c0_30, %c0_31] : memref<6x128x128xbf16, #tpu.memory_space<vmem>>, vector<1x128x128xbf16>
    %59 = vector.shape_cast %58 : vector<1x128x128xbf16> to vector<128x128xbf16>
    %cst_32 = arith.constant dense<0.000000e+00> : vector<2x128xf32>
    %60 = tpu.matmul %57, %59, %cst_32 {dimension_numbers = #tpu.dot_dimension_numbers<[1], [0], [0], [1], [0, 0, 1, 1], [], []>} : vector<2x128xbf16>, vector<128x128xbf16>, vector<2x128xf32> -> vector<2x128xf32>
    %c2_33 = arith.constant 2 : index
    %c0_34 = arith.constant 0 : index
    %c0_35 = arith.constant 0 : index
    %61 = vector.load %arg5[%c2_33, %c0_34, %c0_35] : memref<6x1x128xf32, #tpu.memory_space<vmem>>, vector<1x1x128xf32>
    %62 = vector.shape_cast %61 : vector<1x1x128xf32> to vector<1x128xf32>
    %63 = vector.broadcast %62 : vector<1x128xf32> to vector<2x128xf32>
    %64 = arith.addf %60, %63 : vector<2x128xf32>
    %cst_36 = arith.constant 0.000000e+00 : f32
    %65 = vector.broadcast %cst_36 : f32 to vector<2x128xf32>
    %66 = arith.cmpf ogt, %64, %65 : vector<2x128xf32>
    %cst_37 = arith.constant 0.00999999977 : f32
    %67 = vector.broadcast %cst_37 : f32 to vector<2x128xf32>
    %68 = arith.mulf %67, %64 : vector<2x128xf32>
    %69 = arith.select %66, %64, %68 : vector<2x128xi1>, vector<2x128xf32>
    %70 = arith.truncf %69 : vector<2x128xf32> to vector<2x128xbf16>
    %c3 = arith.constant 3 : index
    %c0_38 = arith.constant 0 : index
    %c0_39 = arith.constant 0 : index
    %71 = vector.load %arg4[%c3, %c0_38, %c0_39] : memref<6x128x128xbf16, #tpu.memory_space<vmem>>, vector<1x128x128xbf16>
    %72 = vector.shape_cast %71 : vector<1x128x128xbf16> to vector<128x128xbf16>
    %cst_40 = arith.constant dense<0.000000e+00> : vector<2x128xf32>
    %73 = tpu.matmul %70, %72, %cst_40 {dimension_numbers = #tpu.dot_dimension_numbers<[1], [0], [0], [1], [0, 0, 1, 1], [], []>} : vector<2x128xbf16>, vector<128x128xbf16>, vector<2x128xf32> -> vector<2x128xf32>
    %c3_41 = arith.constant 3 : index
    %c0_42 = arith.constant 0 : index
    %c0_43 = arith.constant 0 : index
    %74 = vector.load %arg5[%c3_41, %c0_42, %c0_43] : memref<6x1x128xf32, #tpu.memory_space<vmem>>, vector<1x1x128xf32>
    %75 = vector.shape_cast %74 : vector<1x1x128xf32> to vector<1x128xf32>
    %76 = vector.broadcast %75 : vector<1x128xf32> to vector<2x128xf32>
    %77 = arith.addf %73, %76 : vector<2x128xf32>
    %cst_44 = arith.constant 0.000000e+00 : f32
    %78 = vector.broadcast %cst_44 : f32 to vector<2x128xf32>
    %79 = arith.cmpf ogt, %77, %78 : vector<2x128xf32>
    %cst_45 = arith.constant 0.00999999977 : f32
    %80 = vector.broadcast %cst_45 : f32 to vector<2x128xf32>
    %81 = arith.mulf %80, %77 : vector<2x128xf32>
    %82 = arith.select %79, %77, %81 : vector<2x128xi1>, vector<2x128xf32>
    %83 = arith.truncf %82 : vector<2x128xf32> to vector<2x128xbf16>
    %c4 = arith.constant 4 : index
    %c0_46 = arith.constant 0 : index
    %c0_47 = arith.constant 0 : index
    %84 = vector.load %arg4[%c4, %c0_46, %c0_47] : memref<6x128x128xbf16, #tpu.memory_space<vmem>>, vector<1x128x128xbf16>
    %85 = vector.shape_cast %84 : vector<1x128x128xbf16> to vector<128x128xbf16>
    %cst_48 = arith.constant dense<0.000000e+00> : vector<2x128xf32>
    %86 = tpu.matmul %83, %85, %cst_48 {dimension_numbers = #tpu.dot_dimension_numbers<[1], [0], [0], [1], [0, 0, 1, 1], [], []>} : vector<2x128xbf16>, vector<128x128xbf16>, vector<2x128xf32> -> vector<2x128xf32>
    %c4_49 = arith.constant 4 : index
    %c0_50 = arith.constant 0 : index
    %c0_51 = arith.constant 0 : index
    %87 = vector.load %arg5[%c4_49, %c0_50, %c0_51] : memref<6x1x128xf32, #tpu.memory_space<vmem>>, vector<1x1x128xf32>
    %88 = vector.shape_cast %87 : vector<1x1x128xf32> to vector<1x128xf32>
    %89 = vector.broadcast %88 : vector<1x128xf32> to vector<2x128xf32>
    %90 = arith.addf %86, %89 : vector<2x128xf32>
    %cst_52 = arith.constant 0.000000e+00 : f32
    %91 = vector.broadcast %cst_52 : f32 to vector<2x128xf32>
    %92 = arith.cmpf ogt, %90, %91 : vector<2x128xf32>
    %cst_53 = arith.constant 0.00999999977 : f32
    %93 = vector.broadcast %cst_53 : f32 to vector<2x128xf32>
    %94 = arith.mulf %93, %90 : vector<2x128xf32>
    %95 = arith.select %92, %90, %94 : vector<2x128xi1>, vector<2x128xf32>
    %96 = arith.truncf %95 : vector<2x128xf32> to vector<2x128xbf16>
    %c5 = arith.constant 5 : index
    %c0_54 = arith.constant 0 : index
    %c0_55 = arith.constant 0 : index
    %97 = vector.load %arg4[%c5, %c0_54, %c0_55] : memref<6x128x128xbf16, #tpu.memory_space<vmem>>, vector<1x128x128xbf16>
    %98 = vector.shape_cast %97 : vector<1x128x128xbf16> to vector<128x128xbf16>
    %cst_56 = arith.constant dense<0.000000e+00> : vector<2x128xf32>
    %99 = tpu.matmul %96, %98, %cst_56 {dimension_numbers = #tpu.dot_dimension_numbers<[1], [0], [0], [1], [0, 0, 1, 1], [], []>} : vector<2x128xbf16>, vector<128x128xbf16>, vector<2x128xf32> -> vector<2x128xf32>
    %c5_57 = arith.constant 5 : index
    %c0_58 = arith.constant 0 : index
    %c0_59 = arith.constant 0 : index
    %100 = vector.load %arg5[%c5_57, %c0_58, %c0_59] : memref<6x1x128xf32, #tpu.memory_space<vmem>>, vector<1x1x128xf32>
    %101 = vector.shape_cast %100 : vector<1x1x128xf32> to vector<1x128xf32>
    %102 = vector.broadcast %101 : vector<1x128xf32> to vector<2x128xf32>
    %103 = arith.addf %99, %102 : vector<2x128xf32>
    %c0_60 = arith.constant 0 : index
    %c0_61 = arith.constant 0 : index
    %104 = vector.load %arg8[%c0_60, %c0_61] : memref<2x128xf32, #tpu.memory_space<vmem>>, vector<2x128xf32>
    tpu.vector_store %arg8[%c0_60, %c0_61], %103 {strides = array<i32>} : memref<2x128xf32, #tpu.memory_space<vmem>>, vector<2x128xf32>,
    return
  }
  func.func @transform_0(%arg0: i32) -> (i32, i32) {
    %c0_i32 = arith.constant 0 : i32
    %c0_i32_0 = arith.constant 0 : i32
    %c0_i32_1 = arith.constant 0 : i32
    return %c0_i32, %c0_i32_0 : i32, i32
  }
  func.func @transform_1(%arg0: i32) -> (i32, i32) {
    %c0_i32 = arith.constant 0 : i32
    %c0_i32_0 = arith.constant 0 : i32
    %c0_i32_1 = arith.constant 0 : i32
    return %c0_i32, %c0_i32_0 : i32, i32
  }
  func.func @transform_2(%arg0: i32) -> (i32, i32) {
    %c0_i32 = arith.constant 0 : i32
    %c0_i32_0 = arith.constant 0 : i32
    %c0_i32_1 = arith.constant 0 : i32
    return %c0_i32, %c0_i32_0 : i32, i32
  }
  func.func @transform_3(%arg0: i32) -> (i32, i32, i32) {
    %c0_i32 = arith.constant 0 : i32
    %c0_i32_0 = arith.constant 0 : i32
    %c0_i32_1 = arith.constant 0 : i32
    %c0_i32_2 = arith.constant 0 : i32
    return %c0_i32, %c0_i32_0, %c0_i32_1 : i32, i32, i32
  }
  func.func @transform_4(%arg0: i32) -> (i32, i32, i32) {
    %c0_i32 = arith.constant 0 : i32
    %c0_i32_0 = arith.constant 0 : i32
    %c0_i32_1 = arith.constant 0 : i32
    %c0_i32_2 = arith.constant 0 : i32
    return %c0_i32, %c0_i32_0, %c0_i32_1 : i32, i32, i32
  }
  func.func @transform_5(%arg0: i32) -> (i32, i32) {
    %c0_i32 = arith.constant 0 : i32
    %c0_i32_0 = arith.constant 0 : i32
    %c0_i32_1 = arith.constant 0 : i32
    return %c0_i32, %c0_i32_0 : i32, i32
  }
  func.func @transform_6(%arg0: i32) -> (i32, i32) {
    %c0_i32 = arith.constant 0 : i32
    %c0_i32_0 = arith.constant 0 : i32
    %c0_i32_1 = arith.constant 0 : i32
    return %c0_i32, %c0_i32_0 : i32, i32
  }
  func.func @transform_7(%arg0: i32) -> (i32, i32) {
    %c0_i32 = arith.constant 0 : i32
    %c0_i32_0 = arith.constant 0 : i32
    %c0_i32_1 = arith.constant 0 : i32
    return %c0_i32, %c0_i32_0 : i32, i32
  }
}

</mosaic_0001>

<llo_original>
// kernel: el_paro_net_bigger.5
$region0: #{el_paro_net_bigger.5}
  #allocation0 [shape = 'u32[]', space=smem, size = 0x4, offset = 0x4, fixed_abs, tag = 'smem constant byte address 0x4 - core index']
  #allocation1 [shape = 'u32[144,128]{1,0:T(1,128)}', space=vmem, size = 0x12000, scoped, tag = 'internal scratch']
  %s0 = inlined_call_operand.vmem [shape: bf16[2,98,49], index: 0, kind: input, shape index: {}]
  %s1 = inlined_call_operand.vmem [shape: bf16[49,128], index: 1, kind: input, shape index: {}]
  %s2 = inlined_call_operand.vmem [shape: f32[1,128], index: 2, kind: input, shape index: {}]
  %s3 = inlined_call_operand.vmem [shape: f32[1,128], index: 3, kind: input, shape index: {}]
  %s4 = inlined_call_operand.vmem [shape: bf16[2,98,128], index: 4, kind: output, shape index: {}]
  %s5 = sld [smem:[#allocation0]]
  $region49: #{el_paro_net_bigger.5} parent=0
    _
  %s7 = ssub.s32 1, %s5
  %s8 = scalar_select 0, %s7, %s5
  loop: start=0, step=1, limit=4
  $region2: #{el_paro_net_bigger.5} parent=0 // loop_pre_header
    _
  $region3: #{el_paro_net_bigger.5} parent=0 // loop_header
    %s10 = sphi 0, %s14
    %p11 = scmp.ge.s32.totalorder %s10, 4
    %s20 = sphi 0, %s22
    %s23 = sphi 0, %s20
    %s24 = sphi 0, %s23
    %s40 = sphi 0, %s24
    %s44 = sphi 0, %s44
    %s46 = sphi 0, %s44
    %s47 = sphi 0, %s46
    %s61 = sphi 0, %s47
    %s65 = sphi 0, %s65
    %s67 = sphi 0, %s65
    %s68 = sphi 0, %s67
    %s82 = sphi 0, %s68
    %s86 = sphi 0, %s86
    %s88 = sphi 0, %s86
    %s89 = sphi 0, %s88
    %s103 = sphi 0, %s89
    %s109 = sphi 0, %s111
    %s112 = sphi 0, %s109
    %s113 = sphi 0, %s112
    %s129 = sphi 0, %s113
  $region4: #{el_paro_net_bigger.5} parent=0 // loop_header_branch
    %13 = sbr.rel (%p11) target = $region8
  $region5: #{el_paro_net_bigger.5} parent=0 // loop_body
    %s15 = ssub.s32 %s10, 1
    %s16 = ssub.s32 %s10, 2
    %s17 = sadd.s32 %s10, 1
    %s18 = ssub.s32 %s10, %s17
    %p19 = scmp.eq.s32.totalorder %s18, 0
    %s21 = sadd.s32 %s20, 1
    %s22 = scalar_select %p19, %s20, %s21
    %p25 = pneg %p19
    %p26 = scmp.eq.s32.totalorder %s10, 1
    %p27 = por %p25, %p26
    %p28 = scmp.ne.s32.totalorder %s20, %s23
    %p29 = scmp.eq.s32.totalorder %s10, 0
    %p30 = por %p28, %p29
    %p31 = scmp.ne.s32.totalorder %s20, %s23
    %p32 = scmp.eq.s32.totalorder %s15, 1
    %p33 = por %p31, %p32
    %p34 = scmp.ne.s32.totalorder %s23, %s24
    %p35 = scmp.eq.s32.totalorder %s15, 0
    %p36 = por %p34, %p35
    %p37 = scmp.ne.s32.totalorder %s23, %s24
    %p38 = scmp.eq.s32.totalorder %s16, 1
    %p39 = por %p37, %p38
    %p41 = scmp.ne.s32.totalorder %s24, %s40
    %p42 = scmp.eq.s32.totalorder %s16, 0
    %p43 = por %p41, %p42
    %s45 = sadd.s32 %s44, 1
    %p48 = scmp.eq.s32.totalorder %s10, 1
    %p49 = scmp.ne.s32.totalorder %s44, %s46
    %p50 = scmp.eq.s32.totalorder %s10, 0
    %p51 = por %p49, %p50
    %p52 = scmp.ne.s32.totalorder %s44, %s46
    %p53 = scmp.eq.s32.totalorder %s15, 1
    %p54 = por %p52, %p53
    %p55 = scmp.ne.s32.totalorder %s46, %s47
    %p56 = scmp.eq.s32.totalorder %s15, 0
    %p57 = por %p55, %p56
    %p58 = scmp.ne.s32.totalorder %s46, %s47
    %p59 = scmp.eq.s32.totalorder %s16, 1
    %p60 = por %p58, %p59
    %p62 = scmp.ne.s32.totalorder %s47, %s61
    %p63 = scmp.eq.s32.totalorder %s16, 0
    %p64 = por %p62, %p63
    %s66 = sadd.s32 %s65, 1
    %p69 = scmp.eq.s32.totalorder %s10, 1
    %p70 = scmp.ne.s32.totalorder %s65, %s67
    %p71 = scmp.eq.s32.totalorder %s10, 0
    %p72 = por %p70, %p71
    %p73 = scmp.ne.s32.totalorder %s65, %s67
    %p74 = scmp.eq.s32.totalorder %s15, 1
    %p75 = por %p73, %p74
    %p76 = scmp.ne.s32.totalorder %s67, %s68
    %p77 = scmp.eq.s32.totalorder %s15, 0
    %p78 = por %p76, %p77
    %p79 = scmp.ne.s32.totalorder %s67, %s68
    %p80 = scmp.eq.s32.totalorder %s16, 1
    %p81 = por %p79, %p80
    %p83 = scmp.ne.s32.totalorder %s68, %s82
    %p84 = scmp.eq.s32.totalorder %s16, 0
    %p85 = por %p83, %p84
    %s87 = sadd.s32 %s86, 1
    %p90 = scmp.eq.s32.totalorder %s10, 1
    %p91 = scmp.ne.s32.totalorder %s86, %s88
    %p92 = scmp.eq.s32.totalorder %s10, 0
    %p93 = por %p91, %p92
    %p94 = scmp.ne.s32.totalorder %s86, %s88
    %p95 = scmp.eq.s32.totalorder %s15, 1
    %p96 = por %p94, %p95
    %p97 = scmp.ne.s32.totalorder %s88, %s89
    %p98 = scmp.eq.s32.totalorder %s15, 0
    %p99 = por %p97, %p98
    %p100 = scmp.ne.s32.totalorder %s88, %s89
    %p101 = scmp.eq.s32.totalorder %s16, 1
    %p102 = por %p100, %p101
    %p104 = scmp.ne.s32.totalorder %s89, %s103
    %p105 = scmp.eq.s32.totalorder %s16, 0
    %p106 = por %p104, %p105
    %s107 = ssub.s32 %s10, %s17
    %p108 = scmp.eq.s32.totalorder %s107, 0
    %s110 = sadd.s32 %s109, 1
    %s111 = scalar_select %p108, %s109, %s110
    %p114 = pneg %p108
    %p115 = scmp.eq.s32.totalorder %s10, 1
    %p116 = por %p114, %p115
    %p117 = scmp.ne.s32.totalorder %s109, %s112
    %p118 = scmp.eq.s32.totalorder %s10, 0
    %p119 = por %p117, %p118
    %p120 = scmp.ne.s32.totalorder %s109, %s112
    %p121 = scmp.eq.s32.totalorder %s15, 1
    %p122 = por %p120, %p121
    %p123 = scmp.ne.s32.totalorder %s112, %s113
    %p124 = scmp.eq.s32.totalorder %s15, 0
    %p125 = por %p123, %p124
    %p126 = scmp.ne.s32.totalorder %s112, %s113
    %p127 = scmp.eq.s32.totalorder %s16, 1
    %p128 = por %p126, %p127
    %p130 = scmp.ne.s32.totalorder %s113, %s129
    %p131 = scmp.eq.s32.totalorder %s16, 0
    %p132 = por %p130, %p131
    %p133 = scmp.le.s32.totalorder 1, %s10
    %p134 = scmp.lt.s32.totalorder %s10, 3
    %p135 = pnand %p133, %p134
    %p136 = pneg %p135
    // Predicated region
    $region9: #{el_paro_net_bigger.5} parent=5 // pred_check
      _
    $region10: #{el_paro_net_bigger.5} parent=5 // pred_check_branch
      %138 = sbr.rel (%p135) target = $region12
    $region11: #{el_paro_net_bigger.5} parent=5 // pred_region
      %s139 = ssub.s32 %s10, 1
      // Predicated region
      $region13: #{el_paro_net_bigger.5} parent=11 // pred_check
        %p140 = pneg %p57
      $region14: #{el_paro_net_bigger.5} parent=11 // pred_check_branch
        %142 = sbr.rel (%p140) target = $region16
      $region15: #{el_paro_net_bigger.5} parent=11 // pred_region
        _
      $region16: #{el_paro_net_bigger.5} parent=11 // pred_fallthru
        _
      // Predicated region
      $region17: #{el_paro_net_bigger.5} parent=11 // pred_check
        %p143 = pneg %p78
      $region18: #{el_paro_net_bigger.5} parent=11 // pred_check_branch
        %145 = sbr.rel (%p143) target = $region20
      $region19: #{el_paro_net_bigger.5} parent=11 // pred_region
        _
      $region20: #{el_paro_net_bigger.5} parent=11 // pred_fallthru
        _
      // Predicated region
      $region21: #{el_paro_net_bigger.5} parent=11 // pred_check
        %p146 = pneg %p99
      $region22: #{el_paro_net_bigger.5} parent=11 // pred_check_branch
        %148 = sbr.rel (%p146) target = $region24
      $region23: #{el_paro_net_bigger.5} parent=11 // pred_region
        _
      $region24: #{el_paro_net_bigger.5} parent=11 // pred_fallthru
        _
    $region12: #{el_paro_net_bigger.5} parent=5 // pred_fallthru
      _
    %p149 = scmp.lt.s32.totalorder %s10, 2
    // Predicated region
    $region25: #{el_paro_net_bigger.5} parent=5 // pred_check
      %p150 = pneg %p149
    $region26: #{el_paro_net_bigger.5} parent=5 // pred_check_branch
      %152 = sbr.rel (%p150) target = $region28
    $region27: #{el_paro_net_bigger.5} parent=5 // pred_region
      // Predicated region
      $region29: #{el_paro_net_bigger.5} parent=27 // pred_check
        %p153 = pneg %p30
      $region30: #{el_paro_net_bigger.5} parent=27 // pred_check_branch
        %155 = sbr.rel (%p153) target = $region32
      $region31: #{el_paro_net_bigger.5} parent=27 // pred_region
        %p156 = scmp.lt.s32.totalorder %s10, 1
        %s157 = scalar_select %p156, %s10, 1
        %s158 = smul.addr %s157, 13
        %s159 = smul.addr %s158, 4
        %s160 = scalar_lea.vmem %s0, %s159
      $region32: #{el_paro_net_bigger.5} parent=27 // pred_fallthru
        _
    $region28: #{el_paro_net_bigger.5} parent=5 // pred_fallthru
      _
    %p161 = scmp.le.s32.totalorder 1, %s10
    %p162 = scmp.lt.s32.totalorder %s10, 3
    %p163 = pnand %p161, %p162
    %p164 = pneg %p163
    // Predicated region
    $region33: #{el_paro_net_bigger.5} parent=5 // pred_check
      _
    $region34: #{el_paro_net_bigger.5} parent=5 // pred_check_branch
      %166 = sbr.rel (%p163) target = $region36
    $region35: #{el_paro_net_bigger.5} parent=5 // pred_region
      %s167 = ssub.s32 %s10, 1
      %p168 = scmp.lt.s32.totalorder %s15, 1
      %s169 = scalar_select %p168, %s15, 1
      %s170 = smul.addr %s169, 13
      %s171 = smul.addr %s170, 4
      %s172 = scalar_lea.vmem %s0, %s171
      %p173 = pneg %p36
      %p174 = pneg %p33
      %p175 = pneg %p57
      %p176 = pneg %p54
      %p177 = pneg %p78
      %p178 = pneg %p75
      %p179 = pneg %p99
      %p180 = pneg %p96
      %p181 = pneg %p125
      %p182 = pneg %p122
      %p183 = scmp.lt.s32.totalorder %s15, 1
      %s184 = scalar_select %p183, %s15, 1
      %s185 = smul.addr %s184, 13
      %s186 = smul.addr %s185, 4
      %s187 = scalar_lea.vmem %s4, %s186
      %p188 = scmp.lt.s32.totalorder %s15, 1
      %s189 = scalar_select %p188, %s15, 1
      %s190 = smul.addr %s189, 13
      %s191 = smul.addr %s190, 4
      %s192 = scalar_lea.vmem %s0, %s191
      %p193 = scmp.lt.s32.totalorder %s15, 1
      %s194 = scalar_select %p193, %s15, 1
      %s195 = smul.addr %s194, 13
      %s196 = smul.addr %s195, 4
      %s197 = scalar_lea.vmem %s4, %s196
      %v199 = vld [vmem:[%s192] sm:$0xf]
      %v200 = vld [vmem:[%s192 + $0x4] sm:$0xf]
      %v201 = vld [vmem:[%s192 + $0x8] sm:$0xf]
      %v202 = vld [vmem:[%s192 + $0xc] sm:$0xf]
      %v203 = vld [vmem:[%s192 + $0x10] sm:$0xf]
      %v204 = vld [vmem:[%s192 + $0x14] sm:$0xf]
      %v205 = vld [vmem:[%s192 + $0x18] sm:$0xf]
      %v206 = vld [vmem:[%s192 + $0x1c] sm:$0xf]
      %v207 = vld [vmem:[%s192 + $0x20] sm:$0xf]
      %v208 = vld [vmem:[%s192 + $0x24] sm:$0xf]
      %v209 = vld [vmem:[%s192 + $0x28] sm:$0xf]
      %v210 = vld [vmem:[%s192 + $0x2c] sm:$0xf]
      %v211 = vld [vmem:[%s192 + $0x30] sm:$0x1]
      %v212 = vld [vmem:[%s1] sm:$0xf]
      %v213 = vld [vmem:[%s1 + $0x4] sm:$0xf]
      %v214 = vld [vmem:[%s1 + $0x8] sm:$0xf]
      %v215 = vld [vmem:[%s1 + $0xc] sm:$0xf]
      %v216 = vld [vmem:[%s1 + $0x10] sm:$0xf]
      %v217 = vld [vmem:[%s1 + $0x14] sm:$0xf]
      %v218 = vld [vmem:[%s1 + $0x18] sm:$0x1]
      %v232 = vunpack.c.l.b16 %v199
      %v233 = vunpack.c.l.b16 %v200
      %v234 = vunpack.c.l.b16 %v201
      %v235 = vunpack.c.l.b16 %v202
      %v236 = vunpack.c.l.b16 %v203
      %v237 = vunpack.c.l.b16 %v204
      %v238 = vunpack.c.l.b16 %v205
      %v239 = vunpack.c.l.b16 %v206
      %v240 = vunpack.c.l.b16 %v207
      %v241 = vunpack.c.l.b16 %v208
      %v242 = vunpack.c.l.b16 %v209
      %v243 = vunpack.c.l.b16 %v210
      %v244 = vunpack.c.l.b16 %v211
      %v245 = vpack.c.b16 %v233, %v232
      %v246 = vpack.c.b16 %v235, %v234
      %v247 = vpack.c.b16 %v237, %v236
      %v248 = vpack.c.b16 %v239, %v238
      %v249 = vpack.c.b16 %v241, %v240
      %v250 = vpack.c.b16 %v243, %v242
      %v251 = vpack.c.b16 %v244, %v244
      %v259 = vunpack.c.l.b16 %v212
      %v260 = vunpack.c.l.b16 %v213
      %v261 = vunpack.c.l.b16 %v214
      %v262 = vunpack.c.l.b16 %v215
      %v263 = vunpack.c.l.b16 %v216
      %v264 = vunpack.c.l.b16 %v217
      %v265 = vunpack.c.l.b16 %v218
      %v266 = vpack.c.b16 %v260, %v259
      %v267 = vpack.c.b16 %v262, %v261
      %v268 = vpack.c.b16 %v264, %v263
      %v269 = vpack.c.b16 %v265, %v265
      %vm273 = vcmask 400384
      %v275 = vsel %vm273, %v245, 0
      %v278 = vsel %vm273, %v246, 0
      %v281 = vsel %vm273, %v247, 0
      %v284 = vsel %vm273, %v248, 0
      %v287 = vsel %vm273, %v249, 0
      %v290 = vsel %vm273, %v250, 0
      %v293 = vsel %vm273, %v251, 0
      %vm295 = vcmask 1040384
      %v296 = vsel 0, 4294967295, 65535
      %v297 = vsel %vm295, %v296, 0
      %v299 = vand.u32 %v269, %v297
      %301 = vmatprep.subr.bf16.mxu0 0
      %302 = vmatpush1.bf16.msra.mxu0 %v266
      %303 = vmatprep.subr.bf16.mxu0 0
      %304 = vmatpush1.bf16.msra.mxu0 %v267
      %305 = vmatprep.subr.bf16.mxu0 0
      %306 = vmatpush1.bf16.msra.mxu0 %v268
      %307 = vmatprep.subr.bf16.mxu0 0
      %308 = vmatpush1.bf16.msra.mxu0 %v299
      %309 = vmatprep.subr.bf16.mxu0 0
      %310 = vmatpush1.bf16.msra.mxu0 0
      %311 = vmatprep.subr.bf16.mxu0 0
      %312 = vmatpush1.bf16.msra.mxu0 0
      %313 = vmatprep.subr.bf16.mxu0 0
      %314 = vmatpush1.bf16.msra.mxu0 0
      %315 = vmatprep.subr.bf16.mxu0 0
      %316 = vmatpush1.bf16.msra.mxu0 0
      %317 = vmatprep.subr.bf16.mxu0 0
      %318 = vmatpush1.bf16.msra.mxu0 0
      %319 = vmatprep.subr.bf16.mxu0 0
      %320 = vmatpush1.bf16.msra.mxu0 0
      %321 = vmatprep.subr.bf16.mxu0 0
      %322 = vmatpush1.bf16.msra.mxu0 0
      %323 = vmatprep.subr.bf16.mxu0 0
      %324 = vmatpush1.bf16.msra.mxu0 0
      %325 = vmatprep.subr.bf16.mxu0 0
      %326 = vmatpush1.bf16.msra.mxu0 0
      %327 = vmatprep.subr.bf16.mxu0 0
      %328 = vmatpush1.bf16.msra.mxu0 0
      %329 = vmatprep.subr.bf16.mxu0 0
      %330 = vmatpush1.bf16.msra.mxu0 0
      %331 = vmatprep.subr.bf16.mxu0 0
      %332 = vmatpush1.bf16.msra.mxu0 0
      %333 = vmatprep.mubr.bf16.mxu0 0
      %334 = vmatmul.mubr.bf16.gmra.mrb[0].mxu0 %v275
      %v335 = vpop.f32.mrb[0].mxu0
      %v336 = vadd.f32 0.0, %v335
      %v337 = vpop.f32.mrb[0].mxu0
      %v338 = vpop.f32.mrb[0].mxu0
      %v339 = vadd.f32 0.0, %v338
      %v340 = vpop.f32.mrb[0].mxu0
      %341 = vmatprep.mubr.bf16.mxu0 0
      %342 = vmatmul.mubr.bf16.gmra.mrb[0].mxu0 %v278
      %v343 = vpop.f32.mrb[0].mxu0
      %v344 = vadd.f32 0.0, %v343
      %v345 = vpop.f32.mrb[0].mxu0
      %v346 = vpop.f32.mrb[0].mxu0
      %v347 = vadd.f32 0.0, %v346
      %v348 = vpop.f32.mrb[0].mxu0
      %349 = vmatprep.mubr.bf16.mxu0 0
      %350 = vmatmul.mubr.bf16.gmra.mrb[0].mxu0 %v281
      %v351 = vpop.f32.mrb[0].mxu0
      %v352 = vadd.f32 0.0, %v351
      %v353 = vpop.f32.mrb[0].mxu0
      %v354 = vpop.f32.mrb[0].mxu0
      %v355 = vadd.f32 0.0, %v354
      %v356 = vpop.f32.mrb[0].mxu0
      %357 = vmatprep.mubr.bf16.mxu0 0
      %358 = vmatmul.mubr.bf16.gmra.mrb[0].mxu0 %v284
      %v359 = vpop.f32.mrb[0].mxu0
      %v360 = vadd.f32 0.0, %v359
      %v361 = vpop.f32.mrb[0].mxu0
      %v362 = vpop.f32.mrb[0].mxu0
      %v363 = vadd.f32 0.0, %v362
      %v364 = vpop.f32.mrb[0].mxu0
      %365 = vmatprep.mubr.bf16.mxu0 0
      %366 = vmatmul.mubr.bf16.gmra.mrb[0].mxu0 %v287
      %v367 = vpop.f32.mrb[0].mxu0
      %v368 = vadd.f32 0.0, %v367
      %v369 = vpop.f32.mrb[0].mxu0
      %v370 = vpop.f32.mrb[0].mxu0
      %v371 = vadd.f32 0.0, %v370
      %v372 = vpop.f32.mrb[0].mxu0
      %373 = vmatprep.mubr.bf16.mxu0 0
      %374 = vmatmul.mubr.bf16.gmra.mrb[0].mxu0 %v290
      %v375 = vpop.f32.mrb[0].mxu0
      %v376 = vadd.f32 0.0, %v375
      %v377 = vpop.f32.mrb[0].mxu0
      %v378 = vpop.f32.mrb[0].mxu0
      %v379 = vadd.f32 0.0, %v378
      %v380 = vpop.f32.mrb[0].mxu0
      %381 = vmatprep.mubr.bf16.mxu0 0
      %382 = vmatmul.mubr.bf16.gmra.mrb[0].mxu0 %v293
      %v383 = vpop.f32.mrb[0].mxu0
      %v384 = vadd.f32 0.0, %v383
      %v385 = vpop.f32.mrb[0].mxu0
      %v386 = vpop.f32.mrb[0].mxu0
      %v387 = vpop.f32.mrb[0].mxu0
      %388 = vdwg.mxu0
      %v389 = vadd.f32 %v336, %v339
      %v390 = vadd.f32 %v389, %v344
      %v391 = vadd.f32 %v390, %v347
      %v392 = vadd.f32 %v391, %v352
      %v393 = vadd.f32 %v392, %v355
      %v394 = vadd.f32 %v393, %v360
      %v395 = vadd.f32 %v394, %v363
      %v396 = vadd.f32 %v395, %v368
      %v397 = vadd.f32 %v396, %v371
      %v398 = vadd.f32 %v397, %v376
      %v399 = vadd.f32 %v398, %v379
      %vm400 = vcmask 1041408
      %v401 = vsel %vm400, %v384, 0.0
      %v402 = vadd.f32 %v399, %v401
      %v403 = vrot.slane %v402, 4
      %v404 = vadd.f32 %v402, %v403
      %v405 = vrot.slane %v404, 2
      %v406 = vadd.f32 %v404, %v405
      %v407 = vrot.slane %v406, 1
      %v408 = vadd.f32 %v406, %v407
      %v409 = vrcp.pop 98.0
      %v410 = vmul.f32 %v408, %v409
      %v411 = vsub.f32 %v336, %v410
      %v412 = vsub.f32 %v339, %v410
      %v413 = vsub.f32 %v344, %v410
      %v414 = vsub.f32 %v347, %v410
      %v415 = vsub.f32 %v352, %v410
      %v416 = vsub.f32 %v355, %v410
      %v417 = vsub.f32 %v360, %v410
      %v418 = vsub.f32 %v363, %v410
      %v419 = vsub.f32 %v368, %v410
      %v420 = vsub.f32 %v371, %v410
      %v421 = vsub.f32 %v376, %v410
      %v422 = vsub.f32 %v379, %v410
      %v423 = vsub.f32 %v384, %v410
      %v424 = vmul.f32 %v411, %v411
      %v425 = vmul.f32 %v412, %v412
      %v426 = vmul.f32 %v413, %v413
      %v427 = vmul.f32 %v414, %v414
      %v428 = vmul.f32 %v415, %v415
      %v429 = vmul.f32 %v416, %v416
      %v430 = vmul.f32 %v417, %v417
      %v431 = vmul.f32 %v418, %v418
      %v432 = vmul.f32 %v419, %v419
      %v433 = vmul.f32 %v420, %v420
      %v434 = vmul.f32 %v421, %v421
      %v435 = vmul.f32 %v422, %v422
      %v436 = vmul.f32 %v423, %v423
      %v437 = vadd.f32 %v424, %v425
      %v438 = vadd.f32 %v437, %v426
      %v439 = vadd.f32 %v438, %v427
      %v440 = vadd.f32 %v439, %v428
      %v441 = vadd.f32 %v440, %v429
      %v442 = vadd.f32 %v441, %v430
      %v443 = vadd.f32 %v442, %v431
      %v444 = vadd.f32 %v443, %v432
      %v445 = vadd.f32 %v444, %v433
      %v446 = vadd.f32 %v445, %v434
      %v447 = vadd.f32 %v446, %v435
      %v448 = vsel %vm400, %v436, 0.0
      %v449 = vadd.f32 %v447, %v448
      %v450 = vrot.slane %v449, 4
      %v451 = vadd.f32 %v449, %v450
      %v452 = vrot.slane %v451, 2
      %v453 = vadd.f32 %v451, %v452
      %v454 = vrot.slane %v453, 1
      %v455 = vadd.f32 %v453, %v454
      %v456 = vmul.f32 %v455, %v409
      %v457 = vadd.f32 %v456, 1e-05
      %v458 = vrsqrt.pop %v457
      %v459 = vmul.f32 %v411, %v458
      %v460 = vmul.f32 %v412, %v458
      %v461 = vmul.f32 %v413, %v458
      %v462 = vmul.f32 %v414, %v458
      %v463 = vmul.f32 %v415, %v458
      %v464 = vmul.f32 %v416, %v458
      %v465 = vmul.f32 %v417, %v458
      %v466 = vmul.f32 %v418, %v458
      %v467 = vmul.f32 %v419, %v458
      %v468 = vmul.f32 %v420, %v458
      %v469 = vmul.f32 %v421, %v458
      %v470 = vmul.f32 %v422, %v458
      %v471 = vmul.f32 %v423, %v458
      %v472 = vld [vmem:[%s2] sm:$0x1]
      %v474 = vlaneseq
      %v475 = vshrl.u32 %v474, 7
      %v476 = vsub.s32 0, %v475
      %v477 = vrot.slane %v472, %v476
      %v479 = vmul.f32 %v459, %v477
      %v480 = vmul.f32 %v460, %v477
      %v481 = vmul.f32 %v461, %v477
      %v482 = vmul.f32 %v462, %v477
      %v483 = vmul.f32 %v463, %v477
      %v484 = vmul.f32 %v464, %v477
      %v485 = vmul.f32 %v465, %v477
      %v486 = vmul.f32 %v466, %v477
      %v487 = vmul.f32 %v467, %v477
      %v488 = vmul.f32 %v468, %v477
      %v489 = vmul.f32 %v469, %v477
      %v490 = vmul.f32 %v470, %v477
      %v491 = vmul.f32 %v471, %v477
      %v492 = vld [vmem:[%s3] sm:$0x1]
      %v494 = vlaneseq
      %v495 = vshrl.u32 %v494, 7
      %v496 = vsub.s32 0, %v495
      %v497 = vrot.slane %v492, %v496
      %v499 = vadd.f32 %v479, %v497
      %v500 = vadd.f32 %v480, %v497
      %v501 = vadd.f32 %v481, %v497
      %v502 = vadd.f32 %v482, %v497
      %v503 = vadd.f32 %v483, %v497
      %v504 = vadd.f32 %v484, %v497
      %v505 = vadd.f32 %v485, %v497
      %v506 = vadd.f32 %v486, %v497
      %v507 = vadd.f32 %v487, %v497
      %v508 = vadd.f32 %v488, %v497
      %v509 = vadd.f32 %v489, %v497
      %v510 = vadd.f32 %v490, %v497
      %v511 = vadd.f32 %v491, %v497
      %vm512 = vcmp.gt.f32.partialorder %v499, 0.0
      %vm513 = vcmp.gt.f32.partialorder %v500, 0.0
      %vm514 = vcmp.gt.f32.partialorder %v501, 0.0
      %vm515 = vcmp.gt.f32.partialorder %v502, 0.0
      %vm516 = vcmp.gt.f32.partialorder %v503, 0.0
      %vm517 = vcmp.gt.f32.partialorder %v504, 0.0
      %vm518 = vcmp.gt.f32.partialorder %v505, 0.0
      %vm519 = vcmp.gt.f32.partialorder %v506, 0.0
      %vm520 = vcmp.gt.f32.partialorder %v507, 0.0
      %vm521 = vcmp.gt.f32.partialorder %v508, 0.0
      %vm522 = vcmp.gt.f32.partialorder %v509, 0.0
      %vm523 = vcmp.gt.f32.partialorder %v510, 0.0
      %vm524 = vcmp.gt.f32.partialorder %v511, 0.0
      %v525 = vmul.f32 %v499, 0.01
      %v526 = vmul.f32 %v500, 0.01
      %v527 = vmul.f32 %v501, 0.01
      %v528 = vmul.f32 %v502, 0.01
      %v529 = vmul.f32 %v503, 0.01
      %v530 = vmul.f32 %v504, 0.01
      %v531 = vmul.f32 %v505, 0.01
      %v532 = vmul.f32 %v506, 0.01
      %v533 = vmul.f32 %v507, 0.01
      %v534 = vmul.f32 %v508, 0.01
      %v535 = vmul.f32 %v509, 0.01
      %v536 = vmul.f32 %v510, 0.01
      %v537 = vmul.f32 %v511, 0.01
      %v538 = vsel %vm512, %v499, %v525
      %v539 = vsel %vm513, %v500, %v526
      %v540 = vsel %vm514, %v501, %v527
      %v541 = vsel %vm515, %v502, %v528
      %v542 = vsel %vm516, %v503, %v529
      %v543 = vsel %vm517, %v504, %v530
      %v544 = vsel %vm518, %v505, %v531
      %v545 = vsel %vm519, %v506, %v532
      %v546 = vsel %vm520, %v507, %v533
      %v547 = vsel %vm521, %v508, %v534
      %v548 = vsel %vm522, %v509, %v535
      %v549 = vsel %vm523, %v510, %v536
      %v550 = vsel %vm524, %v511, %v537
      %v551 = vpack.c.bf16 %v539, %v538
      %v552 = vpack.c.bf16 %v541, %v540
      %v553 = vpack.c.bf16 %v543, %v542
      %v554 = vpack.c.bf16 %v545, %v544
      %v555 = vpack.c.bf16 %v547, %v546
      %v556 = vpack.c.bf16 %v549, %v548
      %v557 = vpack.c.bf16 %v550, %v550
      %v565 = vunpack.c.l.b16 %v551
      %v566 = vunpack.c.h.b16 %v551
      %v567 = vunpack.c.l.b16 %v552
      %v568 = vunpack.c.h.b16 %v552
      %v569 = vunpack.c.l.b16 %v553
      %v570 = vunpack.c.h.b16 %v553
      %v571 = vunpack.c.l.b16 %v554
      %v572 = vunpack.c.h.b16 %v554
      %v573 = vunpack.c.l.b16 %v555
      %v574 = vunpack.c.h.b16 %v555
      %v575 = vunpack.c.l.b16 %v556
      %v576 = vunpack.c.h.b16 %v556
      %v577 = vunpack.c.l.b16 %v557
      %v578 = vpack.c.b16 %v565, %v565
      %v579 = vpack.c.b16 %v566, %v566
      %v580 = vpack.c.b16 %v567, %v567
      %v581 = vpack.c.b16 %v568, %v568
      %v582 = vpack.c.b16 %v569, %v569
      %v583 = vpack.c.b16 %v570, %v570
      %v584 = vpack.c.b16 %v571, %v571
      %v585 = vpack.c.b16 %v572, %v572
      %v586 = vpack.c.b16 %v573, %v573
      %v587 = vpack.c.b16 %v574, %v574
      %v588 = vpack.c.b16 %v575, %v575
      %v589 = vpack.c.b16 %v576, %v576
      %v590 = vpack.c.b16 %v577, %v577
      %604 = vst [vmem:[%s197] sm:$0xf] %v578
      %605 = vst [vmem:[%s197 + $0x4] sm:$0xf] %v579
      %606 = vst [vmem:[%s197 + $0x8] sm:$0xf] %v580
      %607 = vst [vmem:[%s197 + $0xc] sm:$0xf] %v581
      %608 = vst [vmem:[%s197 + $0x10] sm:$0xf] %v582
      %609 = vst [vmem:[%s197 + $0x14] sm:$0xf] %v583
      %610 = vst [vmem:[%s197 + $0x18] sm:$0xf] %v584
      %611 = vst [vmem:[%s197 + $0x1c] sm:$0xf] %v585
      %612 = vst [vmem:[%s197 + $0x20] sm:$0xf] %v586
      %613 = vst [vmem:[%s197 + $0x24] sm:$0xf] %v587
      %614 = vst [vmem:[%s197 + $0x28] sm:$0xf] %v588
      %615 = vst [vmem:[%s197 + $0x2c] sm:$0xf] %v589
      %616 = vst [vmem:[%s197 + $0x30] sm:$0x1] %v590
      %p617 = scmp.lt.s32.totalorder %s15, 1
      %s618 = scalar_select %p617, %s15, 1
      %s619 = smul.addr %s618, 13
      %s620 = smul.addr %s619, 4
      %s621 = scalar_lea.vmem %s4, %s620
      // Predicated region
      $region37: #{el_paro_net_bigger.5} parent=35 // pred_check
        %p622 = pneg %p122
      $region38: #{el_paro_net_bigger.5} parent=35 // pred_check_branch
        %624 = sbr.rel (%p622) target = $region40
      $region39: #{el_paro_net_bigger.5} parent=35 // pred_region
        _
      $region40: #{el_paro_net_bigger.5} parent=35 // pred_fallthru
        _
    $region36: #{el_paro_net_bigger.5} parent=5 // pred_fallthru
      _
    %p625 = scmp.le.s32.totalorder 2, %s10
    // Predicated region
    $region41: #{el_paro_net_bigger.5} parent=5 // pred_check
      %p626 = pneg %p625
    $region42: #{el_paro_net_bigger.5} parent=5 // pred_check_branch
      %628 = sbr.rel (%p626) target = $region44
    $region43: #{el_paro_net_bigger.5} parent=5 // pred_region
      %s629 = ssub.s32 %s10, 2
      // Predicated region
      $region45: #{el_paro_net_bigger.5} parent=43 // pred_check
        %p630 = pneg %p128
      $region46: #{el_paro_net_bigger.5} parent=43 // pred_check_branch
        %632 = sbr.rel (%p630) target = $region48
      $region47: #{el_paro_net_bigger.5} parent=43 // pred_region
        %p633 = scmp.lt.s32.totalorder %s16, 1
        %s634 = scalar_select %p633, %s16, 1
        %s635 = smul.addr %s634, 13
        %s636 = smul.addr %s635, 4
        %s637 = scalar_lea.vmem %s4, %s636
      $region48: #{el_paro_net_bigger.5} parent=43 // pred_fallthru
        _
    $region44: #{el_paro_net_bigger.5} parent=5 // pred_fallthru
      _
  $region6: #{el_paro_net_bigger.5} parent=0 // loop_footer
    %s14 = sadd.s32 1, %s10
  $region7: #{el_paro_net_bigger.5} parent=0 // loop_footer_branch
    %9 = sbr.rel target = $region3
  $region8: #{el_paro_net_bigger.5} parent=0 // loop_exit
    _

// kernel: el_paro_net_bigger.6
$region0: #{el_paro_net_bigger.6}
  #allocation0 [shape = 'u32[]', space=smem, size = 0x4, offset = 0x4, fixed_abs, tag = 'smem constant byte address 0x4 - core index']
  #allocation1 [shape = 'u32[144,128]{1,0:T(1,128)}', space=vmem, size = 0x12000, scoped, tag = 'internal scratch']
  %s0 = inlined_call_operand.vmem [shape: bf16[2,50,1152], index: 0, kind: input, shape index: {}]
  %s1 = inlined_call_operand.vmem [shape: bf16[1152,128], index: 1, kind: input, shape index: {}]
  %s2 = inlined_call_operand.vmem [shape: f32[1,128], index: 2, kind: input, shape index: {}]
  %s3 = inlined_call_operand.vmem [shape: f32[1,128], index: 3, kind: input, shape index: {}]
  %s4 = inlined_call_operand.vmem [shape: bf16[2,50,128], index: 4, kind: output, shape index: {}]
  %s5 = sld [smem:[#allocation0]]
  $region49: #{el_paro_net_bigger.6} parent=0
    _
  %s7 = ssub.s32 1, %s5
  %s8 = scalar_select 0, %s7, %s5
  loop: start=0, step=1, limit=4
  $region2: #{el_paro_net_bigger.6} parent=0 // loop_pre_header
    _
  $region3: #{el_paro_net_bigger.6} parent=0 // loop_header
    %s10 = sphi 0, %s14
    %p11 = scmp.ge.s32.totalorder %s10, 4
    %s20 = sphi 0, %s22
    %s23 = sphi 0, %s20
    %s24 = sphi 0, %s23
    %s40 = sphi 0, %s24
    %s44 = sphi 0, %s44
    %s46 = sphi 0, %s44
    %s47 = sphi 0, %s46
    %s61 = sphi 0, %s47
    %s65 = sphi 0, %s65
    %s67 = sphi 0, %s65
    %s68 = sphi 0, %s67
    %s82 = sphi 0, %s68
    %s86 = sphi 0, %s86
    %s88 = sphi 0, %s86
    %s89 = sphi 0, %s88
    %s103 = sphi 0, %s89
    %s109 = sphi 0, %s111
    %s112 = sphi 0, %s109
    %s113 = sphi 0, %s112
    %s129 = sphi 0, %s113
  $region4: #{el_paro_net_bigger.6} parent=0 // loop_header_branch
    %13 = sbr.rel (%p11) target = $region8
  $region5: #{el_paro_net_bigger.6} parent=0 // loop_body
    %s15 = ssub.s32 %s10, 1
    %s16 = ssub.s32 %s10, 2
    %s17 = sadd.s32 %s10, 1
    %s18 = ssub.s32 %s10, %s17
    %p19 = scmp.eq.s32.totalorder %s18, 0
    %s21 = sadd.s32 %s20, 1
    %s22 = scalar_select %p19, %s20, %s21
    %p25 = pneg %p19
    %p26 = scmp.eq.s32.totalorder %s10, 1
    %p27 = por %p25, %p26
    %p28 = scmp.ne.s32.totalorder %s20, %s23
    %p29 = scmp.eq.s32.totalorder %s10, 0
    %p30 = por %p28, %p29
    %p31 = scmp.ne.s32.totalorder %s20, %s23
    %p32 = scmp.eq.s32.totalorder %s15, 1
    %p33 = por %p31, %p32
    %p34 = scmp.ne.s32.totalorder %s23, %s24
    %p35 = scmp.eq.s32.totalorder %s15, 0
    %p36 = por %p34, %p35
    %p37 = scmp.ne.s32.totalorder %s23, %s24
    %p38 = scmp.eq.s32.totalorder %s16, 1
    %p39 = por %p37, %p38
    %p41 = scmp.ne.s32.totalorder %s24, %s40
    %p42 = scmp.eq.s32.totalorder %s16, 0
    %p43 = por %p41, %p42
    %s45 = sadd.s32 %s44, 1
    %p48 = scmp.eq.s32.totalorder %s10, 1
    %p49 = scmp.ne.s32.totalorder %s44, %s46
    %p50 = scmp.eq.s32.totalorder %s10, 0
    %p51 = por %p49, %p50
    %p52 = scmp.ne.s32.totalorder %s44, %s46
    %p53 = scmp.eq.s32.totalorder %s15, 1
    %p54 = por %p52, %p53
    %p55 = scmp.ne.s32.totalorder %s46, %s47
    %p56 = scmp.eq.s32.totalorder %s15, 0
    %p57 = por %p55, %p56
    %p58 = scmp.ne.s32.totalorder %s46, %s47
    %p59 = scmp.eq.s32.totalorder %s16, 1
    %p60 = por %p58, %p59
    %p62 = scmp.ne.s32.totalorder %s47, %s61
    %p63 = scmp.eq.s32.totalorder %s16, 0
    %p64 = por %p62, %p63
    %s66 = sadd.s32 %s65, 1
    %p69 = scmp.eq.s32.totalorder %s10, 1
    %p70 = scmp.ne.s32.totalorder %s65, %s67
    %p71 = scmp.eq.s32.totalorder %s10, 0
    %p72 = por %p70, %p71
    %p73 = scmp.ne.s32.totalorder %s65, %s67
    %p74 = scmp.eq.s32.totalorder %s15, 1
    %p75 = por %p73, %p74
    %p76 = scmp.ne.s32.totalorder %s67, %s68
    %p77 = scmp.eq.s32.totalorder %s15, 0
    %p78 = por %p76, %p77
    %p79 = scmp.ne.s32.totalorder %s67, %s68
    %p80 = scmp.eq.s32.totalorder %s16, 1
    %p81 = por %p79, %p80
    %p83 = scmp.ne.s32.totalorder %s68, %s82
    %p84 = scmp.eq.s32.totalorder %s16, 0
    %p85 = por %p83, %p84
    %s87 = sadd.s32 %s86, 1
    %p90 = scmp.eq.s32.totalorder %s10, 1
    %p91 = scmp.ne.s32.totalorder %s86, %s88
    %p92 = scmp.eq.s32.totalorder %s10, 0
    %p93 = por %p91, %p92
    %p94 = scmp.ne.s32.totalorder %s86, %s88
    %p95 = scmp.eq.s32.totalorder %s15, 1
    %p96 = por %p94, %p95
    %p97 = scmp.ne.s32.totalorder %s88, %s89
    %p98 = scmp.eq.s32.totalorder %s15, 0
    %p99 = por %p97, %p98
    %p100 = scmp.ne.s32.totalorder %s88, %s89
    %p101 = scmp.eq.s32.totalorder %s16, 1
    %p102 = por %p100, %p101
    %p104 = scmp.ne.s32.totalorder %s89, %s103
    %p105 = scmp.eq.s32.totalorder %s16, 0
    %p106 = por %p104, %p105
    %s107 = ssub.s32 %s10, %s17
    %p108 = scmp.eq.s32.totalorder %s107, 0
    %s110 = sadd.s32 %s109, 1
    %s111 = scalar_select %p108, %s109, %s110
    %p114 = pneg %p108
    %p115 = scmp.eq.s32.totalorder %s10, 1
    %p116 = por %p114, %p115
    %p117 = scmp.ne.s32.totalorder %s109, %s112
    %p118 = scmp.eq.s32.totalorder %s10, 0
    %p119 = por %p117, %p118
    %p120 = scmp.ne.s32.totalorder %s109, %s112
    %p121 = scmp.eq.s32.totalorder %s15, 1
    %p122 = por %p120, %p121
    %p123 = scmp.ne.s32.totalorder %s112, %s113
    %p124 = scmp.eq.s32.totalorder %s15, 0
    %p125 = por %p123, %p124
    %p126 = scmp.ne.s32.totalorder %s112, %s113
    %p127 = scmp.eq.s32.totalorder %s16, 1
    %p128 = por %p126, %p127
    %p130 = scmp.ne.s32.totalorder %s113, %s129
    %p131 = scmp.eq.s32.totalorder %s16, 0
    %p132 = por %p130, %p131
    %p133 = scmp.le.s32.totalorder 1, %s10
    %p134 = scmp.lt.s32.totalorder %s10, 3
    %p135 = pnand %p133, %p134
    %p136 = pneg %p135
    // Predicated region
    $region9: #{el_paro_net_bigger.6} parent=5 // pred_check
      _
    $region10: #{el_paro_net_bigger.6} parent=5 // pred_check_branch
      %138 = sbr.rel (%p135) target = $region12
    $region11: #{el_paro_net_bigger.6} parent=5 // pred_region
      %s139 = ssub.s32 %s10, 1
      // Predicated region
      $region13: #{el_paro_net_bigger.6} parent=11 // pred_check
        %p140 = pneg %p57
      $region14: #{el_paro_net_bigger.6} parent=11 // pred_check_branch
        %142 = sbr.rel (%p140) target = $region16
      $region15: #{el_paro_net_bigger.6} parent=11 // pred_region
        _
      $region16: #{el_paro_net_bigger.6} parent=11 // pred_fallthru
        _
      // Predicated region
      $region17: #{el_paro_net_bigger.6} parent=11 // pred_check
        %p143 = pneg %p78
      $region18: #{el_paro_net_bigger.6} parent=11 // pred_check_branch
        %145 = sbr.rel (%p143) target = $region20
      $region19: #{el_paro_net_bigger.6} parent=11 // pred_region
        _
      $region20: #{el_paro_net_bigger.6} parent=11 // pred_fallthru
        _
      // Predicated region
      $region21: #{el_paro_net_bigger.6} parent=11 // pred_check
        %p146 = pneg %p99
      $region22: #{el_paro_net_bigger.6} parent=11 // pred_check_branch
        %148 = sbr.rel (%p146) target = $region24
      $region23: #{el_paro_net_bigger.6} parent=11 // pred_region
        _
      $region24: #{el_paro_net_bigger.6} parent=11 // pred_fallthru
        _
    $region12: #{el_paro_net_bigger.6} parent=5 // pred_fallthru
      _
    %p149 = scmp.lt.s32.totalorder %s10, 2
    // Predicated region
    $region25: #{el_paro_net_bigger.6} parent=5 // pred_check
      %p150 = pneg %p149
    $region26: #{el_paro_net_bigger.6} parent=5 // pred_check_branch
      %152 = sbr.rel (%p150) target = $region28
    $region27: #{el_paro_net_bigger.6} parent=5 // pred_region
      // Predicated region
      $region29: #{el_paro_net_bigger.6} parent=27 // pred_check
        %p153 = pneg %p30
      $region30: #{el_paro_net_bigger.6} parent=27 // pred_check_branch
        %155 = sbr.rel (%p153) target = $region32
      $region31: #{el_paro_net_bigger.6} parent=27 // pred_region
        %p156 = scmp.lt.s32.totalorder %s10, 1
        %s157 = scalar_select %p156, %s10, 1
        %s158 = smul.addr %s157, 63
        %s159 = smul.addr %s158, 4
        %s160 = scalar_lea.vmem %s0, %s159
      $region32: #{el_paro_net_bigger.6} parent=27 // pred_fallthru
        _
    $region28: #{el_paro_net_bigger.6} parent=5 // pred_fallthru
      _
    %p161 = scmp.le.s32.totalorder 1, %s10
    %p162 = scmp.lt.s32.totalorder %s10, 3
    %p163 = pnand %p161, %p162
    %p164 = pneg %p163
    // Predicated region
    $region33: #{el_paro_net_bigger.6} parent=5 // pred_check
      _
    $region34: #{el_paro_net_bigger.6} parent=5 // pred_check_branch
      %166 = sbr.rel (%p163) target = $region36
    $region35: #{el_paro_net_bigger.6} parent=5 // pred_region
      %s167 = ssub.s32 %s10, 1
      %p168 = scmp.lt.s32.totalorder %s15, 1
      %s169 = scalar_select %p168, %s15, 1
      %s170 = smul.addr %s169, 63
      %s171 = smul.addr %s170, 4
      %s172 = scalar_lea.vmem %s0, %s171
      %p173 = pneg %p36
      %p174 = pneg %p33
      %p175 = pneg %p57
      %p176 = pneg %p54
      %p177 = pneg %p78
      %p178 = pneg %p75
      %p179 = pneg %p99
      %p180 = pneg %p96
      %p181 = pneg %p125
      %p182 = pneg %p122
      %p183 = scmp.lt.s32.totalorder %s15, 1
      %s184 = scalar_select %p183, %s15, 1
      %s185 = smul.addr %s184, 7
      %s186 = smul.addr %s185, 4
      %s187 = scalar_lea.vmem %s4, %s186
      %p188 = scmp.lt.s32.totalorder %s15, 1
      %s189 = scalar_select %p188, %s15, 1
      %s190 = smul.addr %s189, 63
      %s191 = smul.addr %s190, 4
      %s192 = scalar_lea.vmem %s0, %s191
      %p193 = scmp.lt.s32.totalorder %s15, 1
      %s194 = scalar_select %p193, %s15, 1
      %s195 = smul.addr %s194, 7
      %s196 = smul.addr %s195, 4
      %s197 = scalar_lea.vmem %s4, %s196
      %v199 = vld [vmem:[%s192] sm:$0xff]
      %v200 = vld [vmem:[%s192 + $0x8] sm:$0xff]
      %v201 = vld [vmem:[%s192 + $0x10] sm:$0xff]
      %v202 = vld [vmem:[%s192 + $0x18] sm:$0xff]
      %v203 = vld [vmem:[%s192 + $0x20] sm:$0xf]
      %v204 = vld [vmem:[%s192 + $0x24] sm:$0xff]
      %v205 = vld [vmem:[%s192 + $0x2c] sm:$0xff]
      %v206 = vld [vmem:[%s192 + $0x34] sm:$0xff]
      %v207 = vld [vmem:[%s192 + $0x3c] sm:$0xff]
      %v208 = vld [vmem:[%s192 + $0x44] sm:$0xf]
      %v209 = vld [vmem:[%s192 + $0x48] sm:$0xff]
      %v210 = vld [vmem:[%s192 + $0x50] sm:$0xff]
      %v211 = vld [vmem:[%s192 + $0x58] sm:$0xff]
      %v212 = vld [vmem:[%s192 + $0x60] sm:$0xff]
      %v213 = vld [vmem:[%s192 + $0x68] sm:$0xf]
      %v214 = vld [vmem:[%s192 + $0x6c] sm:$0xff]
      %v215 = vld [vmem:[%s192 + $0x74] sm:$0xff]
      %v216 = vld [vmem:[%s192 + $0x7c] sm:$0xff]
      %v217 = vld [vmem:[%s192 + $0x84] sm:$0xff]
      %v218 = vld [vmem:[%s192 + $0x8c] sm:$0xf]
      %v219 = vld [vmem:[%s192 + $0x90] sm:$0xff]
      %v220 = vld [vmem:[%s192 + $0x98] sm:$0xff]
      %v221 = vld [vmem:[%s192 + $0xa0] sm:$0xff]
      %v222 = vld [vmem:[%s192 + $0xa8] sm:$0xff]
      %v223 = vld [vmem:[%s192 + $0xb0] sm:$0xf]
      %v224 = vld [vmem:[%s192 + $0xb4] sm:$0xff]
      %v225 = vld [vmem:[%s192 + $0xbc] sm:$0xff]
      %v226 = vld [vmem:[%s192 + $0xc4] sm:$0xff]
      %v227 = vld [vmem:[%s192 + $0xcc] sm:$0xff]
      %v228 = vld [vmem:[%s192 + $0xd4] sm:$0xf]
      %v229 = vld [vmem:[%s192 + $0xd8] sm:$0x11]
      %v230 = vld [vmem:[%s192 + $0xe0] sm:$0x11]
      %v231 = vld [vmem:[%s192 + $0xe8] sm:$0x11]
      %v232 = vld [vmem:[%s192 + $0xf0] sm:$0x11]
      %v233 = vld [vmem:[%s192 + $0xf8] sm:$0x1]
      %v234 = vld [vmem:[%s1] sm:$0xf]
      %v235 = vld [vmem:[%s1 + $0x4] sm:$0xf]
      %v236 = vld [vmem:[%s1 + $0x8] sm:$0xf]
      %v237 = vld [vmem:[%s1 + $0xc] sm:$0xf]
      %v238 = vld [vmem:[%s1 + $0x10] sm:$0xf]
      %v239 = vld [vmem:[%s1 + $0x14] sm:$0xf]
      %v240 = vld [vmem:[%s1 + $0x18] sm:$0xf]
      %v241 = vld [vmem:[%s1 + $0x1c] sm:$0xf]
      %v242 = vld [vmem:[%s1 + $0x20] sm:$0xf]
      %v243 = vld [vmem:[%s1 + $0x24] sm:$0xf]
      %v244 = vld [vmem:[%s1 + $0x28] sm:$0xf]
      %v245 = vld [vmem:[%s1 + $0x2c] sm:$0xf]
      %v246 = vld [vmem:[%s1 + $0x30] sm:$0xf]
      %v247 = vld [vmem:[%s1 + $0x34] sm:$0xf]
      %v248 = vld [vmem:[%s1 + $0x38] sm:$0xf]
      %v249 = vld [vmem:[%s1 + $0x3c] sm:$0xf]
      %v250 = vld [vmem:[%s1 + $0x40] sm:$0xf]
      %v251 = vld [vmem:[%s1 + $0x44] sm:$0xf]
      %v252 = vld [vmem:[%s1 + $0x48] sm:$0xf]
      %v253 = vld [vmem:[%s1 + $0x4c] sm:$0xf]
      %v254 = vld [vmem:[%s1 + $0x50] sm:$0xf]
      %v255 = vld [vmem:[%s1 + $0x54] sm:$0xf]
      %v256 = vld [vmem:[%s1 + $0x58] sm:$0xf]
      %v257 = vld [vmem:[%s1 + $0x5c] sm:$0xf]
      %v258 = vld [vmem:[%s1 + $0x60] sm:$0xf]
      %v259 = vld [vmem:[%s1 + $0x64] sm:$0xf]
      %v260 = vld [vmem:[%s1 + $0x68] sm:$0xf]
      %v261 = vld [vmem:[%s1 + $0x6c] sm:$0xf]
      %v262 = vld [vmem:[%s1 + $0x70] sm:$0xf]
      %v263 = vld [vmem:[%s1 + $0x74] sm:$0xf]
      %v264 = vld [vmem:[%s1 + $0x78] sm:$0xf]
      %v265 = vld [vmem:[%s1 + $0x7c] sm:$0xf]
      %v266 = vld [vmem:[%s1 + $0x80] sm:$0xf]
      %v267 = vld [vmem:[%s1 + $0x84] sm:$0xf]
      %v268 = vld [vmem:[%s1 + $0x88] sm:$0xf]
      %v269 = vld [vmem:[%s1 + $0x8c] sm:$0xf]
      %v270 = vld [vmem:[%s1 + $0x90] sm:$0xf]
      %v271 = vld [vmem:[%s1 + $0x94] sm:$0xf]
      %v272 = vld [vmem:[%s1 + $0x98] sm:$0xf]
      %v273 = vld [vmem:[%s1 + $0x9c] sm:$0xf]
      %v274 = vld [vmem:[%s1 + $0xa0] sm:$0xf]
      %v275 = vld [vmem:[%s1 + $0xa4] sm:$0xf]
      %v276 = vld [vmem:[%s1 + $0xa8] sm:$0xf]
      %v277 = vld [vmem:[%s1 + $0xac] sm:$0xf]
      %v278 = vld [vmem:[%s1 + $0xb0] sm:$0xf]
      %v279 = vld [vmem:[%s1 + $0xb4] sm:$0xf]
      %v280 = vld [vmem:[%s1 + $0xb8] sm:$0xf]
      %v281 = vld [vmem:[%s1 + $0xbc] sm:$0xf]
      %v282 = vld [vmem:[%s1 + $0xc0] sm:$0xf]
      %v283 = vld [vmem:[%s1 + $0xc4] sm:$0xf]
      %v284 = vld [vmem:[%s1 + $0xc8] sm:$0xf]
      %v285 = vld [vmem:[%s1 + $0xcc] sm:$0xf]
      %v286 = vld [vmem:[%s1 + $0xd0] sm:$0xf]
      %v287 = vld [vmem:[%s1 + $0xd4] sm:$0xf]
      %v288 = vld [vmem:[%s1 + $0xd8] sm:$0xf]
      %v289 = vld [vmem:[%s1 + $0xdc] sm:$0xf]
      %v290 = vld [vmem:[%s1 + $0xe0] sm:$0xf]
      %v291 = vld [vmem:[%s1 + $0xe4] sm:$0xf]
      %v292 = vld [vmem:[%s1 + $0xe8] sm:$0xf]
      %v293 = vld [vmem:[%s1 + $0xec] sm:$0xf]
      %v294 = vld [vmem:[%s1 + $0xf0] sm:$0xf]
      %v295 = vld [vmem:[%s1 + $0xf4] sm:$0xf]
      %v296 = vld [vmem:[%s1 + $0xf8] sm:$0xf]
      %v297 = vld [vmem:[%s1 + $0xfc] sm:$0xf]
      %v298 = vld [vmem:[%s1 + $0x100] sm:$0xf]
      %v299 = vld [vmem:[%s1 + $0x104] sm:$0xf]
      %v300 = vld [vmem:[%s1 + $0x108] sm:$0xf]
      %v301 = vld [vmem:[%s1 + $0x10c] sm:$0xf]
      %v302 = vld [vmem:[%s1 + $0x110] sm:$0xf]
      %v303 = vld [vmem:[%s1 + $0x114] sm:$0xf]
      %v304 = vld [vmem:[%s1 + $0x118] sm:$0xf]
      %v305 = vld [vmem:[%s1 + $0x11c] sm:$0xf]
      %v306 = vld [vmem:[%s1 + $0x120] sm:$0xf]
      %v307 = vld [vmem:[%s1 + $0x124] sm:$0xf]
      %v308 = vld [vmem:[%s1 + $0x128] sm:$0xf]
      %v309 = vld [vmem:[%s1 + $0x12c] sm:$0xf]
      %v310 = vld [vmem:[%s1 + $0x130] sm:$0xf]
      %v311 = vld [vmem:[%s1 + $0x134] sm:$0xf]
      %v312 = vld [vmem:[%s1 + $0x138] sm:$0xf]
      %v313 = vld [vmem:[%s1 + $0x13c] sm:$0xf]
      %v314 = vld [vmem:[%s1 + $0x140] sm:$0xf]
      %v315 = vld [vmem:[%s1 + $0x144] sm:$0xf]
      %v316 = vld [vmem:[%s1 + $0x148] sm:$0xf]
      %v317 = vld [vmem:[%s1 + $0x14c] sm:$0xf]
      %v318 = vld [vmem:[%s1 + $0x150] sm:$0xf]
      %v319 = vld [vmem:[%s1 + $0x154] sm:$0xf]
      %v320 = vld [vmem:[%s1 + $0x158] sm:$0xf]
      %v321 = vld [vmem:[%s1 + $0x15c] sm:$0xf]
      %v322 = vld [vmem:[%s1 + $0x160] sm:$0xf]
      %v323 = vld [vmem:[%s1 + $0x164] sm:$0xf]
      %v324 = vld [vmem:[%s1 + $0x168] sm:$0xf]
      %v325 = vld [vmem:[%s1 + $0x16c] sm:$0xf]
      %v326 = vld [vmem:[%s1 + $0x170] sm:$0xf]
      %v327 = vld [vmem:[%s1 + $0x174] sm:$0xf]
      %v328 = vld [vmem:[%s1 + $0x178] sm:$0xf]
      %v329 = vld [vmem:[%s1 + $0x17c] sm:$0xf]
      %v330 = vld [vmem:[%s1 + $0x180] sm:$0xf]
      %v331 = vld [vmem:[%s1 + $0x184] sm:$0xf]
      %v332 = vld [vmem:[%s1 + $0x188] sm:$0xf]
      %v333 = vld [vmem:[%s1 + $0x18c] sm:$0xf]
      %v334 = vld [vmem:[%s1 + $0x190] sm:$0xf]
      %v335 = vld [vmem:[%s1 + $0x194] sm:$0xf]
      %v336 = vld [vmem:[%s1 + $0x198] sm:$0xf]
      %v337 = vld [vmem:[%s1 + $0x19c] sm:$0xf]
      %v338 = vld [vmem:[%s1 + $0x1a0] sm:$0xf]
      %v339 = vld [vmem:[%s1 + $0x1a4] sm:$0xf]
      %v340 = vld [vmem:[%s1 + $0x1a8] sm:$0xf]
      %v341 = vld [vmem:[%s1 + $0x1ac] sm:$0xf]
      %v342 = vld [vmem:[%s1 + $0x1b0] sm:$0xf]
      %v343 = vld [vmem:[%s1 + $0x1b4] sm:$0xf]
      %v344 = vld [vmem:[%s1 + $0x1b8] sm:$0xf]
      %v345 = vld [vmem:[%s1 + $0x1bc] sm:$0xf]
      %v346 = vld [vmem:[%s1 + $0x1c0] sm:$0xf]
      %v347 = vld [vmem:[%s1 + $0x1c4] sm:$0xf]
      %v348 = vld [vmem:[%s1 + $0x1c8] sm:$0xf]
      %v349 = vld [vmem:[%s1 + $0x1cc] sm:$0xf]
      %v350 = vld [vmem:[%s1 + $0x1d0] sm:$0xf]
      %v351 = vld [vmem:[%s1 + $0x1d4] sm:$0xf]
      %v352 = vld [vmem:[%s1 + $0x1d8] sm:$0xf]
      %v353 = vld [vmem:[%s1 + $0x1dc] sm:$0xf]
      %v354 = vld [vmem:[%s1 + $0x1e0] sm:$0xf]
      %v355 = vld [vmem:[%s1 + $0x1e4] sm:$0xf]
      %v356 = vld [vmem:[%s1 + $0x1e8] sm:$0xf]
      %v357 = vld [vmem:[%s1 + $0x1ec] sm:$0xf]
      %v358 = vld [vmem:[%s1 + $0x1f0] sm:$0xf]
      %v359 = vld [vmem:[%s1 + $0x1f4] sm:$0xf]
      %v360 = vld [vmem:[%s1 + $0x1f8] sm:$0xf]
      %v361 = vld [vmem:[%s1 + $0x1fc] sm:$0xf]
      %v362 = vld [vmem:[%s1 + $0x200] sm:$0xf]
      %v363 = vld [vmem:[%s1 + $0x204] sm:$0xf]
      %v364 = vld [vmem:[%s1 + $0x208] sm:$0xf]
      %v365 = vld [vmem:[%s1 + $0x20c] sm:$0xf]
      %v366 = vld [vmem:[%s1 + $0x210] sm:$0xf]
      %v367 = vld [vmem:[%s1 + $0x214] sm:$0xf]
      %v368 = vld [vmem:[%s1 + $0x218] sm:$0xf]
      %v369 = vld [vmem:[%s1 + $0x21c] sm:$0xf]
      %v370 = vld [vmem:[%s1 + $0x220] sm:$0xf]
      %v371 = vld [vmem:[%s1 + $0x224] sm:$0xf]
      %v372 = vld [vmem:[%s1 + $0x228] sm:$0xf]
      %v373 = vld [vmem:[%s1 + $0x22c] sm:$0xf]
      %v374 = vld [vmem:[%s1 + $0x230] sm:$0xf]
      %v375 = vld [vmem:[%s1 + $0x234] sm:$0xf]
      %v376 = vld [vmem:[%s1 + $0x238] sm:$0xf]
      %v377 = vld [vmem:[%s1 + $0x23c] sm:$0xf]
      %v413 = vunpack.c.l.b16 %v199
      %v414 = vunpack.c.h.b16 %v199
      %v415 = vunpack.c.l.b16 %v200
      %v416 = vunpack.c.h.b16 %v200
      %v417 = vunpack.c.l.b16 %v201
      %v418 = vunpack.c.h.b16 %v201
      %v419 = vunpack.c.l.b16 %v202
      %v420 = vunpack.c.h.b16 %v202
      %v421 = vunpack.c.l.b16 %v203
      %v422 = vunpack.c.l.b16 %v204
      %v423 = vunpack.c.h.b16 %v204
      %v424 = vunpack.c.l.b16 %v205
      %v425 = vunpack.c.h.b16 %v205
      %v426 = vunpack.c.l.b16 %v206
      %v427 = vunpack.c.h.b16 %v206
      %v428 = vunpack.c.l.b16 %v207
      %v429 = vunpack.c.h.b16 %v207
      %v430 = vunpack.c.l.b16 %v208
      %v431 = vunpack.c.l.b16 %v209
      %v432 = vunpack.c.h.b16 %v209
      %v433 = vunpack.c.l.b16 %v210
      %v434 = vunpack.c.h.b16 %v210
      %v435 = vunpack.c.l.b16 %v211
      %v436 = vunpack.c.h.b16 %v211
      %v437 = vunpack.c.l.b16 %v212
      %v438 = vunpack.c.h.b16 %v212
      %v439 = vunpack.c.l.b16 %v213
      %v440 = vunpack.c.l.b16 %v214
      %v441 = vunpack.c.h.b16 %v214
      %v442 = vunpack.c.l.b16 %v215
      %v443 = vunpack.c.h.b16 %v215
      %v444 = vunpack.c.l.b16 %v216
      %v445 = vunpack.c.h.b16 %v216
      %v446 = vunpack.c.l.b16 %v217
      %v447 = vunpack.c.h.b16 %v217
      %v448 = vunpack.c.l.b16 %v218
      %v449 = vunpack.c.l.b16 %v219
      %v450 = vunpack.c.h.b16 %v219
      %v451 = vunpack.c.l.b16 %v220
      %v452 = vunpack.c.h.b16 %v220
      %v453 = vunpack.c.l.b16 %v221
      %v454 = vunpack.c.h.b16 %v221
      %v455 = vunpack.c.l.b16 %v222
      %v456 = vunpack.c.h.b16 %v222
      %v457 = vunpack.c.l.b16 %v223
      %v458 = vunpack.c.l.b16 %v224
      %v459 = vunpack.c.h.b16 %v224
      %v460 = vunpack.c.l.b16 %v225
      %v461 = vunpack.c.h.b16 %v225
      %v462 = vunpack.c.l.b16 %v226
      %v463 = vunpack.c.h.b16 %v226
      %v464 = vunpack.c.l.b16 %v227
      %v465 = vunpack.c.h.b16 %v227
      %v466 = vunpack.c.l.b16 %v228
      %v467 = vunpack.c.l.b16 %v229
      %v468 = vunpack.c.h.b16 %v229
      %v469 = vunpack.c.l.b16 %v230
      %v470 = vunpack.c.h.b16 %v230
      %v471 = vunpack.c.l.b16 %v231
      %v472 = vunpack.c.h.b16 %v231
      %v473 = vunpack.c.l.b16 %v232
      %v474 = vunpack.c.h.b16 %v232
      %v475 = vunpack.c.l.b16 %v233
      %v476 = vpack.c.b16 %v422, %v413
      %v477 = vpack.c.b16 %v423, %v414
      %v478 = vpack.c.b16 %v424, %v415
      %v479 = vpack.c.b16 %v425, %v416
      %v480 = vpack.c.b16 %v426, %v417
      %v481 = vpack.c.b16 %v427, %v418
      %v482 = vpack.c.b16 %v428, %v419
      %v483 = vpack.c.b16 %v429, %v420
      %v484 = vpack.c.b16 %v430, %v421
      %v485 = vpack.c.b16 %v440, %v431
      %v486 = vpack.c.b16 %v441, %v432
      %v487 = vpack.c.b16 %v442, %v433
      %v488 = vpack.c.b16 %v443, %v434
      %v489 = vpack.c.b16 %v444, %v435
      %v490 = vpack.c.b16 %v445, %v436
      %v491 = vpack.c.b16 %v446, %v437
      %v492 = vpack.c.b16 %v447, %v438
      %v493 = vpack.c.b16 %v448, %v439
      %v494 = vpack.c.b16 %v458, %v449
      %v495 = vpack.c.b16 %v459, %v450
      %v496 = vpack.c.b16 %v460, %v451
      %v497 = vpack.c.b16 %v461, %v452
      %v498 = vpack.c.b16 %v462, %v453
      %v499 = vpack.c.b16 %v463, %v454
      %v500 = vpack.c.b16 %v464, %v455
      %v501 = vpack.c.b16 %v465, %v456
      %v502 = vpack.c.b16 %v466, %v457
      %v503 = vpack.c.b16 %v467, %v467
      %v504 = vpack.c.b16 %v468, %v468
      %v505 = vpack.c.b16 %v469, %v469
      %v506 = vpack.c.b16 %v470, %v470
      %v507 = vpack.c.b16 %v471, %v471
      %v508 = vpack.c.b16 %v472, %v472
      %v509 = vpack.c.b16 %v473, %v473
      %v510 = vpack.c.b16 %v474, %v474
      %v511 = vpack.c.b16 %v475, %v475
      %v692 = vunpack.c.l.b16 %v234
      %v693 = vunpack.c.l.b16 %v235
      %v694 = vunpack.c.l.b16 %v236
      %v695 = vunpack.c.l.b16 %v237
      %v696 = vunpack.c.l.b16 %v238
      %v697 = vunpack.c.l.b16 %v239
      %v698 = vunpack.c.l.b16 %v240
      %v699 = vunpack.c.l.b16 %v241
      %v700 = vunpack.c.l.b16 %v242
      %v701 = vunpack.c.l.b16 %v243
      %v702 = vunpack.c.l.b16 %v244
      %v703 = vunpack.c.l.b16 %v245
      %v704 = vunpack.c.l.b16 %v246
      %v705 = vunpack.c.l.b16 %v247
      %v706 = vunpack.c.l.b16 %v248
      %v707 = vunpack.c.l.b16 %v249
      %v708 = vunpack.c.l.b16 %v250
      %v709 = vunpack.c.l.b16 %v251
      %v710 = vunpack.c.l.b16 %v252
      %v711 = vunpack.c.l.b16 %v253
      %v712 = vunpack.c.l.b16 %v254
      %v713 = vunpack.c.l.b16 %v255
      %v714 = vunpack.c.l.b16 %v256
      %v715 = vunpack.c.l.b16 %v257
      %v716 = vunpack.c.l.b16 %v258
      %v717 = vunpack.c.l.b16 %v259
      %v718 = vunpack.c.l.b16 %v260
      %v719 = vunpack.c.l.b16 %v261
      %v720 = vunpack.c.l.b16 %v262
      %v721 = vunpack.c.l.b16 %v263
      %v722 = vunpack.c.l.b16 %v264
      %v723 = vunpack.c.l.b16 %v265
      %v724 = vunpack.c.l.b16 %v266
      %v725 = vunpack.c.l.b16 %v267
      %v726 = vunpack.c.l.b16 %v268
      %v727 = vunpack.c.l.b16 %v269
      %v728 = vunpack.c.l.b16 %v270
      %v729 = vunpack.c.l.b16 %v271
      %v730 = vunpack.c.l.b16 %v272
      %v731 = vunpack.c.l.b16 %v273
      %v732 = vunpack.c.l.b16 %v274
      %v733 = vunpack.c.l.b16 %v275
      %v734 = vunpack.c.l.b16 %v276
      %v735 = vunpack.c.l.b16 %v277
      %v736 = vunpack.c.l.b16 %v278
      %v737 = vunpack.c.l.b16 %v279
      %v738 = vunpack.c.l.b16 %v280
      %v739 = vunpack.c.l.b16 %v281
      %v740 = vunpack.c.l.b16 %v282
      %v741 = vunpack.c.l.b16 %v283
      %v742 = vunpack.c.l.b16 %v284
      %v743 = vunpack.c.l.b16 %v285
      %v744 = vunpack.c.l.b16 %v286
      %v745 = vunpack.c.l.b16 %v287
      %v746 = vunpack.c.l.b16 %v288
      %v747 = vunpack.c.l.b16 %v289
      %v748 = vunpack.c.l.b16 %v290
      %v749 = vunpack.c.l.b16 %v291
      %v750 = vunpack.c.l.b16 %v292
      %v751 = vunpack.c.l.b16 %v293
      %v752 = vunpack.c.l.b16 %v294
      %v753 = vunpack.c.l.b16 %v295
      %v754 = vunpack.c.l.b16 %v296
      %v755 = vunpack.c.l.b16 %v297
      %v756 = vunpack.c.l.b16 %v298
      %v757 = vunpack.c.l.b16 %v299
      %v758 = vunpack.c.l.b16 %v300
      %v759 = vunpack.c.l.b16 %v301
      %v760 = vunpack.c.l.b16 %v302
      %v761 = vunpack.c.l.b16 %v303
      %v762 = vunpack.c.l.b16 %v304
      %v763 = vunpack.c.l.b16 %v305
      %v764 = vunpack.c.l.b16 %v306
      %v765 = vunpack.c.l.b16 %v307
      %v766 = vunpack.c.l.b16 %v308
      %v767 = vunpack.c.l.b16 %v309
      %v768 = vunpack.c.l.b16 %v310
      %v769 = vunpack.c.l.b16 %v311
      %v770 = vunpack.c.l.b16 %v312
      %v771 = vunpack.c.l.b16 %v313
      %v772 = vunpack.c.l.b16 %v314
      %v773 = vunpack.c.l.b16 %v315
      %v774 = vunpack.c.l.b16 %v316
      %v775 = vunpack.c.l.b16 %v317
      %v776 = vunpack.c.l.b16 %v318
      %v777 = vunpack.c.l.b16 %v319
      %v778 = vunpack.c.l.b16 %v320
      %v779 = vunpack.c.l.b16 %v321
      %v780 = vunpack.c.l.b16 %v322
      %v781 = vunpack.c.l.b16 %v323
      %v782 = vunpack.c.l.b16 %v324
      %v783 = vunpack.c.l.b16 %v325
      %v784 = vunpack.c.l.b16 %v326
      %v785 = vunpack.c.l.b16 %v327
      %v786 = vunpack.c.l.b16 %v328
      %v787 = vunpack.c.l.b16 %v329
      %v788 = vunpack.c.l.b16 %v330
      %v789 = vunpack.c.l.b16 %v331
      %v790 = vunpack.c.l.b16 %v332
      %v791 = vunpack.c.l.b16 %v333
      %v792 = vunpack.c.l.b16 %v334
      %v793 = vunpack.c.l.b16 %v335
      %v794 = vunpack.c.l.b16 %v336
      %v795 = vunpack.c.l.b16 %v337
      %v796 = vunpack.c.l.b16 %v338
      %v797 = vunpack.c.l.b16 %v339
      %v798 = vunpack.c.l.b16 %v340
      %v799 = vunpack.c.l.b16 %v341
      %v800 = vunpack.c.l.b16 %v342
      %v801 = vunpack.c.l.b16 %v343
      %v802 = vunpack.c.l.b16 %v344
      %v803 = vunpack.c.l.b16 %v345
      %v804 = vunpack.c.l.b16 %v346
      %v805 = vunpack.c.l.b16 %v347
      %v806 = vunpack.c.l.b16 %v348
      %v807 = vunpack.c.l.b16 %v349
      %v808 = vunpack.c.l.b16 %v350
      %v809 = vunpack.c.l.b16 %v351
      %v810 = vunpack.c.l.b16 %v352
      %v811 = vunpack.c.l.b16 %v353
      %v812 = vunpack.c.l.b16 %v354
      %v813 = vunpack.c.l.b16 %v355
      %v814 = vunpack.c.l.b16 %v356
      %v815 = vunpack.c.l.b16 %v357
      %v816 = vunpack.c.l.b16 %v358
      %v817 = vunpack.c.l.b16 %v359
      %v818 = vunpack.c.l.b16 %v360
      %v819 = vunpack.c.l.b16 %v361
      %v820 = vunpack.c.l.b16 %v362
      %v821 = vunpack.c.l.b16 %v363
      %v822 = vunpack.c.l.b16 %v364
      %v823 = vunpack.c.l.b16 %v365
      %v824 = vunpack.c.l.b16 %v366
      %v825 = vunpack.c.l.b16 %v367
      %v826 = vunpack.c.l.b16 %v368
      %v827 = vunpack.c.l.b16 %v369
      %v828 = vunpack.c.l.b16 %v370
      %v829 = vunpack.c.l.b16 %v371
      %v830 = vunpack.c.l.b16 %v372
      %v831 = vunpack.c.l.b16 %v373
      %v832 = vunpack.c.l.b16 %v374
      %v833 = vunpack.c.l.b16 %v375
      %v834 = vunpack.c.l.b16 %v376
      %v835 = vunpack.c.l.b16 %v377
      %v836 = vpack.c.b16 %v693, %v692
      %v837 = vpack.c.b16 %v695, %v694
      %v838 = vpack.c.b16 %v697, %v696
      %v839 = vpack.c.b16 %v699, %v698
      %v840 = vpack.c.b16 %v701, %v700
      %v841 = vpack.c.b16 %v703, %v702
      %v842 = vpack.c.b16 %v705, %v704
      %v843 = vpack.c.b16 %v707, %v706
      %v844 = vpack.c.b16 %v709, %v708
      %v845 = vpack.c.b16 %v711, %v710
      %v846 = vpack.c.b16 %v713, %v712
      %v847 = vpack.c.b16 %v715, %v714
      %v848 = vpack.c.b16 %v717, %v716
      %v849 = vpack.c.b16 %v719, %v718
      %v850 = vpack.c.b16 %v721, %v720
      %v851 = vpack.c.b16 %v723, %v722
      %v852 = vpack.c.b16 %v725, %v724
      %v853 = vpack.c.b16 %v727, %v726
      %v854 = vpack.c.b16 %v729, %v728
      %v855 = vpack.c.b16 %v731, %v730
      %v856 = vpack.c.b16 %v733, %v732
      %v857 = vpack.c.b16 %v735, %v734
      %v858 = vpack.c.b16 %v737, %v736
      %v859 = vpack.c.b16 %v739, %v738
      %v860 = vpack.c.b16 %v741, %v740
      %v861 = vpack.c.b16 %v743, %v742
      %v862 = vpack.c.b16 %v745, %v744
      %v863 = vpack.c.b16 %v747, %v746
      %v864 = vpack.c.b16 %v749, %v748
      %v865 = vpack.c.b16 %v751, %v750
      %v866 = vpack.c.b16 %v753, %v752
      %v867 = vpack.c.b16 %v755, %v754
      %v868 = vpack.c.b16 %v757, %v756
      %v869 = vpack.c.b16 %v759, %v758
      %v870 = vpack.c.b16 %v761, %v760
      %v871 = vpack.c.b16 %v763, %v762
      %v872 = vpack.c.b16 %v765, %v764
      %v873 = vpack.c.b16 %v767, %v766
      %v874 = vpack.c.b16 %v769, %v768
      %v875 = vpack.c.b16 %v771, %v770
      %v876 = vpack.c.b16 %v773, %v772
      %v877 = vpack.c.b16 %v775, %v774
      %v878 = vpack.c.b16 %v777, %v776
      %v879 = vpack.c.b16 %v779, %v778
      %v880 = vpack.c.b16 %v781, %v780
      %v881 = vpack.c.b16 %v783, %v782
      %v882 = vpack.c.b16 %v785, %v784
      %v883 = vpack.c.b16 %v787, %v786
      %v884 = vpack.c.b16 %v789, %v788
      %v885 = vpack.c.b16 %v791, %v790
      %v886 = vpack.c.b16 %v793, %v792
      %v887 = vpack.c.b16 %v795, %v794
      %v888 = vpack.c.b16 %v797, %v796
      %v889 = vpack.c.b16 %v799, %v798
      %v890 = vpack.c.b16 %v801, %v800
      %v891 = vpack.c.b16 %v803, %v802
      %v892 = vpack.c.b16 %v805, %v804
      %v893 = vpack.c.b16 %v807, %v806
      %v894 = vpack.c.b16 %v809, %v808
      %v895 = vpack.c.b16 %v811, %v810
      %v896 = vpack.c.b16 %v813, %v812
      %v897 = vpack.c.b16 %v815, %v814
      %v898 = vpack.c.b16 %v817, %v816
      %v899 = vpack.c.b16 %v819, %v818
      %v900 = vpack.c.b16 %v821, %v820
      %v901 = vpack.c.b16 %v823, %v822
      %v902 = vpack.c.b16 %v825, %v824
      %v903 = vpack.c.b16 %v827, %v826
      %v904 = vpack.c.b16 %v829, %v828
      %v905 = vpack.c.b16 %v831, %v830
      %v906 = vpack.c.b16 %v833, %v832
      %v907 = vpack.c.b16 %v835, %v834
      %980 = vmatprep.subr.bf16.mxu0 0
      %981 = vmatpush1.bf16.msra.mxu0 %v836
      %982 = vmatprep.subr.bf16.mxu0 0
      %983 = vmatpush1.bf16.msra.mxu0 %v837
      %984 = vmatprep.subr.bf16.mxu0 0
      %985 = vmatpush1.bf16.msra.mxu0 %v838
      %986 = vmatprep.subr.bf16.mxu0 0
      %987 = vmatpush1.bf16.msra.mxu0 %v839
      %988 = vmatprep.subr.bf16.mxu0 0
      %989 = vmatpush1.bf16.msra.mxu0 %v840
      %990 = vmatprep.subr.bf16.mxu0 0
      %991 = vmatpush1.bf16.msra.mxu0 %v841
      %992 = vmatprep.subr.bf16.mxu0 0
      %993 = vmatpush1.bf16.msra.mxu0 %v842
      %994 = vmatprep.subr.bf16.mxu0 0
      %995 = vmatpush1.bf16.msra.mxu0 %v843
      %996 = vmatprep.subr.bf16.mxu0 0
      %997 = vmatpush1.bf16.msra.mxu0 %v844
      %998 = vmatprep.subr.bf16.mxu0 0
      %999 = vmatpush1.bf16.msra.mxu0 %v845
      %1000 = vmatprep.subr.bf16.mxu0 0
      %1001 = vmatpush1.bf16.msra.mxu0 %v846
      %1002 = vmatprep.subr.bf16.mxu0 0
      %1003 = vmatpush1.bf16.msra.mxu0 %v847
      %1004 = vmatprep.subr.bf16.mxu0 0
      %1005 = vmatpush1.bf16.msra.mxu0 %v848
      %1006 = vmatprep.subr.bf16.mxu0 0
      %1007 = vmatpush1.bf16.msra.mxu0 %v849
      %1008 = vmatprep.subr.bf16.mxu0 0
      %1009 = vmatpush1.bf16.msra.mxu0 %v850
      %1010 = vmatprep.subr.bf16.mxu0 0
      %1011 = vmatpush1.bf16.msra.mxu0 %v851
      %1012 = vmatprep.mubr.bf16.mxu0 %v477
      %1013 = vmatmul.mubr.bf16.gmra.mrb[0].mxu0 %v476
      %v1014 = vpop.f32.mrb[0].mxu0
      %v1015 = vadd.f32 0.0, %v1014
      %v1016 = vpop.f32.mrb[0].mxu0
      %v1017 = vpop.f32.mrb[0].mxu0
      %v1018 = vadd.f32 0.0, %v1017
      %v1019 = vpop.f32.mrb[0].mxu0
      %1020 = vmatprep.mubr.bf16.mxu0 %v486
      %1021 = vmatmul.mubr.bf16.gmra.mrb[0].mxu0 %v485
      %v1022 = vpop.f32.mrb[0].mxu0
      %v1023 = vadd.f32 0.0, %v1022
      %v1024 = vpop.f32.mrb[0].mxu0
      %v1025 = vpop.f32.mrb[0].mxu0
      %v1026 = vadd.f32 0.0, %v1025
      %v1027 = vpop.f32.mrb[0].mxu0
      %1028 = vmatprep.mubr.bf16.mxu0 %v495
      %1029 = vmatmul.mubr.bf16.gmra.mrb[0].mxu0 %v494
      %v1030 = vpop.f32.mrb[0].mxu0
      %v1031 = vadd.f32 0.0, %v1030
      %v1032 = vpop.f32.mrb[0].mxu0
      %v1033 = vpop.f32.mrb[0].mxu0
      %v1034 = vadd.f32 0.0, %v1033
      %v1035 = vpop.f32.mrb[0].mxu0
      %1036 = vmatprep.mubr.bf16.mxu0 %v504
      %1037 = vmatmul.mubr.bf16.gmra.mrb[0].mxu0 %v503
      %v1038 = vpop.f32.mrb[0].mxu0
      %v1039 = vadd.f32 0.0, %v1038
      %v1040 = vpop.f32.mrb[0].mxu0
      %v1041 = vpop.f32.mrb[0].mxu0
      %v1042 = vpop.f32.mrb[0].mxu0
      %1043 = vdwg.mxu0
      %1044 = vmatprep.subr.bf16.mxu0 0
      %1045 = vmatpush1.bf16.msra.mxu0 %v852
      %1046 = vmatprep.subr.bf16.mxu0 0
      %1047 = vmatpush1.bf16.msra.mxu0 %v853
      %1048 = vmatprep.subr.bf16.mxu0 0
      %1049 = vmatpush1.bf16.msra.mxu0 %v854
      %1050 = vmatprep.subr.bf16.mxu0 0
      %1051 = vmatpush1.bf16.msra.mxu0 %v855
      %1052 = vmatprep.subr.bf16.mxu0 0
      %1053 = vmatpush1.bf16.msra.mxu0 %v856
      %1054 = vmatprep.subr.bf16.mxu0 0
      %1055 = vmatpush1.bf16.msra.mxu0 %v857
      %1056 = vmatprep.subr.bf16.mxu0 0
      %1057 = vmatpush1.bf16.msra.mxu0 %v858
      %1058 = vmatprep.subr.bf16.mxu0 0
      %1059 = vmatpush1.bf16.msra.mxu0 %v859
      %1060 = vmatprep.subr.bf16.mxu0 0
      %1061 = vmatpush1.bf16.msra.mxu0 %v860
      %1062 = vmatprep.subr.bf16.mxu0 0
      %1063 = vmatpush1.bf16.msra.mxu0 %v861
      %1064 = vmatprep.subr.bf16.mxu0 0
      %1065 = vmatpush1.bf16.msra.mxu0 %v862
      %1066 = vmatprep.subr.bf16.mxu0 0
      %1067 = vmatpush1.bf16.msra.mxu0 %v863
      %1068 = vmatprep.subr.bf16.mxu0 0
      %1069 = vmatpush1.bf16.msra.mxu0 %v864
      %1070 = vmatprep.subr.bf16.mxu0 0
      %1071 = vmatpush1.bf16.msra.mxu0 %v865
      %1072 = vmatprep.subr.bf16.mxu0 0
      %1073 = vmatpush1.bf16.msra.mxu0 %v866
      %1074 = vmatprep.subr.bf16.mxu0 0
      %1075 = vmatpush1.bf16.msra.mxu0 %v867
      %1076 = vmatprep.mubr.bf16.mxu0 %v479
      %1077 = vmatmul.mubr.bf16.gmra.mrb[0].mxu0 %v478
      %v1078 = vpop.f32.mrb[0].mxu0
      %v1079 = vadd.f32 %v1015, %v1078
      %v1080 = vpop.f32.mrb[0].mxu0
      %v1081 = vpop.f32.mrb[0].mxu0
      %v1082 = vadd.f32 %v1018, %v1081
      %v1083 = vpop.f32.mrb[0].mxu0
      %1084 = vmatprep.mubr.bf16.mxu0 %v488
      %1085 = vmatmul.mubr.bf16.gmra.mrb[0].mxu0 %v487
      %v1086 = vpop.f32.mrb[0].mxu0
      %v1087 = vadd.f32 %v1023, %v1086
      %v1088 = vpop.f32.mrb[0].mxu0
      %v1089 = vpop.f32.mrb[0].mxu0
      %v1090 = vadd.f32 %v1026, %v1089
      %v1091 = vpop.f32.mrb[0].mxu0
      %1092 = vmatprep.mubr.bf16.mxu0 %v497
      %1093 = vmatmul.mubr.bf16.gmra.mrb[0].mxu0 %v496
      %v1094 = vpop.f32.mrb[0].mxu0
      %v1095 = vadd.f32 %v1031, %v1094
      %v1096 = vpop.f32.mrb[0].mxu0
      %v1097 = vpop.f32.mrb[0].mxu0
      %v1098 = vadd.f32 %v1034, %v1097
      %v1099 = vpop.f32.mrb[0].mxu0
      %1100 = vmatprep.mubr.bf16.mxu0 %v506
      %1101 = vmatmul.mubr.bf16.gmra.mrb[0].mxu0 %v505
      %v1102 = vpop.f32.mrb[0].mxu0
      %v1103 = vadd.f32 %v1039, %v1102
      %v1104 = vpop.f32.mrb[0].mxu0
      %v1105 = vpop.f32.mrb[0].mxu0
      %v1106 = vpop.f32.mrb[0].mxu0
      %1107 = vdwg.mxu0
      %1108 = vmatprep.subr.bf16.mxu0 0
      %1109 = vmatpush1.bf16.msra.mxu0 %v868
      %1110 = vmatprep.subr.bf16.mxu0 0
      %1111 = vmatpush1.bf16.msra.mxu0 %v869
      %1112 = vmatprep.subr.bf16.mxu0 0
      %1113 = vmatpush1.bf16.msra.mxu0 %v870
      %1114 = vmatprep.subr.bf16.mxu0 0
      %1115 = vmatpush1.bf16.msra.mxu0 %v871
      %1116 = vmatprep.subr.bf16.mxu0 0
      %1117 = vmatpush1.bf16.msra.mxu0 %v872
      %1118 = vmatprep.subr.bf16.mxu0 0
      %1119 = vmatpush1.bf16.msra.mxu0 %v873
      %1120 = vmatprep.subr.bf16.mxu0 0
      %1121 = vmatpush1.bf16.msra.mxu0 %v874
      %1122 = vmatprep.subr.bf16.mxu0 0
      %1123 = vmatpush1.bf16.msra.mxu0 %v875
      %1124 = vmatprep.subr.bf16.mxu0 0
      %1125 = vmatpush1.bf16.msra.mxu0 %v876
      %1126 = vmatprep.subr.bf16.mxu0 0
      %1127 = vmatpush1.bf16.msra.mxu0 %v877
      %1128 = vmatprep.subr.bf16.mxu0 0
      %1129 = vmatpush1.bf16.msra.mxu0 %v878
      %1130 = vmatprep.subr.bf16.mxu0 0
      %1131 = vmatpush1.bf16.msra.mxu0 %v879
      %1132 = vmatprep.subr.bf16.mxu0 0
      %1133 = vmatpush1.bf16.msra.mxu0 %v880
      %1134 = vmatprep.subr.bf16.mxu0 0
      %1135 = vmatpush1.bf16.msra.mxu0 %v881
      %1136 = vmatprep.subr.bf16.mxu0 0
      %1137 = vmatpush1.bf16.msra.mxu0 %v882
      %1138 = vmatprep.subr.bf16.mxu0 0
      %1139 = vmatpush1.bf16.msra.mxu0 %v883
      %1140 = vmatprep.mubr.bf16.mxu0 %v481
      %1141 = vmatmul.mubr.bf16.gmra.mrb[0].mxu0 %v480
      %v1142 = vpop.f32.mrb[0].mxu0
      %v1143 = vadd.f32 %v1079, %v1142
      %v1144 = vpop.f32.mrb[0].mxu0
      %v1145 = vpop.f32.mrb[0].mxu0
      %v1146 = vadd.f32 %v1082, %v1145
      %v1147 = vpop.f32.mrb[0].mxu0
      %1148 = vmatprep.mubr.bf16.mxu0 %v490
      %1149 = vmatmul.mubr.bf16.gmra.mrb[0].mxu0 %v489
      %v1150 = vpop.f32.mrb[0].mxu0
      %v1151 = vadd.f32 %v1087, %v1150
      %v1152 = vpop.f32.mrb[0].mxu0
      %v1153 = vpop.f32.mrb[0].mxu0
      %v1154 = vadd.f32 %v1090, %v1153
      %v1155 = vpop.f32.mrb[0].mxu0
      %1156 = vmatprep.mubr.bf16.mxu0 %v499
      %1157 = vmatmul.mubr.bf16.gmra.mrb[0].mxu0 %v498
      %v1158 = vpop.f32.mrb[0].mxu0
      %v1159 = vadd.f32 %v1095, %v1158
      %v1160 = vpop.f32.mrb[0].mxu0
      %v1161 = vpop.f32.mrb[0].mxu0
      %v1162 = vadd.f32 %v1098, %v1161
      %v1163 = vpop.f32.mrb[0].mxu0
      %1164 = vmatprep.mubr.bf16.mxu0 %v508
      %1165 = vmatmul.mubr.bf16.gmra.mrb[0].mxu0 %v507
      %v1166 = vpop.f32.mrb[0].mxu0
      %v1167 = vadd.f32 %v1103, %v1166
      %v1168 = vpop.f32.mrb[0].mxu0
      %v1169 = vpop.f32.mrb[0].mxu0
      %v1170 = vpop.f32.mrb[0].mxu0
      %1171 = vdwg.mxu0
      %1172 = vmatprep.subr.bf16.mxu0 0
      %1173 = vmatpush1.bf16.msra.mxu0 %v884
      %1174 = vmatprep.subr.bf16.mxu0 0
      %1175 = vmatpush1.bf16.msra.mxu0 %v885
      %1176 = vmatprep.subr.bf16.mxu0 0
      %1177 = vmatpush1.bf16.msra.mxu0 %v886
      %1178 = vmatprep.subr.bf16.mxu0 0
      %1179 = vmatpush1.bf16.msra.mxu0 %v887
      %1180 = vmatprep.subr.bf16.mxu0 0
      %1181 = vmatpush1.bf16.msra.mxu0 %v888
      %1182 = vmatprep.subr.bf16.mxu0 0
      %1183 = vmatpush1.bf16.msra.mxu0 %v889
      %1184 = vmatprep.subr.bf16.mxu0 0
      %1185 = vmatpush1.bf16.msra.mxu0 %v890
      %1186 = vmatprep.subr.bf16.mxu0 0
      %1187 = vmatpush1.bf16.msra.mxu0 %v891
      %1188 = vmatprep.subr.bf16.mxu0 0
      %1189 = vmatpush1.bf16.msra.mxu0 %v892
      %1190 = vmatprep.subr.bf16.mxu0 0
      %1191 = vmatpush1.bf16.msra.mxu0 %v893
      %1192 = vmatprep.subr.bf16.mxu0 0
      %1193 = vmatpush1.bf16.msra.mxu0 %v894
      %1194 = vmatprep.subr.bf16.mxu0 0
      %1195 = vmatpush1.bf16.msra.mxu0 %v895
      %1196 = vmatprep.subr.bf16.mxu0 0
      %1197 = vmatpush1.bf16.msra.mxu0 %v896
      %1198 = vmatprep.subr.bf16.mxu0 0
      %1199 = vmatpush1.bf16.msra.mxu0 %v897
      %1200 = vmatprep.subr.bf16.mxu0 0
      %1201 = vmatpush1.bf16.msra.mxu0 %v898
      %1202 = vmatprep.subr.bf16.mxu0 0
      %1203 = vmatpush1.bf16.msra.mxu0 %v899
      %1204 = vmatprep.mubr.bf16.mxu0 %v483
      %1205 = vmatmul.mubr.bf16.gmra.mrb[0].mxu0 %v482
      %v1206 = vpop.f32.mrb[0].mxu0
      %v1207 = vadd.f32 %v1143, %v1206
      %v1208 = vpop.f32.mrb[0].mxu0
      %v1209 = vpop.f32.mrb[0].mxu0
      %v1210 = vadd.f32 %v1146, %v1209
      %v1211 = vpop.f32.mrb[0].mxu0
      %1212 = vmatprep.mubr.bf16.mxu0 %v492
      %1213 = vmatmul.mubr.bf16.gmra.mrb[0].mxu0 %v491
      %v1214 = vpop.f32.mrb[0].mxu0
      %v1215 = vadd.f32 %v1151, %v1214
      %v1216 = vpop.f32.mrb[0].mxu0
      %v1217 = vpop.f32.mrb[0].mxu0
      %v1218 = vadd.f32 %v1154, %v1217
      %v1219 = vpop.f32.mrb[0].mxu0
      %1220 = vmatprep.mubr.bf16.mxu0 %v501
      %1221 = vmatmul.mubr.bf16.gmra.mrb[0].mxu0 %v500
      %v1222 = vpop.f32.mrb[0].mxu0
      %v1223 = vadd.f32 %v1159, %v1222
      %v1224 = vpop.f32.mrb[0].mxu0
      %v1225 = vpop.f32.mrb[0].mxu0
      %v1226 = vadd.f32 %v1162, %v1225
      %v1227 = vpop.f32.mrb[0].mxu0
      %1228 = vmatprep.mubr.bf16.mxu0 %v510
      %1229 = vmatmul.mubr.bf16.gmra.mrb[0].mxu0 %v509
      %v1230 = vpop.f32.mrb[0].mxu0
      %v1231 = vadd.f32 %v1167, %v1230
      %v1232 = vpop.f32.mrb[0].mxu0
      %v1233 = vpop.f32.mrb[0].mxu0
      %v1234 = vpop.f32.mrb[0].mxu0
      %1235 = vdwg.mxu0
      %1236 = vmatprep.subr.bf16.mxu0 0
      %1237 = vmatpush1.bf16.msra.mxu0 %v900
      %1238 = vmatprep.subr.bf16.mxu0 0
      %1239 = vmatpush1.bf16.msra.mxu0 %v901
      %1240 = vmatprep.subr.bf16.mxu0 0
      %1241 = vmatpush1.bf16.msra.mxu0 %v902
      %1242 = vmatprep.subr.bf16.mxu0 0
      %1243 = vmatpush1.bf16.msra.mxu0 %v903
      %1244 = vmatprep.subr.bf16.mxu0 0
      %1245 = vmatpush1.bf16.msra.mxu0 %v904
      %1246 = vmatprep.subr.bf16.mxu0 0
      %1247 = vmatpush1.bf16.msra.mxu0 %v905
      %1248 = vmatprep.subr.bf16.mxu0 0
      %1249 = vmatpush1.bf16.msra.mxu0 %v906
      %1250 = vmatprep.subr.bf16.mxu0 0
      %1251 = vmatpush1.bf16.msra.mxu0 %v907
      %1252 = vmatprep.subr.bf16.mxu0 0
      %1253 = vmatpush1.bf16.msra.mxu0 0
      %1254 = vmatprep.subr.bf16.mxu0 0
      %1255 = vmatpush1.bf16.msra.mxu0 0
      %1256 = vmatprep.subr.bf16.mxu0 0
      %1257 = vmatpush1.bf16.msra.mxu0 0
      %1258 = vmatprep.subr.bf16.mxu0 0
      %1259 = vmatpush1.bf16.msra.mxu0 0
      %1260 = vmatprep.subr.bf16.mxu0 0
      %1261 = vmatpush1.bf16.msra.mxu0 0
      %1262 = vmatprep.subr.bf16.mxu0 0
      %1263 = vmatpush1.bf16.msra.mxu0 0
      %1264 = vmatprep.subr.bf16.mxu0 0
      %1265 = vmatpush1.bf16.msra.mxu0 0
      %1266 = vmatprep.subr.bf16.mxu0 0
      %1267 = vmatpush1.bf16.msra.mxu0 0
      %1268 = vmatprep.mubr.bf16.mxu0 0
      %1269 = vmatmul.mubr.bf16.gmra.mrb[0].mxu0 %v484
      %v1270 = vpop.f32.mrb[0].mxu0
      %v1271 = vadd.f32 %v1207, %v1270
      %v1272 = vpop.f32.mrb[0].mxu0
      %v1273 = vpop.f32.mrb[0].mxu0
      %v1274 = vadd.f32 %v1210, %v1273
      %v1275 = vpop.f32.mrb[0].mxu0
      %1276 = vmatprep.mubr.bf16.mxu0 0
      %1277 = vmatmul.mubr.bf16.gmra.mrb[0].mxu0 %v493
      %v1278 = vpop.f32.mrb[0].mxu0
      %v1279 = vadd.f32 %v1215, %v1278
      %v1280 = vpop.f32.mrb[0].mxu0
      %v1281 = vpop.f32.mrb[0].mxu0
      %v1282 = vadd.f32 %v1218, %v1281
      %v1283 = vpop.f32.mrb[0].mxu0
      %1284 = vmatprep.mubr.bf16.mxu0 0
      %1285 = vmatmul.mubr.bf16.gmra.mrb[0].mxu0 %v502
      %v1286 = vpop.f32.mrb[0].mxu0
      %v1287 = vadd.f32 %v1223, %v1286
      %v1288 = vpop.f32.mrb[0].mxu0
      %v1289 = vpop.f32.mrb[0].mxu0
      %v1290 = vadd.f32 %v1226, %v1289
      %v1291 = vpop.f32.mrb[0].mxu0
      %1292 = vmatprep.mubr.bf16.mxu0 0
      %1293 = vmatmul.mubr.bf16.gmra.mrb[0].mxu0 %v511
      %v1294 = vpop.f32.mrb[0].mxu0
      %v1295 = vadd.f32 %v1231, %v1294
      %v1296 = vpop.f32.mrb[0].mxu0
      %v1297 = vpop.f32.mrb[0].mxu0
      %v1298 = vpop.f32.mrb[0].mxu0
      %1299 = vdwg.mxu0
      %v1300 = vadd.f32 %v1271, %v1274
      %v1301 = vadd.f32 %v1300, %v1279
      %v1302 = vadd.f32 %v1301, %v1282
      %v1303 = vadd.f32 %v1302, %v1287
      %v1304 = vadd.f32 %v1303, %v1290
      %vm1305 = vcmask 1041408
      %v1306 = vsel %vm1305, %v1295, 0.0
      %v1307 = vadd.f32 %v1304, %v1306
      %v1308 = vrot.slane %v1307, 4
      %v1309 = vadd.f32 %v1307, %v1308
      %v1310 = vrot.slane %v1309, 2
      %v1311 = vadd.f32 %v1309, %v1310
      %v1312 = vrot.slane %v1311, 1
      %v1313 = vadd.f32 %v1311, %v1312
      %v1314 = vrcp.pop 50.0
      %v1315 = vmul.f32 %v1313, %v1314
      %v1316 = vsub.f32 %v1271, %v1315
      %v1317 = vsub.f32 %v1274, %v1315
      %v1318 = vsub.f32 %v1279, %v1315
      %v1319 = vsub.f32 %v1282, %v1315
      %v1320 = vsub.f32 %v1287, %v1315
      %v1321 = vsub.f32 %v1290, %v1315
      %v1322 = vsub.f32 %v1295, %v1315
      %v1323 = vmul.f32 %v1316, %v1316
      %v1324 = vmul.f32 %v1317, %v1317
      %v1325 = vmul.f32 %v1318, %v1318
      %v1326 = vmul.f32 %v1319, %v1319
      %v1327 = vmul.f32 %v1320, %v1320
      %v1328 = vmul.f32 %v1321, %v1321
      %v1329 = vmul.f32 %v1322, %v1322
      %v1330 = vadd.f32 %v1323, %v1324
      %v1331 = vadd.f32 %v1330, %v1325
      %v1332 = vadd.f32 %v1331, %v1326
      %v1333 = vadd.f32 %v1332, %v1327
      %v1334 = vadd.f32 %v1333, %v1328
      %v1335 = vsel %vm1305, %v1329, 0.0
      %v1336 = vadd.f32 %v1334, %v1335
      %v1337 = vrot.slane %v1336, 4
      %v1338 = vadd.f32 %v1336, %v1337
      %v1339 = vrot.slane %v1338, 2
      %v1340 = vadd.f32 %v1338, %v1339
      %v1341 = vrot.slane %v1340, 1
      %v1342 = vadd.f32 %v1340, %v1341
      %v1343 = vmul.f32 %v1342, %v1314
      %v1344 = vadd.f32 %v1343, 1e-05
      %v1345 = vrsqrt.pop %v1344
      %v1346 = vmul.f32 %v1316, %v1345
      %v1347 = vmul.f32 %v1317, %v1345
      %v1348 = vmul.f32 %v1318, %v1345
      %v1349 = vmul.f32 %v1319, %v1345
      %v1350 = vmul.f32 %v1320, %v1345
      %v1351 = vmul.f32 %v1321, %v1345
      %v1352 = vmul.f32 %v1322, %v1345
      %v1353 = vld [vmem:[%s2] sm:$0x1]
      %v1355 = vlaneseq
      %v1356 = vshrl.u32 %v1355, 7
      %v1357 = vsub.s32 0, %v1356
      %v1358 = vrot.slane %v1353, %v1357
      %v1360 = vmul.f32 %v1346, %v1358
      %v1361 = vmul.f32 %v1347, %v1358
      %v1362 = vmul.f32 %v1348, %v1358
      %v1363 = vmul.f32 %v1349, %v1358
      %v1364 = vmul.f32 %v1350, %v1358
      %v1365 = vmul.f32 %v1351, %v1358
      %v1366 = vmul.f32 %v1352, %v1358
      %v1367 = vld [vmem:[%s3] sm:$0x1]
      %v1369 = vlaneseq
      %v1370 = vshrl.u32 %v1369, 7
      %v1371 = vsub.s32 0, %v1370
      %v1372 = vrot.slane %v1367, %v1371
      %v1374 = vadd.f32 %v1360, %v1372
      %v1375 = vadd.f32 %v1361, %v1372
      %v1376 = vadd.f32 %v1362, %v1372
      %v1377 = vadd.f32 %v1363, %v1372
      %v1378 = vadd.f32 %v1364, %v1372
      %v1379 = vadd.f32 %v1365, %v1372
      %v1380 = vadd.f32 %v1366, %v1372
      %vm1381 = vcmp.gt.f32.partialorder %v1374, 0.0
      %vm1382 = vcmp.gt.f32.partialorder %v1375, 0.0
      %vm1383 = vcmp.gt.f32.partialorder %v1376, 0.0
      %vm1384 = vcmp.gt.f32.partialorder %v1377, 0.0
      %vm1385 = vcmp.gt.f32.partialorder %v1378, 0.0
      %vm1386 = vcmp.gt.f32.partialorder %v1379, 0.0
      %vm1387 = vcmp.gt.f32.partialorder %v1380, 0.0
      %v1388 = vmul.f32 %v1374, 0.01
      %v1389 = vmul.f32 %v1375, 0.01
      %v1390 = vmul.f32 %v1376, 0.01
      %v1391 = vmul.f32 %v1377, 0.01
      %v1392 = vmul.f32 %v1378, 0.01
      %v1393 = vmul.f32 %v1379, 0.01
      %v1394 = vmul.f32 %v1380, 0.01
      %v1395 = vsel %vm1381, %v1374, %v1388
      %v1396 = vsel %vm1382, %v1375, %v1389
      %v1397 = vsel %vm1383, %v1376, %v1390
      %v1398 = vsel %vm1384, %v1377, %v1391
      %v1399 = vsel %vm1385, %v1378, %v1392
      %v1400 = vsel %vm1386, %v1379, %v1393
      %v1401 = vsel %vm1387, %v1380, %v1394
      %v1402 = vpack.c.bf16 %v1396, %v1395
      %v1403 = vpack.c.bf16 %v1398, %v1397
      %v1404 = vpack.c.bf16 %v1400, %v1399
      %v1405 = vpack.c.bf16 %v1401, %v1401
      %v1410 = vunpack.c.l.b16 %v1402
      %v1411 = vunpack.c.h.b16 %v1402
      %v1412 = vunpack.c.l.b16 %v1403
      %v1413 = vunpack.c.h.b16 %v1403
      %v1414 = vunpack.c.l.b16 %v1404
      %v1415 = vunpack.c.h.b16 %v1404
      %v1416 = vunpack.c.l.b16 %v1405
      %v1417 = vpack.c.b16 %v1410, %v1410
      %v1418 = vpack.c.b16 %v1411, %v1411
      %v1419 = vpack.c.b16 %v1412, %v1412
      %v1420 = vpack.c.b16 %v1413, %v1413
      %v1421 = vpack.c.b16 %v1414, %v1414
      %v1422 = vpack.c.b16 %v1415, %v1415
      %v1423 = vpack.c.b16 %v1416, %v1416
      %1431 = vst [vmem:[%s197] sm:$0xf] %v1417
      %1432 = vst [vmem:[%s197 + $0x4] sm:$0xf] %v1418
      %1433 = vst [vmem:[%s197 + $0x8] sm:$0xf] %v1419
      %1434 = vst [vmem:[%s197 + $0xc] sm:$0xf] %v1420
      %1435 = vst [vmem:[%s197 + $0x10] sm:$0xf] %v1421
      %1436 = vst [vmem:[%s197 + $0x14] sm:$0xf] %v1422
      %1437 = vst [vmem:[%s197 + $0x18] sm:$0x1] %v1423
      %p1438 = scmp.lt.s32.totalorder %s15, 1
      %s1439 = scalar_select %p1438, %s15, 1
      %s1440 = smul.addr %s1439, 7
      %s1441 = smul.addr %s1440, 4
      %s1442 = scalar_lea.vmem %s4, %s1441
      // Predicated region
      $region37: #{el_paro_net_bigger.6} parent=35 // pred_check
        %p1443 = pneg %p122
      $region38: #{el_paro_net_bigger.6} parent=35 // pred_check_branch
        %1445 = sbr.rel (%p1443) target = $region40
      $region39: #{el_paro_net_bigger.6} parent=35 // pred_region
        _
      $region40: #{el_paro_net_bigger.6} parent=35 // pred_fallthru
        _
    $region36: #{el_paro_net_bigger.6} parent=5 // pred_fallthru
      _
    %p1446 = scmp.le.s32.totalorder 2, %s10
    // Predicated region
    $region41: #{el_paro_net_bigger.6} parent=5 // pred_check
      %p1447 = pneg %p1446
    $region42: #{el_paro_net_bigger.6} parent=5 // pred_check_branch
      %1449 = sbr.rel (%p1447) target = $region44
    $region43: #{el_paro_net_bigger.6} parent=5 // pred_region
      %s1450 = ssub.s32 %s10, 2
      // Predicated region
      $region45: #{el_paro_net_bigger.6} parent=43 // pred_check
        %p1451 = pneg %p128
      $region46: #{el_paro_net_bigger.6} parent=43 // pred_check_branch
        %1453 = sbr.rel (%p1451) target = $region48
      $region47: #{el_paro_net_bigger.6} parent=43 // pred_region
        %p1454 = scmp.lt.s32.totalorder %s16, 1
        %s1455 = scalar_select %p1454, %s16, 1
        %s1456 = smul.addr %s1455, 7
        %s1457 = smul.addr %s1456, 4
        %s1458 = scalar_lea.vmem %s4, %s1457
      $region48: #{el_paro_net_bigger.6} parent=43 // pred_fallthru
        _
    $region44: #{el_paro_net_bigger.6} parent=5 // pred_fallthru
      _
  $region6: #{el_paro_net_bigger.6} parent=0 // loop_footer
    %s14 = sadd.s32 1, %s10
  $region7: #{el_paro_net_bigger.6} parent=0 // loop_footer_branch
    %9 = sbr.rel target = $region3
  $region8: #{el_paro_net_bigger.6} parent=0 // loop_exit
    _

// kernel: el_paro_net_bigger.7
$region0: #{el_paro_net_bigger.7}
  #allocation0 [shape = 'u32[]', space=smem, size = 0x4, offset = 0x4, fixed_abs, tag = 'smem constant byte address 0x4 - core index']
  #allocation1 [shape = 'u32[144,128]{1,0:T(1,128)}', space=vmem, size = 0x12000, scoped, tag = 'internal scratch']
  %s0 = inlined_call_operand.vmem [shape: bf16[2,18,1152], index: 0, kind: input, shape index: {}]
  %s1 = inlined_call_operand.vmem [shape: bf16[1152,128], index: 1, kind: input, shape index: {}]
  %s2 = inlined_call_operand.vmem [shape: f32[1,128], index: 2, kind: input, shape index: {}]
  %s3 = inlined_call_operand.vmem [shape: f32[1,128], index: 3, kind: input, shape index: {}]
  %s4 = inlined_call_operand.vmem [shape: bf16[2,18,128], index: 4, kind: output, shape index: {}]
  %s5 = sld [smem:[#allocation0]]
  $region49: #{el_paro_net_bigger.7} parent=0
    _
  %s7 = ssub.s32 1, %s5
  %s8 = scalar_select 0, %s7, %s5
  loop: start=0, step=1, limit=4
  $region2: #{el_paro_net_bigger.7} parent=0 // loop_pre_header
    _
  $region3: #{el_paro_net_bigger.7} parent=0 // loop_header
    %s10 = sphi 0, %s14
    %p11 = scmp.ge.s32.totalorder %s10, 4
    %s20 = sphi 0, %s22
    %s23 = sphi 0, %s20
    %s24 = sphi 0, %s23
    %s40 = sphi 0, %s24
    %s44 = sphi 0, %s44
    %s46 = sphi 0, %s44
    %s47 = sphi 0, %s46
    %s61 = sphi 0, %s47
    %s65 = sphi 0, %s65
    %s67 = sphi 0, %s65
    %s68 = sphi 0, %s67
    %s82 = sphi 0, %s68
    %s86 = sphi 0, %s86
    %s88 = sphi 0, %s86
    %s89 = sphi 0, %s88
    %s103 = sphi 0, %s89
    %s109 = sphi 0, %s111
    %s112 = sphi 0, %s109
    %s113 = sphi 0, %s112
    %s129 = sphi 0, %s113
  $region4: #{el_paro_net_bigger.7} parent=0 // loop_header_branch
    %13 = sbr.rel (%p11) target = $region8
  $region5: #{el_paro_net_bigger.7} parent=0 // loop_body
    %s15 = ssub.s32 %s10, 1
    %s16 = ssub.s32 %s10, 2
    %s17 = sadd.s32 %s10, 1
    %s18 = ssub.s32 %s10, %s17
    %p19 = scmp.eq.s32.totalorder %s18, 0
    %s21 = sadd.s32 %s20, 1
    %s22 = scalar_select %p19, %s20, %s21
    %p25 = pneg %p19
    %p26 = scmp.eq.s32.totalorder %s10, 1
    %p27 = por %p25, %p26
    %p28 = scmp.ne.s32.totalorder %s20, %s23
    %p29 = scmp.eq.s32.totalorder %s10, 0
    %p30 = por %p28, %p29
    %p31 = scmp.ne.s32.totalorder %s20, %s23
    %p32 = scmp.eq.s32.totalorder %s15, 1
    %p33 = por %p31, %p32
    %p34 = scmp.ne.s32.totalorder %s23, %s24
    %p35 = scmp.eq.s32.totalorder %s15, 0
    %p36 = por %p34, %p35
    %p37 = scmp.ne.s32.totalorder %s23, %s24
    %p38 = scmp.eq.s32.totalorder %s16, 1
    %p39 = por %p37, %p38
    %p41 = scmp.ne.s32.totalorder %s24, %s40
    %p42 = scmp.eq.s32.totalorder %s16, 0
    %p43 = por %p41, %p42
    %s45 = sadd.s32 %s44, 1
    %p48 = scmp.eq.s32.totalorder %s10, 1
    %p49 = scmp.ne.s32.totalorder %s44, %s46
    %p50 = scmp.eq.s32.totalorder %s10, 0
    %p51 = por %p49, %p50
    %p52 = scmp.ne.s32.totalorder %s44, %s46
    %p53 = scmp.eq.s32.totalorder %s15, 1
    %p54 = por %p52, %p53
    %p55 = scmp.ne.s32.totalorder %s46, %s47
    %p56 = scmp.eq.s32.totalorder %s15, 0
    %p57 = por %p55, %p56
    %p58 = scmp.ne.s32.totalorder %s46, %s47
    %p59 = scmp.eq.s32.totalorder %s16, 1
    %p60 = por %p58, %p59
    %p62 = scmp.ne.s32.totalorder %s47, %s61
    %p63 = scmp.eq.s32.totalorder %s16, 0
    %p64 = por %p62, %p63
    %s66 = sadd.s32 %s65, 1
    %p69 = scmp.eq.s32.totalorder %s10, 1
    %p70 = scmp.ne.s32.totalorder %s65, %s67
    %p71 = scmp.eq.s32.totalorder %s10, 0
    %p72 = por %p70, %p71
    %p73 = scmp.ne.s32.totalorder %s65, %s67
    %p74 = scmp.eq.s32.totalorder %s15, 1
    %p75 = por %p73, %p74
    %p76 = scmp.ne.s32.totalorder %s67, %s68
    %p77 = scmp.eq.s32.totalorder %s15, 0
    %p78 = por %p76, %p77
    %p79 = scmp.ne.s32.totalorder %s67, %s68
    %p80 = scmp.eq.s32.totalorder %s16, 1
    %p81 = por %p79, %p80
    %p83 = scmp.ne.s32.totalorder %s68, %s82
    %p84 = scmp.eq.s32.totalorder %s16, 0
    %p85 = por %p83, %p84
    %s87 = sadd.s32 %s86, 1
    %p90 = scmp.eq.s32.totalorder %s10, 1
    %p91 = scmp.ne.s32.totalorder %s86, %s88
    %p92 = scmp.eq.s32.totalorder %s10, 0
    %p93 = por %p91, %p92
    %p94 = scmp.ne.s32.totalorder %s86, %s88
    %p95 = scmp.eq.s32.totalorder %s15, 1
    %p96 = por %p94, %p95
    %p97 = scmp.ne.s32.totalorder %s88, %s89
    %p98 = scmp.eq.s32.totalorder %s15, 0
    %p99 = por %p97, %p98
    %p100 = scmp.ne.s32.totalorder %s88, %s89
    %p101 = scmp.eq.s32.totalorder %s16, 1
    %p102 = por %p100, %p101
    %p104 = scmp.ne.s32.totalorder %s89, %s103
    %p105 = scmp.eq.s32.totalorder %s16, 0
    %p106 = por %p104, %p105
    %s107 = ssub.s32 %s10, %s17
    %p108 = scmp.eq.s32.totalorder %s107, 0
    %s110 = sadd.s32 %s109, 1
    %s111 = scalar_select %p108, %s109, %s110
    %p114 = pneg %p108
    %p115 = scmp.eq.s32.totalorder %s10, 1
    %p116 = por %p114, %p115
    %p117 = scmp.ne.s32.totalorder %s109, %s112
    %p118 = scmp.eq.s32.totalorder %s10, 0
    %p119 = por %p117, %p118
    %p120 = scmp.ne.s32.totalorder %s109, %s112
    %p121 = scmp.eq.s32.totalorder %s15, 1
    %p122 = por %p120, %p121
    %p123 = scmp.ne.s32.totalorder %s112, %s113
    %p124 = scmp.eq.s32.totalorder %s15, 0
    %p125 = por %p123, %p124
    %p126 = scmp.ne.s32.totalorder %s112, %s113
    %p127 = scmp.eq.s32.totalorder %s16, 1
    %p128 = por %p126, %p127
    %p130 = scmp.ne.s32.totalorder %s113, %s129
    %p131 = scmp.eq.s32.totalorder %s16, 0
    %p132 = por %p130, %p131
    %p133 = scmp.le.s32.totalorder 1, %s10
    %p134 = scmp.lt.s32.totalorder %s10, 3
    %p135 = pnand %p133, %p134
    %p136 = pneg %p135
    // Predicated region
    $region9: #{el_paro_net_bigger.7} parent=5 // pred_check
      _
    $region10: #{el_paro_net_bigger.7} parent=5 // pred_check_branch
      %138 = sbr.rel (%p135) target = $region12
    $region11: #{el_paro_net_bigger.7} parent=5 // pred_region
      %s139 = ssub.s32 %s10, 1
      // Predicated region
      $region13: #{el_paro_net_bigger.7} parent=11 // pred_check
        %p140 = pneg %p57
      $region14: #{el_paro_net_bigger.7} parent=11 // pred_check_branch
        %142 = sbr.rel (%p140) target = $region16
      $region15: #{el_paro_net_bigger.7} parent=11 // pred_region
        _
      $region16: #{el_paro_net_bigger.7} parent=11 // pred_fallthru
        _
      // Predicated region
      $region17: #{el_paro_net_bigger.7} parent=11 // pred_check
        %p143 = pneg %p78
      $region18: #{el_paro_net_bigger.7} parent=11 // pred_check_branch
        %145 = sbr.rel (%p143) target = $region20
      $region19: #{el_paro_net_bigger.7} parent=11 // pred_region
        _
      $region20: #{el_paro_net_bigger.7} parent=11 // pred_fallthru
        _
      // Predicated region
      $region21: #{el_paro_net_bigger.7} parent=11 // pred_check
        %p146 = pneg %p99
      $region22: #{el_paro_net_bigger.7} parent=11 // pred_check_branch
        %148 = sbr.rel (%p146) target = $region24
      $region23: #{el_paro_net_bigger.7} parent=11 // pred_region
        _
      $region24: #{el_paro_net_bigger.7} parent=11 // pred_fallthru
        _
    $region12: #{el_paro_net_bigger.7} parent=5 // pred_fallthru
      _
    %p149 = scmp.lt.s32.totalorder %s10, 2
    // Predicated region
    $region25: #{el_paro_net_bigger.7} parent=5 // pred_check
      %p150 = pneg %p149
    $region26: #{el_paro_net_bigger.7} parent=5 // pred_check_branch
      %152 = sbr.rel (%p150) target = $region28
    $region27: #{el_paro_net_bigger.7} parent=5 // pred_region
      // Predicated region
      $region29: #{el_paro_net_bigger.7} parent=27 // pred_check
        %p153 = pneg %p30
      $region30: #{el_paro_net_bigger.7} parent=27 // pred_check_branch
        %155 = sbr.rel (%p153) target = $region32
      $region31: #{el_paro_net_bigger.7} parent=27 // pred_region
        %p156 = scmp.lt.s32.totalorder %s10, 1
        %s157 = scalar_select %p156, %s10, 1
        %s158 = smul.addr %s157, 27
        %s159 = smul.addr %s158, 4
        %s160 = scalar_lea.vmem %s0, %s159
      $region32: #{el_paro_net_bigger.7} parent=27 // pred_fallthru
        _
    $region28: #{el_paro_net_bigger.7} parent=5 // pred_fallthru
      _
    %p161 = scmp.le.s32.totalorder 1, %s10
    %p162 = scmp.lt.s32.totalorder %s10, 3
    %p163 = pnand %p161, %p162
    %p164 = pneg %p163
    // Predicated region
    $region33: #{el_paro_net_bigger.7} parent=5 // pred_check
      _
    $region34: #{el_paro_net_bigger.7} parent=5 // pred_check_branch
      %166 = sbr.rel (%p163) target = $region36
    $region35: #{el_paro_net_bigger.7} parent=5 // pred_region
      %s167 = ssub.s32 %s10, 1
      %p168 = scmp.lt.s32.totalorder %s15, 1
      %s169 = scalar_select %p168, %s15, 1
      %s170 = smul.addr %s169, 27
      %s171 = smul.addr %s170, 4
      %s172 = scalar_lea.vmem %s0, %s171
      %p173 = pneg %p36
      %p174 = pneg %p33
      %p175 = pneg %p57
      %p176 = pneg %p54
      %p177 = pneg %p78
      %p178 = pneg %p75
      %p179 = pneg %p99
      %p180 = pneg %p96
      %p181 = pneg %p125
      %p182 = pneg %p122
      %p183 = scmp.lt.s32.totalorder %s15, 1
      %s184 = scalar_select %p183, %s15, 1
      %s185 = smul.addr %s184, 3
      %s186 = smul.addr %s185, 4
      %s187 = scalar_lea.vmem %s4, %s186
      %p188 = scmp.lt.s32.totalorder %s15, 1
      %s189 = scalar_select %p188, %s15, 1
      %s190 = smul.addr %s189, 27
      %s191 = smul.addr %s190, 4
      %s192 = scalar_lea.vmem %s0, %s191
      %p193 = scmp.lt.s32.totalorder %s15, 1
      %s194 = scalar_select %p193, %s15, 1
      %s195 = smul.addr %s194, 3
      %s196 = smul.addr %s195, 4
      %s197 = scalar_lea.vmem %s4, %s196
      %v199 = vld [vmem:[%s192] sm:$0xff]
      %v200 = vld [vmem:[%s192 + $0x8] sm:$0xff]
      %v201 = vld [vmem:[%s192 + $0x10] sm:$0xff]
      %v202 = vld [vmem:[%s192 + $0x18] sm:$0xff]
      %v203 = vld [vmem:[%s192 + $0x20] sm:$0xf]
      %v204 = vld [vmem:[%s192 + $0x24] sm:$0xff]
      %v205 = vld [vmem:[%s192 + $0x2c] sm:$0xff]
      %v206 = vld [vmem:[%s192 + $0x34] sm:$0xff]
      %v207 = vld [vmem:[%s192 + $0x3c] sm:$0xff]
      %v208 = vld [vmem:[%s192 + $0x44] sm:$0xf]
      %v209 = vld [vmem:[%s192 + $0x48] sm:$0x11]
      %v210 = vld [vmem:[%s192 + $0x50] sm:$0x11]
      %v211 = vld [vmem:[%s192 + $0x58] sm:$0x11]
      %v212 = vld [vmem:[%s192 + $0x60] sm:$0x11]
      %v213 = vld [vmem:[%s192 + $0x68] sm:$0x1]
      %v214 = vld [vmem:[%s1] sm:$0xf]
      %v215 = vld [vmem:[%s1 + $0x4] sm:$0xf]
      %v216 = vld [vmem:[%s1 + $0x8] sm:$0xf]
      %v217 = vld [vmem:[%s1 + $0xc] sm:$0xf]
      %v218 = vld [vmem:[%s1 + $0x10] sm:$0xf]
      %v219 = vld [vmem:[%s1 + $0x14] sm:$0xf]
      %v220 = vld [vmem:[%s1 + $0x18] sm:$0xf]
      %v221 = vld [vmem:[%s1 + $0x1c] sm:$0xf]
      %v222 = vld [vmem:[%s1 + $0x20] sm:$0xf]
      %v223 = vld [vmem:[%s1 + $0x24] sm:$0xf]
      %v224 = vld [vmem:[%s1 + $0x28] sm:$0xf]
      %v225 = vld [vmem:[%s1 + $0x2c] sm:$0xf]
      %v226 = vld [vmem:[%s1 + $0x30] sm:$0xf]
      %v227 = vld [vmem:[%s1 + $0x34] sm:$0xf]
      %v228 = vld [vmem:[%s1 + $0x38] sm:$0xf]
      %v229 = vld [vmem:[%s1 + $0x3c] sm:$0xf]
      %v230 = vld [vmem:[%s1 + $0x40] sm:$0xf]
      %v231 = vld [vmem:[%s1 + $0x44] sm:$0xf]
      %v232 = vld [vmem:[%s1 + $0x48] sm:$0xf]
      %v233 = vld [vmem:[%s1 + $0x4c] sm:$0xf]
      %v234 = vld [vmem:[%s1 + $0x50] sm:$0xf]
      %v235 = vld [vmem:[%s1 + $0x54] sm:$0xf]
      %v236 = vld [vmem:[%s1 + $0x58] sm:$0xf]
      %v237 = vld [vmem:[%s1 + $0x5c] sm:$0xf]
      %v238 = vld [vmem:[%s1 + $0x60] sm:$0xf]
      %v239 = vld [vmem:[%s1 + $0x64] sm:$0xf]
      %v240 = vld [vmem:[%s1 + $0x68] sm:$0xf]
      %v241 = vld [vmem:[%s1 + $0x6c] sm:$0xf]
      %v242 = vld [vmem:[%s1 + $0x70] sm:$0xf]
      %v243 = vld [vmem:[%s1 + $0x74] sm:$0xf]
      %v244 = vld [vmem:[%s1 + $0x78] sm:$0xf]
      %v245 = vld [vmem:[%s1 + $0x7c] sm:$0xf]
      %v246 = vld [vmem:[%s1 + $0x80] sm:$0xf]
      %v247 = vld [vmem:[%s1 + $0x84] sm:$0xf]
      %v248 = vld [vmem:[%s1 + $0x88] sm:$0xf]
      %v249 = vld [vmem:[%s1 + $0x8c] sm:$0xf]
      %v250 = vld [vmem:[%s1 + $0x90] sm:$0xf]
      %v251 = vld [vmem:[%s1 + $0x94] sm:$0xf]
      %v252 = vld [vmem:[%s1 + $0x98] sm:$0xf]
      %v253 = vld [vmem:[%s1 + $0x9c] sm:$0xf]
      %v254 = vld [vmem:[%s1 + $0xa0] sm:$0xf]
      %v255 = vld [vmem:[%s1 + $0xa4] sm:$0xf]
      %v256 = vld [vmem:[%s1 + $0xa8] sm:$0xf]
      %v257 = vld [vmem:[%s1 + $0xac] sm:$0xf]
      %v258 = vld [vmem:[%s1 + $0xb0] sm:$0xf]
      %v259 = vld [vmem:[%s1 + $0xb4] sm:$0xf]
      %v260 = vld [vmem:[%s1 + $0xb8] sm:$0xf]
      %v261 = vld [vmem:[%s1 + $0xbc] sm:$0xf]
      %v262 = vld [vmem:[%s1 + $0xc0] sm:$0xf]
      %v263 = vld [vmem:[%s1 + $0xc4] sm:$0xf]
      %v264 = vld [vmem:[%s1 + $0xc8] sm:$0xf]
      %v265 = vld [vmem:[%s1 + $0xcc] sm:$0xf]
      %v266 = vld [vmem:[%s1 + $0xd0] sm:$0xf]
      %v267 = vld [vmem:[%s1 + $0xd4] sm:$0xf]
      %v268 = vld [vmem:[%s1 + $0xd8] sm:$0xf]
      %v269 = vld [vmem:[%s1 + $0xdc] sm:$0xf]
      %v270 = vld [vmem:[%s1 + $0xe0] sm:$0xf]
      %v271 = vld [vmem:[%s1 + $0xe4] sm:$0xf]
      %v272 = vld [vmem:[%s1 + $0xe8] sm:$0xf]
      %v273 = vld [vmem:[%s1 + $0xec] sm:$0xf]
      %v274 = vld [vmem:[%s1 + $0xf0] sm:$0xf]
      %v275 = vld [vmem:[%s1 + $0xf4] sm:$0xf]
      %v276 = vld [vmem:[%s1 + $0xf8] sm:$0xf]
      %v277 = vld [vmem:[%s1 + $0xfc] sm:$0xf]
      %v278 = vld [vmem:[%s1 + $0x100] sm:$0xf]
      %v279 = vld [vmem:[%s1 + $0x104] sm:$0xf]
      %v280 = vld [vmem:[%s1 + $0x108] sm:$0xf]
      %v281 = vld [vmem:[%s1 + $0x10c] sm:$0xf]
      %v282 = vld [vmem:[%s1 + $0x110] sm:$0xf]
      %v283 = vld [vmem:[%s1 + $0x114] sm:$0xf]
      %v284 = vld [vmem:[%s1 + $0x118] sm:$0xf]
      %v285 = vld [vmem:[%s1 + $0x11c] sm:$0xf]
      %v286 = vld [vmem:[%s1 + $0x120] sm:$0xf]
      %v287 = vld [vmem:[%s1 + $0x124] sm:$0xf]
      %v288 = vld [vmem:[%s1 + $0x128] sm:$0xf]
      %v289 = vld [vmem:[%s1 + $0x12c] sm:$0xf]
      %v290 = vld [vmem:[%s1 + $0x130] sm:$0xf]
      %v291 = vld [vmem:[%s1 + $0x134] sm:$0xf]
      %v292 = vld [vmem:[%s1 + $0x138] sm:$0xf]
      %v293 = vld [vmem:[%s1 + $0x13c] sm:$0xf]
      %v294 = vld [vmem:[%s1 + $0x140] sm:$0xf]
      %v295 = vld [vmem:[%s1 + $0x144] sm:$0xf]
      %v296 = vld [vmem:[%s1 + $0x148] sm:$0xf]
      %v297 = vld [vmem:[%s1 + $0x14c] sm:$0xf]
      %v298 = vld [vmem:[%s1 + $0x150] sm:$0xf]
      %v299 = vld [vmem:[%s1 + $0x154] sm:$0xf]
      %v300 = vld [vmem:[%s1 + $0x158] sm:$0xf]
      %v301 = vld [vmem:[%s1 + $0x15c] sm:$0xf]
      %v302 = vld [vmem:[%s1 + $0x160] sm:$0xf]
      %v303 = vld [vmem:[%s1 + $0x164] sm:$0xf]
      %v304 = vld [vmem:[%s1 + $0x168] sm:$0xf]
      %v305 = vld [vmem:[%s1 + $0x16c] sm:$0xf]
      %v306 = vld [vmem:[%s1 + $0x170] sm:$0xf]
      %v307 = vld [vmem:[%s1 + $0x174] sm:$0xf]
      %v308 = vld [vmem:[%s1 + $0x178] sm:$0xf]
      %v309 = vld [vmem:[%s1 + $0x17c] sm:$0xf]
      %v310 = vld [vmem:[%s1 + $0x180] sm:$0xf]
      %v311 = vld [vmem:[%s1 + $0x184] sm:$0xf]
      %v312 = vld [vmem:[%s1 + $0x188] sm:$0xf]
      %v313 = vld [vmem:[%s1 + $0x18c] sm:$0xf]
      %v314 = vld [vmem:[%s1 + $0x190] sm:$0xf]
      %v315 = vld [vmem:[%s1 + $0x194] sm:$0xf]
      %v316 = vld [vmem:[%s1 + $0x198] sm:$0xf]
      %v317 = vld [vmem:[%s1 + $0x19c] sm:$0xf]
      %v318 = vld [vmem:[%s1 + $0x1a0] sm:$0xf]
      %v319 = vld [vmem:[%s1 + $0x1a4] sm:$0xf]
      %v320 = vld [vmem:[%s1 + $0x1a8] sm:$0xf]
      %v321 = vld [vmem:[%s1 + $0x1ac] sm:$0xf]
      %v322 = vld [vmem:[%s1 + $0x1b0] sm:$0xf]
      %v323 = vld [vmem:[%s1 + $0x1b4] sm:$0xf]
      %v324 = vld [vmem:[%s1 + $0x1b8] sm:$0xf]
      %v325 = vld [vmem:[%s1 + $0x1bc] sm:$0xf]
      %v326 = vld [vmem:[%s1 + $0x1c0] sm:$0xf]
      %v327 = vld [vmem:[%s1 + $0x1c4] sm:$0xf]
      %v328 = vld [vmem:[%s1 + $0x1c8] sm:$0xf]
      %v329 = vld [vmem:[%s1 + $0x1cc] sm:$0xf]
      %v330 = vld [vmem:[%s1 + $0x1d0] sm:$0xf]
      %v331 = vld [vmem:[%s1 + $0x1d4] sm:$0xf]
      %v332 = vld [vmem:[%s1 + $0x1d8] sm:$0xf]
      %v333 = vld [vmem:[%s1 + $0x1dc] sm:$0xf]
      %v334 = vld [vmem:[%s1 + $0x1e0] sm:$0xf]
      %v335 = vld [vmem:[%s1 + $0x1e4] sm:$0xf]
      %v336 = vld [vmem:[%s1 + $0x1e8] sm:$0xf]
      %v337 = vld [vmem:[%s1 + $0x1ec] sm:$0xf]
      %v338 = vld [vmem:[%s1 + $0x1f0] sm:$0xf]
      %v339 = vld [vmem:[%s1 + $0x1f4] sm:$0xf]
      %v340 = vld [vmem:[%s1 + $0x1f8] sm:$0xf]
      %v341 = vld [vmem:[%s1 + $0x1fc] sm:$0xf]
      %v342 = vld [vmem:[%s1 + $0x200] sm:$0xf]
      %v343 = vld [vmem:[%s1 + $0x204] sm:$0xf]
      %v344 = vld [vmem:[%s1 + $0x208] sm:$0xf]
      %v345 = vld [vmem:[%s1 + $0x20c] sm:$0xf]
      %v346 = vld [vmem:[%s1 + $0x210] sm:$0xf]
      %v347 = vld [vmem:[%s1 + $0x214] sm:$0xf]
      %v348 = vld [vmem:[%s1 + $0x218] sm:$0xf]
      %v349 = vld [vmem:[%s1 + $0x21c] sm:$0xf]
      %v350 = vld [vmem:[%s1 + $0x220] sm:$0xf]
      %v351 = vld [vmem:[%s1 + $0x224] sm:$0xf]
      %v352 = vld [vmem:[%s1 + $0x228] sm:$0xf]
      %v353 = vld [vmem:[%s1 + $0x22c] sm:$0xf]
      %v354 = vld [vmem:[%s1 + $0x230] sm:$0xf]
      %v355 = vld [vmem:[%s1 + $0x234] sm:$0xf]
      %v356 = vld [vmem:[%s1 + $0x238] sm:$0xf]
      %v357 = vld [vmem:[%s1 + $0x23c] sm:$0xf]
      %v373 = vunpack.c.l.b16 %v199
      %v374 = vunpack.c.h.b16 %v199
      %v375 = vunpack.c.l.b16 %v200
      %v376 = vunpack.c.h.b16 %v200
      %v377 = vunpack.c.l.b16 %v201
      %v378 = vunpack.c.h.b16 %v201
      %v379 = vunpack.c.l.b16 %v202
      %v380 = vunpack.c.h.b16 %v202
      %v381 = vunpack.c.l.b16 %v203
      %v382 = vunpack.c.l.b16 %v204
      %v383 = vunpack.c.h.b16 %v204
      %v384 = vunpack.c.l.b16 %v205
      %v385 = vunpack.c.h.b16 %v205
      %v386 = vunpack.c.l.b16 %v206
      %v387 = vunpack.c.h.b16 %v206
      %v388 = vunpack.c.l.b16 %v207
      %v389 = vunpack.c.h.b16 %v207
      %v390 = vunpack.c.l.b16 %v208
      %v391 = vunpack.c.l.b16 %v209
      %v392 = vunpack.c.h.b16 %v209
      %v393 = vunpack.c.l.b16 %v210
      %v394 = vunpack.c.h.b16 %v210
      %v395 = vunpack.c.l.b16 %v211
      %v396 = vunpack.c.h.b16 %v211
      %v397 = vunpack.c.l.b16 %v212
      %v398 = vunpack.c.h.b16 %v212
      %v399 = vunpack.c.l.b16 %v213
      %v400 = vpack.c.b16 %v382, %v373
      %v401 = vpack.c.b16 %v383, %v374
      %v402 = vpack.c.b16 %v384, %v375
      %v403 = vpack.c.b16 %v385, %v376
      %v404 = vpack.c.b16 %v386, %v377
      %v405 = vpack.c.b16 %v387, %v378
      %v406 = vpack.c.b16 %v388, %v379
      %v407 = vpack.c.b16 %v389, %v380
      %v408 = vpack.c.b16 %v390, %v381
      %v409 = vpack.c.b16 %v391, %v391
      %v410 = vpack.c.b16 %v392, %v392
      %v411 = vpack.c.b16 %v393, %v393
      %v412 = vpack.c.b16 %v394, %v394
      %v413 = vpack.c.b16 %v395, %v395
      %v414 = vpack.c.b16 %v396, %v396
      %v415 = vpack.c.b16 %v397, %v397
      %v416 = vpack.c.b16 %v398, %v398
      %v417 = vpack.c.b16 %v399, %v399
      %v580 = vunpack.c.l.b16 %v214
      %v581 = vunpack.c.l.b16 %v215
      %v582 = vunpack.c.l.b16 %v216
      %v583 = vunpack.c.l.b16 %v217
      %v584 = vunpack.c.l.b16 %v218
      %v585 = vunpack.c.l.b16 %v219
      %v586 = vunpack.c.l.b16 %v220
      %v587 = vunpack.c.l.b16 %v221
      %v588 = vunpack.c.l.b16 %v222
      %v589 = vunpack.c.l.b16 %v223
      %v590 = vunpack.c.l.b16 %v224
      %v591 = vunpack.c.l.b16 %v225
      %v592 = vunpack.c.l.b16 %v226
      %v593 = vunpack.c.l.b16 %v227
      %v594 = vunpack.c.l.b16 %v228
      %v595 = vunpack.c.l.b16 %v229
      %v596 = vunpack.c.l.b16 %v230
      %v597 = vunpack.c.l.b16 %v231
      %v598 = vunpack.c.l.b16 %v232
      %v599 = vunpack.c.l.b16 %v233
      %v600 = vunpack.c.l.b16 %v234
      %v601 = vunpack.c.l.b16 %v235
      %v602 = vunpack.c.l.b16 %v236
      %v603 = vunpack.c.l.b16 %v237
      %v604 = vunpack.c.l.b16 %v238
      %v605 = vunpack.c.l.b16 %v239
      %v606 = vunpack.c.l.b16 %v240
      %v607 = vunpack.c.l.b16 %v241
      %v608 = vunpack.c.l.b16 %v242
      %v609 = vunpack.c.l.b16 %v243
      %v610 = vunpack.c.l.b16 %v244
      %v611 = vunpack.c.l.b16 %v245
      %v612 = vunpack.c.l.b16 %v246
      %v613 = vunpack.c.l.b16 %v247
      %v614 = vunpack.c.l.b16 %v248
      %v615 = vunpack.c.l.b16 %v249
      %v616 = vunpack.c.l.b16 %v250
      %v617 = vunpack.c.l.b16 %v251
      %v618 = vunpack.c.l.b16 %v252
      %v619 = vunpack.c.l.b16 %v253
      %v620 = vunpack.c.l.b16 %v254
      %v621 = vunpack.c.l.b16 %v255
      %v622 = vunpack.c.l.b16 %v256
      %v623 = vunpack.c.l.b16 %v257
      %v624 = vunpack.c.l.b16 %v258
      %v625 = vunpack.c.l.b16 %v259
      %v626 = vunpack.c.l.b16 %v260
      %v627 = vunpack.c.l.b16 %v261
      %v628 = vunpack.c.l.b16 %v262
      %v629 = vunpack.c.l.b16 %v263
      %v630 = vunpack.c.l.b16 %v264
      %v631 = vunpack.c.l.b16 %v265
      %v632 = vunpack.c.l.b16 %v266
      %v633 = vunpack.c.l.b16 %v267
      %v634 = vunpack.c.l.b16 %v268
      %v635 = vunpack.c.l.b16 %v269
      %v636 = vunpack.c.l.b16 %v270
      %v637 = vunpack.c.l.b16 %v271
      %v638 = vunpack.c.l.b16 %v272
      %v639 = vunpack.c.l.b16 %v273
      %v640 = vunpack.c.l.b16 %v274
      %v641 = vunpack.c.l.b16 %v275
      %v642 = vunpack.c.l.b16 %v276
      %v643 = vunpack.c.l.b16 %v277
      %v644 = vunpack.c.l.b16 %v278
      %v645 = vunpack.c.l.b16 %v279
      %v646 = vunpack.c.l.b16 %v280
      %v647 = vunpack.c.l.b16 %v281
      %v648 = vunpack.c.l.b16 %v282
      %v649 = vunpack.c.l.b16 %v283
      %v650 = vunpack.c.l.b16 %v284
      %v651 = vunpack.c.l.b16 %v285
      %v652 = vunpack.c.l.b16 %v286
      %v653 = vunpack.c.l.b16 %v287
      %v654 = vunpack.c.l.b16 %v288
      %v655 = vunpack.c.l.b16 %v289
      %v656 = vunpack.c.l.b16 %v290
      %v657 = vunpack.c.l.b16 %v291
      %v658 = vunpack.c.l.b16 %v292
      %v659 = vunpack.c.l.b16 %v293
      %v660 = vunpack.c.l.b16 %v294
      %v661 = vunpack.c.l.b16 %v295
      %v662 = vunpack.c.l.b16 %v296
      %v663 = vunpack.c.l.b16 %v297
      %v664 = vunpack.c.l.b16 %v298
      %v665 = vunpack.c.l.b16 %v299
      %v666 = vunpack.c.l.b16 %v300
      %v667 = vunpack.c.l.b16 %v301
      %v668 = vunpack.c.l.b16 %v302
      %v669 = vunpack.c.l.b16 %v303
      %v670 = vunpack.c.l.b16 %v304
      %v671 = vunpack.c.l.b16 %v305
      %v672 = vunpack.c.l.b16 %v306
      %v673 = vunpack.c.l.b16 %v307
      %v674 = vunpack.c.l.b16 %v308
      %v675 = vunpack.c.l.b16 %v309
      %v676 = vunpack.c.l.b16 %v310
      %v677 = vunpack.c.l.b16 %v311
      %v678 = vunpack.c.l.b16 %v312
      %v679 = vunpack.c.l.b16 %v313
      %v680 = vunpack.c.l.b16 %v314
      %v681 = vunpack.c.l.b16 %v315
      %v682 = vunpack.c.l.b16 %v316
      %v683 = vunpack.c.l.b16 %v317
      %v684 = vunpack.c.l.b16 %v318
      %v685 = vunpack.c.l.b16 %v319
      %v686 = vunpack.c.l.b16 %v320
      %v687 = vunpack.c.l.b16 %v321
      %v688 = vunpack.c.l.b16 %v322
      %v689 = vunpack.c.l.b16 %v323
      %v690 = vunpack.c.l.b16 %v324
      %v691 = vunpack.c.l.b16 %v325
      %v692 = vunpack.c.l.b16 %v326
      %v693 = vunpack.c.l.b16 %v327
      %v694 = vunpack.c.l.b16 %v328
      %v695 = vunpack.c.l.b16 %v329
      %v696 = vunpack.c.l.b16 %v330
      %v697 = vunpack.c.l.b16 %v331
      %v698 = vunpack.c.l.b16 %v332
      %v699 = vunpack.c.l.b16 %v333
      %v700 = vunpack.c.l.b16 %v334
      %v701 = vunpack.c.l.b16 %v335
      %v702 = vunpack.c.l.b16 %v336
      %v703 = vunpack.c.l.b16 %v337
      %v704 = vunpack.c.l.b16 %v338
      %v705 = vunpack.c.l.b16 %v339
      %v706 = vunpack.c.l.b16 %v340
      %v707 = vunpack.c.l.b16 %v341
      %v708 = vunpack.c.l.b16 %v342
      %v709 = vunpack.c.l.b16 %v343
      %v710 = vunpack.c.l.b16 %v344
      %v711 = vunpack.c.l.b16 %v345
      %v712 = vunpack.c.l.b16 %v346
      %v713 = vunpack.c.l.b16 %v347
      %v714 = vunpack.c.l.b16 %v348
      %v715 = vunpack.c.l.b16 %v349
      %v716 = vunpack.c.l.b16 %v350
      %v717 = vunpack.c.l.b16 %v351
      %v718 = vunpack.c.l.b16 %v352
      %v719 = vunpack.c.l.b16 %v353
      %v720 = vunpack.c.l.b16 %v354
      %v721 = vunpack.c.l.b16 %v355
      %v722 = vunpack.c.l.b16 %v356
      %v723 = vunpack.c.l.b16 %v357
      %v724 = vpack.c.b16 %v581, %v580
      %v725 = vpack.c.b16 %v583, %v582
      %v726 = vpack.c.b16 %v585, %v584
      %v727 = vpack.c.b16 %v587, %v586
      %v728 = vpack.c.b16 %v589, %v588
      %v729 = vpack.c.b16 %v591, %v590
      %v730 = vpack.c.b16 %v593, %v592
      %v731 = vpack.c.b16 %v595, %v594
      %v732 = vpack.c.b16 %v597, %v596
      %v733 = vpack.c.b16 %v599, %v598
      %v734 = vpack.c.b16 %v601, %v600
      %v735 = vpack.c.b16 %v603, %v602
      %v736 = vpack.c.b16 %v605, %v604
      %v737 = vpack.c.b16 %v607, %v606
      %v738 = vpack.c.b16 %v609, %v608
      %v739 = vpack.c.b16 %v611, %v610
      %v740 = vpack.c.b16 %v613, %v612
      %v741 = vpack.c.b16 %v615, %v614
      %v742 = vpack.c.b16 %v617, %v616
      %v743 = vpack.c.b16 %v619, %v618
      %v744 = vpack.c.b16 %v621, %v620
      %v745 = vpack.c.b16 %v623, %v622
      %v746 = vpack.c.b16 %v625, %v624
      %v747 = vpack.c.b16 %v627, %v626
      %v748 = vpack.c.b16 %v629, %v628
      %v749 = vpack.c.b16 %v631, %v630
      %v750 = vpack.c.b16 %v633, %v632
      %v751 = vpack.c.b16 %v635, %v634
      %v752 = vpack.c.b16 %v637, %v636
      %v753 = vpack.c.b16 %v639, %v638
      %v754 = vpack.c.b16 %v641, %v640
      %v755 = vpack.c.b16 %v643, %v642
      %v756 = vpack.c.b16 %v645, %v644
      %v757 = vpack.c.b16 %v647, %v646
      %v758 = vpack.c.b16 %v649, %v648
      %v759 = vpack.c.b16 %v651, %v650
      %v760 = vpack.c.b16 %v653, %v652
      %v761 = vpack.c.b16 %v655, %v654
      %v762 = vpack.c.b16 %v657, %v656
      %v763 = vpack.c.b16 %v659, %v658
      %v764 = vpack.c.b16 %v661, %v660
      %v765 = vpack.c.b16 %v663, %v662
      %v766 = vpack.c.b16 %v665, %v664
      %v767 = vpack.c.b16 %v667, %v666
      %v768 = vpack.c.b16 %v669, %v668
      %v769 = vpack.c.b16 %v671, %v670
      %v770 = vpack.c.b16 %v673, %v672
      %v771 = vpack.c.b16 %v675, %v674
      %v772 = vpack.c.b16 %v677, %v676
      %v773 = vpack.c.b16 %v679, %v678
      %v774 = vpack.c.b16 %v681, %v680
      %v775 = vpack.c.b16 %v683, %v682
      %v776 = vpack.c.b16 %v685, %v684
      %v777 = vpack.c.b16 %v687, %v686
      %v778 = vpack.c.b16 %v689, %v688
      %v779 = vpack.c.b16 %v691, %v690
      %v780 = vpack.c.b16 %v693, %v692
      %v781 = vpack.c.b16 %v695, %v694
      %v782 = vpack.c.b16 %v697, %v696
      %v783 = vpack.c.b16 %v699, %v698
      %v784 = vpack.c.b16 %v701, %v700
      %v785 = vpack.c.b16 %v703, %v702
      %v786 = vpack.c.b16 %v705, %v704
      %v787 = vpack.c.b16 %v707, %v706
      %v788 = vpack.c.b16 %v709, %v708
      %v789 = vpack.c.b16 %v711, %v710
      %v790 = vpack.c.b16 %v713, %v712
      %v791 = vpack.c.b16 %v715, %v714
      %v792 = vpack.c.b16 %v717, %v716
      %v793 = vpack.c.b16 %v719, %v718
      %v794 = vpack.c.b16 %v721, %v720
      %v795 = vpack.c.b16 %v723, %v722
      %868 = vmatprep.subr.bf16.mxu0 0
      %869 = vmatpush1.bf16.msra.mxu0 %v724
      %870 = vmatprep.subr.bf16.mxu0 0
      %871 = vmatpush1.bf16.msra.mxu0 %v725
      %872 = vmatprep.subr.bf16.mxu0 0
      %873 = vmatpush1.bf16.msra.mxu0 %v726
      %874 = vmatprep.subr.bf16.mxu0 0
      %875 = vmatpush1.bf16.msra.mxu0 %v727
      %876 = vmatprep.subr.bf16.mxu0 0
      %877 = vmatpush1.bf16.msra.mxu0 %v728
      %878 = vmatprep.subr.bf16.mxu0 0
      %879 = vmatpush1.bf16.msra.mxu0 %v729
      %880 = vmatprep.subr.bf16.mxu0 0
      %881 = vmatpush1.bf16.msra.mxu0 %v730
      %882 = vmatprep.subr.bf16.mxu0 0
      %883 = vmatpush1.bf16.msra.mxu0 %v731
      %884 = vmatprep.subr.bf16.mxu0 0
      %885 = vmatpush1.bf16.msra.mxu0 %v732
      %886 = vmatprep.subr.bf16.mxu0 0
      %887 = vmatpush1.bf16.msra.mxu0 %v733
      %888 = vmatprep.subr.bf16.mxu0 0
      %889 = vmatpush1.bf16.msra.mxu0 %v734
      %890 = vmatprep.subr.bf16.mxu0 0
      %891 = vmatpush1.bf16.msra.mxu0 %v735
      %892 = vmatprep.subr.bf16.mxu0 0
      %893 = vmatpush1.bf16.msra.mxu0 %v736
      %894 = vmatprep.subr.bf16.mxu0 0
      %895 = vmatpush1.bf16.msra.mxu0 %v737
      %896 = vmatprep.subr.bf16.mxu0 0
      %897 = vmatpush1.bf16.msra.mxu0 %v738
      %898 = vmatprep.subr.bf16.mxu0 0
      %899 = vmatpush1.bf16.msra.mxu0 %v739
      %900 = vmatprep.mubr.bf16.mxu0 %v401
      %901 = vmatmul.mubr.bf16.gmra.mrb[0].mxu0 %v400
      %v902 = vpop.f32.mrb[0].mxu0
      %v903 = vadd.f32 0.0, %v902
      %v904 = vpop.f32.mrb[0].mxu0
      %v905 = vpop.f32.mrb[0].mxu0
      %v906 = vadd.f32 0.0, %v905
      %v907 = vpop.f32.mrb[0].mxu0
      %908 = vmatprep.mubr.bf16.mxu0 %v410
      %909 = vmatmul.mubr.bf16.gmra.mrb[0].mxu0 %v409
      %v910 = vpop.f32.mrb[0].mxu0
      %v911 = vadd.f32 0.0, %v910
      %v912 = vpop.f32.mrb[0].mxu0
      %v913 = vpop.f32.mrb[0].mxu0
      %v914 = vpop.f32.mrb[0].mxu0
      %915 = vdwg.mxu0
      %916 = vmatprep.subr.bf16.mxu0 0
      %917 = vmatpush1.bf16.msra.mxu0 %v740
      %918 = vmatprep.subr.bf16.mxu0 0
      %919 = vmatpush1.bf16.msra.mxu0 %v741
      %920 = vmatprep.subr.bf16.mxu0 0
      %921 = vmatpush1.bf16.msra.mxu0 %v742
      %922 = vmatprep.subr.bf16.mxu0 0
      %923 = vmatpush1.bf16.msra.mxu0 %v743
      %924 = vmatprep.subr.bf16.mxu0 0
      %925 = vmatpush1.bf16.msra.mxu0 %v744
      %926 = vmatprep.subr.bf16.mxu0 0
      %927 = vmatpush1.bf16.msra.mxu0 %v745
      %928 = vmatprep.subr.bf16.mxu0 0
      %929 = vmatpush1.bf16.msra.mxu0 %v746
      %930 = vmatprep.subr.bf16.mxu0 0
      %931 = vmatpush1.bf16.msra.mxu0 %v747
      %932 = vmatprep.subr.bf16.mxu0 0
      %933 = vmatpush1.bf16.msra.mxu0 %v748
      %934 = vmatprep.subr.bf16.mxu0 0
      %935 = vmatpush1.bf16.msra.mxu0 %v749
      %936 = vmatprep.subr.bf16.mxu0 0
      %937 = vmatpush1.bf16.msra.mxu0 %v750
      %938 = vmatprep.subr.bf16.mxu0 0
      %939 = vmatpush1.bf16.msra.mxu0 %v751
      %940 = vmatprep.subr.bf16.mxu0 0
      %941 = vmatpush1.bf16.msra.mxu0 %v752
      %942 = vmatprep.subr.bf16.mxu0 0
      %943 = vmatpush1.bf16.msra.mxu0 %v753
      %944 = vmatprep.subr.bf16.mxu0 0
      %945 = vmatpush1.bf16.msra.mxu0 %v754
      %946 = vmatprep.subr.bf16.mxu0 0
      %947 = vmatpush1.bf16.msra.mxu0 %v755
      %948 = vmatprep.mubr.bf16.mxu0 %v403
      %949 = vmatmul.mubr.bf16.gmra.mrb[0].mxu0 %v402
      %v950 = vpop.f32.mrb[0].mxu0
      %v951 = vadd.f32 %v903, %v950
      %v952 = vpop.f32.mrb[0].mxu0
      %v953 = vpop.f32.mrb[0].mxu0
      %v954 = vadd.f32 %v906, %v953
      %v955 = vpop.f32.mrb[0].mxu0
      %956 = vmatprep.mubr.bf16.mxu0 %v412
      %957 = vmatmul.mubr.bf16.gmra.mrb[0].mxu0 %v411
      %v958 = vpop.f32.mrb[0].mxu0
      %v959 = vadd.f32 %v911, %v958
      %v960 = vpop.f32.mrb[0].mxu0
      %v961 = vpop.f32.mrb[0].mxu0
      %v962 = vpop.f32.mrb[0].mxu0
      %963 = vdwg.mxu0
      %964 = vmatprep.subr.bf16.mxu0 0
      %965 = vmatpush1.bf16.msra.mxu0 %v756
      %966 = vmatprep.subr.bf16.mxu0 0
      %967 = vmatpush1.bf16.msra.mxu0 %v757
      %968 = vmatprep.subr.bf16.mxu0 0
      %969 = vmatpush1.bf16.msra.mxu0 %v758
      %970 = vmatprep.subr.bf16.mxu0 0
      %971 = vmatpush1.bf16.msra.mxu0 %v759
      %972 = vmatprep.subr.bf16.mxu0 0
      %973 = vmatpush1.bf16.msra.mxu0 %v760
      %974 = vmatprep.subr.bf16.mxu0 0
      %975 = vmatpush1.bf16.msra.mxu0 %v761
      %976 = vmatprep.subr.bf16.mxu0 0
      %977 = vmatpush1.bf16.msra.mxu0 %v762
      %978 = vmatprep.subr.bf16.mxu0 0
      %979 = vmatpush1.bf16.msra.mxu0 %v763
      %980 = vmatprep.subr.bf16.mxu0 0
      %981 = vmatpush1.bf16.msra.mxu0 %v764
      %982 = vmatprep.subr.bf16.mxu0 0
      %983 = vmatpush1.bf16.msra.mxu0 %v765
      %984 = vmatprep.subr.bf16.mxu0 0
      %985 = vmatpush1.bf16.msra.mxu0 %v766
      %986 = vmatprep.subr.bf16.mxu0 0
      %987 = vmatpush1.bf16.msra.mxu0 %v767
      %988 = vmatprep.subr.bf16.mxu0 0
      %989 = vmatpush1.bf16.msra.mxu0 %v768
      %990 = vmatprep.subr.bf16.mxu0 0
      %991 = vmatpush1.bf16.msra.mxu0 %v769
      %992 = vmatprep.subr.bf16.mxu0 0
      %993 = vmatpush1.bf16.msra.mxu0 %v770
      %994 = vmatprep.subr.bf16.mxu0 0
      %995 = vmatpush1.bf16.msra.mxu0 %v771
      %996 = vmatprep.mubr.bf16.mxu0 %v405
      %997 = vmatmul.mubr.bf16.gmra.mrb[0].mxu0 %v404
      %v998 = vpop.f32.mrb[0].mxu0
      %v999 = vadd.f32 %v951, %v998
      %v1000 = vpop.f32.mrb[0].mxu0
      %v1001 = vpop.f32.mrb[0].mxu0
      %v1002 = vadd.f32 %v954, %v1001
      %v1003 = vpop.f32.mrb[0].mxu0
      %1004 = vmatprep.mubr.bf16.mxu0 %v414
      %1005 = vmatmul.mubr.bf16.gmra.mrb[0].mxu0 %v413
      %v1006 = vpop.f32.mrb[0].mxu0
      %v1007 = vadd.f32 %v959, %v1006
      %v1008 = vpop.f32.mrb[0].mxu0
      %v1009 = vpop.f32.mrb[0].mxu0
      %v1010 = vpop.f32.mrb[0].mxu0
      %1011 = vdwg.mxu0
      %1012 = vmatprep.subr.bf16.mxu0 0
      %1013 = vmatpush1.bf16.msra.mxu0 %v772
      %1014 = vmatprep.subr.bf16.mxu0 0
      %1015 = vmatpush1.bf16.msra.mxu0 %v773
      %1016 = vmatprep.subr.bf16.mxu0 0
      %1017 = vmatpush1.bf16.msra.mxu0 %v774
      %1018 = vmatprep.subr.bf16.mxu0 0
      %1019 = vmatpush1.bf16.msra.mxu0 %v775
      %1020 = vmatprep.subr.bf16.mxu0 0
      %1021 = vmatpush1.bf16.msra.mxu0 %v776
      %1022 = vmatprep.subr.bf16.mxu0 0
      %1023 = vmatpush1.bf16.msra.mxu0 %v777
      %1024 = vmatprep.subr.bf16.mxu0 0
      %1025 = vmatpush1.bf16.msra.mxu0 %v778
      %1026 = vmatprep.subr.bf16.mxu0 0
      %1027 = vmatpush1.bf16.msra.mxu0 %v779
      %1028 = vmatprep.subr.bf16.mxu0 0
      %1029 = vmatpush1.bf16.msra.mxu0 %v780
      %1030 = vmatprep.subr.bf16.mxu0 0
      %1031 = vmatpush1.bf16.msra.mxu0 %v781
      %1032 = vmatprep.subr.bf16.mxu0 0
      %1033 = vmatpush1.bf16.msra.mxu0 %v782
      %1034 = vmatprep.subr.bf16.mxu0 0
      %1035 = vmatpush1.bf16.msra.mxu0 %v783
      %1036 = vmatprep.subr.bf16.mxu0 0
      %1037 = vmatpush1.bf16.msra.mxu0 %v784
      %1038 = vmatprep.subr.bf16.mxu0 0
      %1039 = vmatpush1.bf16.msra.mxu0 %v785
      %1040 = vmatprep.subr.bf16.mxu0 0
      %1041 = vmatpush1.bf16.msra.mxu0 %v786
      %1042 = vmatprep.subr.bf16.mxu0 0
      %1043 = vmatpush1.bf16.msra.mxu0 %v787
      %1044 = vmatprep.mubr.bf16.mxu0 %v407
      %1045 = vmatmul.mubr.bf16.gmra.mrb[0].mxu0 %v406
      %v1046 = vpop.f32.mrb[0].mxu0
      %v1047 = vadd.f32 %v999, %v1046
      %v1048 = vpop.f32.mrb[0].mxu0
      %v1049 = vpop.f32.mrb[0].mxu0
      %v1050 = vadd.f32 %v1002, %v1049
      %v1051 = vpop.f32.mrb[0].mxu0
      %1052 = vmatprep.mubr.bf16.mxu0 %v416
      %1053 = vmatmul.mubr.bf16.gmra.mrb[0].mxu0 %v415
      %v1054 = vpop.f32.mrb[0].mxu0
      %v1055 = vadd.f32 %v1007, %v1054
      %v1056 = vpop.f32.mrb[0].mxu0
      %v1057 = vpop.f32.mrb[0].mxu0
      %v1058 = vpop.f32.mrb[0].mxu0
      %1059 = vdwg.mxu0
      %1060 = vmatprep.subr.bf16.mxu0 0
      %1061 = vmatpush1.bf16.msra.mxu0 %v788
      %1062 = vmatprep.subr.bf16.mxu0 0
      %1063 = vmatpush1.bf16.msra.mxu0 %v789
      %1064 = vmatprep.subr.bf16.mxu0 0
      %1065 = vmatpush1.bf16.msra.mxu0 %v790
      %1066 = vmatprep.subr.bf16.mxu0 0
      %1067 = vmatpush1.bf16.msra.mxu0 %v791
      %1068 = vmatprep.subr.bf16.mxu0 0
      %1069 = vmatpush1.bf16.msra.mxu0 %v792
      %1070 = vmatprep.subr.bf16.mxu0 0
      %1071 = vmatpush1.bf16.msra.mxu0 %v793
      %1072 = vmatprep.subr.bf16.mxu0 0
      %1073 = vmatpush1.bf16.msra.mxu0 %v794
      %1074 = vmatprep.subr.bf16.mxu0 0
      %1075 = vmatpush1.bf16.msra.mxu0 %v795
      %1076 = vmatprep.subr.bf16.mxu0 0
      %1077 = vmatpush1.bf16.msra.mxu0 0
      %1078 = vmatprep.subr.bf16.mxu0 0
      %1079 = vmatpush1.bf16.msra.mxu0 0
      %1080 = vmatprep.subr.bf16.mxu0 0
      %1081 = vmatpush1.bf16.msra.mxu0 0
      %1082 = vmatprep.subr.bf16.mxu0 0
      %1083 = vmatpush1.bf16.msra.mxu0 0
      %1084 = vmatprep.subr.bf16.mxu0 0
      %1085 = vmatpush1.bf16.msra.mxu0 0
      %1086 = vmatprep.subr.bf16.mxu0 0
      %1087 = vmatpush1.bf16.msra.mxu0 0
      %1088 = vmatprep.subr.bf16.mxu0 0
      %1089 = vmatpush1.bf16.msra.mxu0 0
      %1090 = vmatprep.subr.bf16.mxu0 0
      %1091 = vmatpush1.bf16.msra.mxu0 0
      %1092 = vmatprep.mubr.bf16.mxu0 0
      %1093 = vmatmul.mubr.bf16.gmra.mrb[0].mxu0 %v408
      %v1094 = vpop.f32.mrb[0].mxu0
      %v1095 = vadd.f32 %v1047, %v1094
      %v1096 = vpop.f32.mrb[0].mxu0
      %v1097 = vpop.f32.mrb[0].mxu0
      %v1098 = vadd.f32 %v1050, %v1097
      %v1099 = vpop.f32.mrb[0].mxu0
      %1100 = vmatprep.mubr.bf16.mxu0 0
      %1101 = vmatmul.mubr.bf16.gmra.mrb[0].mxu0 %v417
      %v1102 = vpop.f32.mrb[0].mxu0
      %v1103 = vadd.f32 %v1055, %v1102
      %v1104 = vpop.f32.mrb[0].mxu0
      %v1105 = vpop.f32.mrb[0].mxu0
      %v1106 = vpop.f32.mrb[0].mxu0
      %1107 = vdwg.mxu0
      %v1108 = vadd.f32 %v1095, %v1098
      %vm1109 = vcmask 1041408
      %v1110 = vsel %vm1109, %v1103, 0.0
      %v1111 = vadd.f32 %v1108, %v1110
      %v1112 = vrot.slane %v1111, 4
      %v1113 = vadd.f32 %v1111, %v1112
      %v1114 = vrot.slane %v1113, 2
      %v1115 = vadd.f32 %v1113, %v1114
      %v1116 = vrot.slane %v1115, 1
      %v1117 = vadd.f32 %v1115, %v1116
      %v1118 = vrcp.pop 18.0
      %v1119 = vmul.f32 %v1117, %v1118
      %v1120 = vsub.f32 %v1095, %v1119
      %v1121 = vsub.f32 %v1098, %v1119
      %v1122 = vsub.f32 %v1103, %v1119
      %v1123 = vmul.f32 %v1120, %v1120
      %v1124 = vmul.f32 %v1121, %v1121
      %v1125 = vmul.f32 %v1122, %v1122
      %v1126 = vadd.f32 %v1123, %v1124
      %v1127 = vsel %vm1109, %v1125, 0.0
      %v1128 = vadd.f32 %v1126, %v1127
      %v1129 = vrot.slane %v1128, 4
      %v1130 = vadd.f32 %v1128, %v1129
      %v1131 = vrot.slane %v1130, 2
      %v1132 = vadd.f32 %v1130, %v1131
      %v1133 = vrot.slane %v1132, 1
      %v1134 = vadd.f32 %v1132, %v1133
      %v1135 = vmul.f32 %v1134, %v1118
      %v1136 = vadd.f32 %v1135, 1e-05
      %v1137 = vrsqrt.pop %v1136
      %v1138 = vmul.f32 %v1120, %v1137
      %v1139 = vmul.f32 %v1121, %v1137
      %v1140 = vmul.f32 %v1122, %v1137
      %v1141 = vld [vmem:[%s2] sm:$0x1]
      %v1143 = vlaneseq
      %v1144 = vshrl.u32 %v1143, 7
      %v1145 = vsub.s32 0, %v1144
      %v1146 = vrot.slane %v1141, %v1145
      %v1148 = vmul.f32 %v1138, %v1146
      %v1149 = vmul.f32 %v1139, %v1146
      %v1150 = vmul.f32 %v1140, %v1146
      %v1151 = vld [vmem:[%s3] sm:$0x1]
      %v1153 = vlaneseq
      %v1154 = vshrl.u32 %v1153, 7
      %v1155 = vsub.s32 0, %v1154
      %v1156 = vrot.slane %v1151, %v1155
      %v1158 = vadd.f32 %v1148, %v1156
      %v1159 = vadd.f32 %v1149, %v1156
      %v1160 = vadd.f32 %v1150, %v1156
      %vm1161 = vcmp.gt.f32.partialorder %v1158, 0.0
      %vm1162 = vcmp.gt.f32.partialorder %v1159, 0.0
      %vm1163 = vcmp.gt.f32.partialorder %v1160, 0.0
      %v1164 = vmul.f32 %v1158, 0.01
      %v1165 = vmul.f32 %v1159, 0.01
      %v1166 = vmul.f32 %v1160, 0.01
      %v1167 = vsel %vm1161, %v1158, %v1164
      %v1168 = vsel %vm1162, %v1159, %v1165
      %v1169 = vsel %vm1163, %v1160, %v1166
      %v1170 = vpack.c.bf16 %v1168, %v1167
      %v1171 = vpack.c.bf16 %v1169, %v1169
      %v1174 = vunpack.c.l.b16 %v1170
      %v1175 = vunpack.c.h.b16 %v1170
      %v1176 = vunpack.c.l.b16 %v1171
      %v1177 = vpack.c.b16 %v1174, %v1174
      %v1178 = vpack.c.b16 %v1175, %v1175
      %v1179 = vpack.c.b16 %v1176, %v1176
      %1183 = vst [vmem:[%s197] sm:$0xf] %v1177
      %1184 = vst [vmem:[%s197 + $0x4] sm:$0xf] %v1178
      %1185 = vst [vmem:[%s197 + $0x8] sm:$0x1] %v1179
      %p1186 = scmp.lt.s32.totalorder %s15, 1
      %s1187 = scalar_select %p1186, %s15, 1
      %s1188 = smul.addr %s1187, 3
      %s1189 = smul.addr %s1188, 4
      %s1190 = scalar_lea.vmem %s4, %s1189
      // Predicated region
      $region37: #{el_paro_net_bigger.7} parent=35 // pred_check
        %p1191 = pneg %p122
      $region38: #{el_paro_net_bigger.7} parent=35 // pred_check_branch
        %1193 = sbr.rel (%p1191) target = $region40
      $region39: #{el_paro_net_bigger.7} parent=35 // pred_region
        _
      $region40: #{el_paro_net_bigger.7} parent=35 // pred_fallthru
        _
    $region36: #{el_paro_net_bigger.7} parent=5 // pred_fallthru
      _
    %p1194 = scmp.le.s32.totalorder 2, %s10
    // Predicated region
    $region41: #{el_paro_net_bigger.7} parent=5 // pred_check
      %p1195 = pneg %p1194
    $region42: #{el_paro_net_bigger.7} parent=5 // pred_check_branch
      %1197 = sbr.rel (%p1195) target = $region44
    $region43: #{el_paro_net_bigger.7} parent=5 // pred_region
      %s1198 = ssub.s32 %s10, 2
      // Predicated region
      $region45: #{el_paro_net_bigger.7} parent=43 // pred_check
        %p1199 = pneg %p128
      $region46: #{el_paro_net_bigger.7} parent=43 // pred_check_branch
        %1201 = sbr.rel (%p1199) target = $region48
      $region47: #{el_paro_net_bigger.7} parent=43 // pred_region
        %p1202 = scmp.lt.s32.totalorder %s16, 1
        %s1203 = scalar_select %p1202, %s16, 1
        %s1204 = smul.addr %s1203, 3
        %s1205 = smul.addr %s1204, 4
        %s1206 = scalar_lea.vmem %s4, %s1205
      $region48: #{el_paro_net_bigger.7} parent=43 // pred_fallthru
        _
    $region44: #{el_paro_net_bigger.7} parent=5 // pred_fallthru
      _
  $region6: #{el_paro_net_bigger.7} parent=0 // loop_footer
    %s14 = sadd.s32 1, %s10
  $region7: #{el_paro_net_bigger.7} parent=0 // loop_footer_branch
    %9 = sbr.rel target = $region3
  $region8: #{el_paro_net_bigger.7} parent=0 // loop_exit
    _

// kernel: el_paro_net_bigger.9
$region0: #{el_paro_net_bigger.9}
  #allocation0 [shape = 'u32[]', space=smem, size = 0x4, offset = 0x4, fixed_abs, tag = 'smem constant byte address 0x4 - core index']
  #allocation1 [shape = 'u32[144,128]{1,0:T(1,128)}', space=vmem, size = 0x12000, scoped, tag = 'internal scratch']
  %s0 = inlined_call_operand.vmem [shape: bf16[2,256], index: 0, kind: input, shape index: {}]
  %s1 = inlined_call_operand.vmem [shape: bf16[256,128], index: 1, kind: input, shape index: {}]
  %s2 = inlined_call_operand.vmem [shape: f32[1,128], index: 2, kind: input, shape index: {}]
  %s3 = inlined_call_operand.vmem [shape: bf16[6,128,128], index: 3, kind: input, shape index: {}]
  %s4 = inlined_call_operand.vmem [shape: f32[6,1,128], index: 4, kind: input, shape index: {}]
  %s5 = inlined_call_operand.vmem [shape: f32[1,128], index: 5, kind: input, shape index: {}]
  %s6 = inlined_call_operand.vmem [shape: f32[1,128], index: 6, kind: input, shape index: {}]
  %s7 = inlined_call_operand.hbm [shape: f32[2,128], index: 7, kind: output, shape index: {}]
  %s8 = sld [smem:[#allocation0]]
  $region38: #{el_paro_net_bigger.9} parent=0
    _
  %s10 = ssub.s32 1, %s8
  %s11 = scalar_select 0, %s10, %s8
  $region1: #{el_paro_net_bigger.9} parent=0
    #allocation2 [shape = 'u8[1024]{0}', space=vmem, size = 0x400, scoped, tag = 'output window, operand 0, single buffered']
    #allocation3 [shape = 's32[1]{0}', space=sflag, size = 0x4, scoped, tag = 'scoped memory for el_paro_net_bigger.9']
    %12 = vsyncpa [#allocation3], 0
    // Predicated region
    $region2: #{el_paro_net_bigger.9} parent=1 // pred_check
      _
    $region3: #{el_paro_net_bigger.9} parent=1 // pred_check_branch
      %14 = sbr.rel (0) target = $region5
    $region4: #{el_paro_net_bigger.9} parent=1 // pred_region
      _
    $region5: #{el_paro_net_bigger.9} parent=1 // pred_fallthru
      _
    // Predicated region
    $region6: #{el_paro_net_bigger.9} parent=1 // pred_check
      _
    $region7: #{el_paro_net_bigger.9} parent=1 // pred_check_branch
      %16 = sbr.rel (0) target = $region9
    $region8: #{el_paro_net_bigger.9} parent=1 // pred_region
      _
    $region9: #{el_paro_net_bigger.9} parent=1 // pred_fallthru
      _
    // Predicated region
    $region10: #{el_paro_net_bigger.9} parent=1 // pred_check
      _
    $region11: #{el_paro_net_bigger.9} parent=1 // pred_check_branch
      %18 = sbr.rel (0) target = $region13
    $region12: #{el_paro_net_bigger.9} parent=1 // pred_region
      _
    $region13: #{el_paro_net_bigger.9} parent=1 // pred_fallthru
      _
    // Predicated region
    $region14: #{el_paro_net_bigger.9} parent=1 // pred_check
      _
    $region15: #{el_paro_net_bigger.9} parent=1 // pred_check_branch
      %20 = sbr.rel (0) target = $region17
    $region16: #{el_paro_net_bigger.9} parent=1 // pred_region
      _
    $region17: #{el_paro_net_bigger.9} parent=1 // pred_fallthru
      _
    // Predicated region
    $region18: #{el_paro_net_bigger.9} parent=1 // pred_check
      _
    $region19: #{el_paro_net_bigger.9} parent=1 // pred_check_branch
      %22 = sbr.rel (0) target = $region21
    $region20: #{el_paro_net_bigger.9} parent=1 // pred_region
      _
    $region21: #{el_paro_net_bigger.9} parent=1 // pred_fallthru
      _
    // Predicated region
    $region22: #{el_paro_net_bigger.9} parent=1 // pred_check
      _
    $region23: #{el_paro_net_bigger.9} parent=1 // pred_check_branch
      %24 = sbr.rel (0) target = $region25
    $region24: #{el_paro_net_bigger.9} parent=1 // pred_region
      _
    $region25: #{el_paro_net_bigger.9} parent=1 // pred_fallthru
      _
    // Predicated region
    $region26: #{el_paro_net_bigger.9} parent=1 // pred_check
      _
    $region27: #{el_paro_net_bigger.9} parent=1 // pred_check_branch
      %26 = sbr.rel (0) target = $region29
    $region28: #{el_paro_net_bigger.9} parent=1 // pred_region
      _
    $region29: #{el_paro_net_bigger.9} parent=1 // pred_fallthru
      _
    %v28 = vld [vmem:[%s0] sm:$0x3]
    %v29 = vld [vmem:[%s1] sm:$0xf]
    %v30 = vld [vmem:[%s1 + $0x4] sm:$0xf]
    %v31 = vld [vmem:[%s1 + $0x8] sm:$0xf]
    %v32 = vld [vmem:[%s1 + $0xc] sm:$0xf]
    %v33 = vld [vmem:[%s1 + $0x10] sm:$0xf]
    %v34 = vld [vmem:[%s1 + $0x14] sm:$0xf]
    %v35 = vld [vmem:[%s1 + $0x18] sm:$0xf]
    %v36 = vld [vmem:[%s1 + $0x1c] sm:$0xf]
    %v37 = vld [vmem:[%s1 + $0x20] sm:$0xf]
    %v38 = vld [vmem:[%s1 + $0x24] sm:$0xf]
    %v39 = vld [vmem:[%s1 + $0x28] sm:$0xf]
    %v40 = vld [vmem:[%s1 + $0x2c] sm:$0xf]
    %v41 = vld [vmem:[%s1 + $0x30] sm:$0xf]
    %v42 = vld [vmem:[%s1 + $0x34] sm:$0xf]
    %v43 = vld [vmem:[%s1 + $0x38] sm:$0xf]
    %v44 = vld [vmem:[%s1 + $0x3c] sm:$0xf]
    %v45 = vld [vmem:[%s1 + $0x40] sm:$0xf]
    %v46 = vld [vmem:[%s1 + $0x44] sm:$0xf]
    %v47 = vld [vmem:[%s1 + $0x48] sm:$0xf]
    %v48 = vld [vmem:[%s1 + $0x4c] sm:$0xf]
    %v49 = vld [vmem:[%s1 + $0x50] sm:$0xf]
    %v50 = vld [vmem:[%s1 + $0x54] sm:$0xf]
    %v51 = vld [vmem:[%s1 + $0x58] sm:$0xf]
    %v52 = vld [vmem:[%s1 + $0x5c] sm:$0xf]
    %v53 = vld [vmem:[%s1 + $0x60] sm:$0xf]
    %v54 = vld [vmem:[%s1 + $0x64] sm:$0xf]
    %v55 = vld [vmem:[%s1 + $0x68] sm:$0xf]
    %v56 = vld [vmem:[%s1 + $0x6c] sm:$0xf]
    %v57 = vld [vmem:[%s1 + $0x70] sm:$0xf]
    %v58 = vld [vmem:[%s1 + $0x74] sm:$0xf]
    %v59 = vld [vmem:[%s1 + $0x78] sm:$0xf]
    %v60 = vld [vmem:[%s1 + $0x7c] sm:$0xf]
    %v61 = vld [vmem:[%s2] sm:$0x1]
    %v63 = vlaneseq
    %v64 = vshrl.u32 %v63, 7
    %v65 = vsub.s32 0, %v64
    %v66 = vrot.slane %v61, %v65
    %v70 = vunpack.c.l.s4 1966171168
    %v71 = vunpack.c.0.s8 %v70
    %v72 = vlaneseq
    %v73 = vshrl.u32 %v72, 7
    %v74 = vsub.s32 %v71, %v73
    %v75 = vrot.slane %v28, %v74
    %v76 = vcombine.high %v75, %v75
    %v78 = vunpack.c.l.s4 1966171168
    %v79 = vunpack.c.0.s8 %v78
    %v80 = vlaneseq
    %v81 = vshrl.u32 %v80, 7
    %v82 = vsub.s32 %v79, %v81
    %v83 = vrot.slane %v75, %v82
    %v85 = vunpack.c.l.s4 1966171168
    %v86 = vunpack.c.0.s8 %v85
    %v87 = vlaneseq
    %v88 = vshrl.u32 %v87, 7
    %v89 = vsub.s32 %v86, %v88
    %v90 = vrot.slane %v76, %v89
    %v125 = vunpack.c.l.b16 %v29
    %v126 = vunpack.c.l.b16 %v30
    %v127 = vunpack.c.l.b16 %v31
    %v128 = vunpack.c.l.b16 %v32
    %v129 = vunpack.c.l.b16 %v33
    %v130 = vunpack.c.l.b16 %v34
    %v131 = vunpack.c.l.b16 %v35
    %v132 = vunpack.c.l.b16 %v36
    %v133 = vunpack.c.l.b16 %v37
    %v134 = vunpack.c.l.b16 %v38
    %v135 = vunpack.c.l.b16 %v39
    %v136 = vunpack.c.l.b16 %v40
    %v137 = vunpack.c.l.b16 %v41
    %v138 = vunpack.c.l.b16 %v42
    %v139 = vunpack.c.l.b16 %v43
    %v140 = vunpack.c.l.b16 %v44
    %v141 = vunpack.c.l.b16 %v45
    %v142 = vunpack.c.l.b16 %v46
    %v143 = vunpack.c.l.b16 %v47
    %v144 = vunpack.c.l.b16 %v48
    %v145 = vunpack.c.l.b16 %v49
    %v146 = vunpack.c.l.b16 %v50
    %v147 = vunpack.c.l.b16 %v51
    %v148 = vunpack.c.l.b16 %v52
    %v149 = vunpack.c.l.b16 %v53
    %v150 = vunpack.c.l.b16 %v54
    %v151 = vunpack.c.l.b16 %v55
    %v152 = vunpack.c.l.b16 %v56
    %v153 = vunpack.c.l.b16 %v57
    %v154 = vunpack.c.l.b16 %v58
    %v155 = vunpack.c.l.b16 %v59
    %v156 = vunpack.c.l.b16 %v60
    %v157 = vpack.c.b16 %v126, %v125
    %v158 = vpack.c.b16 %v128, %v127
    %v159 = vpack.c.b16 %v130, %v129
    %v160 = vpack.c.b16 %v132, %v131
    %v161 = vpack.c.b16 %v134, %v133
    %v162 = vpack.c.b16 %v136, %v135
    %v163 = vpack.c.b16 %v138, %v137
    %v164 = vpack.c.b16 %v140, %v139
    %v165 = vpack.c.b16 %v142, %v141
    %v166 = vpack.c.b16 %v144, %v143
    %v167 = vpack.c.b16 %v146, %v145
    %v168 = vpack.c.b16 %v148, %v147
    %v169 = vpack.c.b16 %v150, %v149
    %v170 = vpack.c.b16 %v152, %v151
    %v171 = vpack.c.b16 %v154, %v153
    %v172 = vpack.c.b16 %v156, %v155
    %189 = vmatprep.subr.bf16.mxu0 0
    %190 = vmatpush1.bf16.msra.mxu0 %v157
    %191 = vmatprep.subr.bf16.mxu0 0
    %192 = vmatpush1.bf16.msra.mxu0 %v158
    %193 = vmatprep.subr.bf16.mxu0 0
    %194 = vmatpush1.bf16.msra.mxu0 %v159
    %195 = vmatprep.subr.bf16.mxu0 0
    %196 = vmatpush1.bf16.msra.mxu0 %v160
    %197 = vmatprep.subr.bf16.mxu0 0
    %198 = vmatpush1.bf16.msra.mxu0 %v161
    %199 = vmatprep.subr.bf16.mxu0 0
    %200 = vmatpush1.bf16.msra.mxu0 %v162
    %201 = vmatprep.subr.bf16.mxu0 0
    %202 = vmatpush1.bf16.msra.mxu0 %v163
    %203 = vmatprep.subr.bf16.mxu0 0
    %204 = vmatpush1.bf16.msra.mxu0 %v164
    %205 = vmatprep.subr.bf16.mxu0 0
    %206 = vmatpush1.bf16.msra.mxu0 %v165
    %207 = vmatprep.subr.bf16.mxu0 0
    %208 = vmatpush1.bf16.msra.mxu0 %v166
    %209 = vmatprep.subr.bf16.mxu0 0
    %210 = vmatpush1.bf16.msra.mxu0 %v167
    %211 = vmatprep.subr.bf16.mxu0 0
    %212 = vmatpush1.bf16.msra.mxu0 %v168
    %213 = vmatprep.subr.bf16.mxu0 0
    %214 = vmatpush1.bf16.msra.mxu0 %v169
    %215 = vmatprep.subr.bf16.mxu0 0
    %216 = vmatpush1.bf16.msra.mxu0 %v170
    %217 = vmatprep.subr.bf16.mxu0 0
    %218 = vmatpush1.bf16.msra.mxu0 %v171
    %219 = vmatprep.subr.bf16.mxu0 0
    %220 = vmatpush1.bf16.msra.mxu0 %v172
    %221 = vmatprep.mubr.bf16.mxu0 %v90
    %222 = vmatmul.mubr.bf16.gmra.mrb[0].mxu0 %v83
    %v223 = vpop.f32.mrb[0].mxu0
    %v224 = vadd.f32 %v66, %v223
    %v225 = vpop.f32.mrb[0].mxu0
    %v226 = vpop.f32.mrb[0].mxu0
    %v227 = vpop.f32.mrb[0].mxu0
    %228 = vdwg.mxu0
    %vm229 = vcmp.gt.f32.partialorder %v224, 0.0
    %v230 = vmul.f32 %v224, 0.01
    %v231 = vsel %vm229, %v224, %v230
    %v232 = vpack.c.bf16 %v231, %v231
    %v233 = vld [vmem:[%s3] sm:$0xf]
    %v234 = vld [vmem:[%s3 + $0x4] sm:$0xf]
    %v235 = vld [vmem:[%s3 + $0x8] sm:$0xf]
    %v236 = vld [vmem:[%s3 + $0xc] sm:$0xf]
    %v237 = vld [vmem:[%s3 + $0x10] sm:$0xf]
    %v238 = vld [vmem:[%s3 + $0x14] sm:$0xf]
    %v239 = vld [vmem:[%s3 + $0x18] sm:$0xf]
    %v240 = vld [vmem:[%s3 + $0x1c] sm:$0xf]
    %v241 = vld [vmem:[%s3 + $0x20] sm:$0xf]
    %v242 = vld [vmem:[%s3 + $0x24] sm:$0xf]
    %v243 = vld [vmem:[%s3 + $0x28] sm:$0xf]
    %v244 = vld [vmem:[%s3 + $0x2c] sm:$0xf]
    %v245 = vld [vmem:[%s3 + $0x30] sm:$0xf]
    %v246 = vld [vmem:[%s3 + $0x34] sm:$0xf]
    %v247 = vld [vmem:[%s3 + $0x38] sm:$0xf]
    %v248 = vld [vmem:[%s3 + $0x3c] sm:$0xf]
    %v249 = vld [vmem:[%s4] sm:$0x1]
    %v251 = vlaneseq
    %v252 = vshrl.u32 %v251, 7
    %v253 = vsub.s32 0, %v252
    %v254 = vrot.slane %v249, %v253
    %v272 = vunpack.c.l.b16 %v233
    %v273 = vunpack.c.l.b16 %v234
    %v274 = vunpack.c.l.b16 %v235
    %v275 = vunpack.c.l.b16 %v236
    %v276 = vunpack.c.l.b16 %v237
    %v277 = vunpack.c.l.b16 %v238
    %v278 = vunpack.c.l.b16 %v239
    %v279 = vunpack.c.l.b16 %v240
    %v280 = vunpack.c.l.b16 %v241
    %v281 = vunpack.c.l.b16 %v242
    %v282 = vunpack.c.l.b16 %v243
    %v283 = vunpack.c.l.b16 %v244
    %v284 = vunpack.c.l.b16 %v245
    %v285 = vunpack.c.l.b16 %v246
    %v286 = vunpack.c.l.b16 %v247
    %v287 = vunpack.c.l.b16 %v248
    %v288 = vpack.c.b16 %v273, %v272
    %v289 = vpack.c.b16 %v275, %v274
    %v290 = vpack.c.b16 %v277, %v276
    %v291 = vpack.c.b16 %v279, %v278
    %v292 = vpack.c.b16 %v281, %v280
    %v293 = vpack.c.b16 %v283, %v282
    %v294 = vpack.c.b16 %v285, %v284
    %v295 = vpack.c.b16 %v287, %v286
    %304 = vmatprep.subr.bf16.mxu0 0
    %305 = vmatpush1.bf16.msra.mxu0 %v288
    %306 = vmatprep.subr.bf16.mxu0 0
    %307 = vmatpush1.bf16.msra.mxu0 %v289
    %308 = vmatprep.subr.bf16.mxu0 0
    %309 = vmatpush1.bf16.msra.mxu0 %v290
    %310 = vmatprep.subr.bf16.mxu0 0
    %311 = vmatpush1.bf16.msra.mxu0 %v291
    %312 = vmatprep.subr.bf16.mxu0 0
    %313 = vmatpush1.bf16.msra.mxu0 %v292
    %314 = vmatprep.subr.bf16.mxu0 0
    %315 = vmatpush1.bf16.msra.mxu0 %v293
    %316 = vmatprep.subr.bf16.mxu0 0
    %317 = vmatpush1.bf16.msra.mxu0 %v294
    %318 = vmatprep.subr.bf16.mxu0 0
    %319 = vmatpush1.bf16.msra.mxu0 %v295
    %320 = vmatprep.subr.bf16.mxu0 0
    %321 = vmatpush1.bf16.msra.mxu0 0
    %322 = vmatprep.subr.bf16.mxu0 0
    %323 = vmatpush1.bf16.msra.mxu0 0
    %324 = vmatprep.subr.bf16.mxu0 0
    %325 = vmatpush1.bf16.msra.mxu0 0
    %326 = vmatprep.subr.bf16.mxu0 0
    %327 = vmatpush1.bf16.msra.mxu0 0
    %328 = vmatprep.subr.bf16.mxu0 0
    %329 = vmatpush1.bf16.msra.mxu0 0
    %330 = vmatprep.subr.bf16.mxu0 0
    %331 = vmatpush1.bf16.msra.mxu0 0
    %332 = vmatprep.subr.bf16.mxu0 0
    %333 = vmatpush1.bf16.msra.mxu0 0
    %334 = vmatprep.subr.bf16.mxu0 0
    %335 = vmatpush1.bf16.msra.mxu0 0
    %336 = vmatprep.mubr.bf16.mxu0 0
    %337 = vmatmul.mubr.bf16.gmra.mrb[0].mxu0 %v232
    %v338 = vpop.f32.mrb[0].mxu0
    %v339 = vadd.f32 %v254, %v338
    %v340 = vpop.f32.mrb[0].mxu0
    %v341 = vpop.f32.mrb[0].mxu0
    %v342 = vpop.f32.mrb[0].mxu0
    %343 = vdwg.mxu0
    %vm344 = vcmp.gt.f32.partialorder %v339, 0.0
    %v345 = vmul.f32 %v339, 0.01
    %v346 = vsel %vm344, %v339, %v345
    %v347 = vpack.c.bf16 %v346, %v346
    %s348 = scalar_lea.vmem %s3, 64
    %v349 = vld [vmem:[%s348] sm:$0xf]
    %v350 = vld [vmem:[%s348 + $0x4] sm:$0xf]
    %v351 = vld [vmem:[%s348 + $0x8] sm:$0xf]
    %v352 = vld [vmem:[%s348 + $0xc] sm:$0xf]
    %v353 = vld [vmem:[%s348 + $0x10] sm:$0xf]
    %v354 = vld [vmem:[%s348 + $0x14] sm:$0xf]
    %v355 = vld [vmem:[%s348 + $0x18] sm:$0xf]
    %v356 = vld [vmem:[%s348 + $0x1c] sm:$0xf]
    %v357 = vld [vmem:[%s348 + $0x20] sm:$0xf]
    %v358 = vld [vmem:[%s348 + $0x24] sm:$0xf]
    %v359 = vld [vmem:[%s348 + $0x28] sm:$0xf]
    %v360 = vld [vmem:[%s348 + $0x2c] sm:$0xf]
    %v361 = vld [vmem:[%s348 + $0x30] sm:$0xf]
    %v362 = vld [vmem:[%s348 + $0x34] sm:$0xf]
    %v363 = vld [vmem:[%s348 + $0x38] sm:$0xf]
    %v364 = vld [vmem:[%s348 + $0x3c] sm:$0xf]
    %v381 = vunpack.c.l.b16 %v349
    %v382 = vunpack.c.l.b16 %v350
    %v383 = vunpack.c.l.b16 %v351
    %v384 = vunpack.c.l.b16 %v352
    %v385 = vunpack.c.l.b16 %v353
    %v386 = vunpack.c.l.b16 %v354
    %v387 = vunpack.c.l.b16 %v355
    %v388 = vunpack.c.l.b16 %v356
    %v389 = vunpack.c.l.b16 %v357
    %v390 = vunpack.c.l.b16 %v358
    %v391 = vunpack.c.l.b16 %v359
    %v392 = vunpack.c.l.b16 %v360
    %v393 = vunpack.c.l.b16 %v361
    %v394 = vunpack.c.l.b16 %v362
    %v395 = vunpack.c.l.b16 %v363
    %v396 = vunpack.c.l.b16 %v364
    %v397 = vpack.c.b16 %v382, %v381
    %v398 = vpack.c.b16 %v384, %v383
    %v399 = vpack.c.b16 %v386, %v385
    %v400 = vpack.c.b16 %v388, %v387
    %v401 = vpack.c.b16 %v390, %v389
    %v402 = vpack.c.b16 %v392, %v391
    %v403 = vpack.c.b16 %v394, %v393
    %v404 = vpack.c.b16 %v396, %v395
    %413 = vmatprep.subr.bf16.mxu0 0
    %414 = vmatpush1.bf16.msra.mxu0 %v397
    %415 = vmatprep.subr.bf16.mxu0 0
    %416 = vmatpush1.bf16.msra.mxu0 %v398
    %417 = vmatprep.subr.bf16.mxu0 0
    %418 = vmatpush1.bf16.msra.mxu0 %v399
    %419 = vmatprep.subr.bf16.mxu0 0
    %420 = vmatpush1.bf16.msra.mxu0 %v400
    %421 = vmatprep.subr.bf16.mxu0 0
    %422 = vmatpush1.bf16.msra.mxu0 %v401
    %423 = vmatprep.subr.bf16.mxu0 0
    %424 = vmatpush1.bf16.msra.mxu0 %v402
    %425 = vmatprep.subr.bf16.mxu0 0
    %426 = vmatpush1.bf16.msra.mxu0 %v403
    %427 = vmatprep.subr.bf16.mxu0 0
    %428 = vmatpush1.bf16.msra.mxu0 %v404
    %429 = vmatprep.subr.bf16.mxu0 0
    %430 = vmatpush1.bf16.msra.mxu0 0
    %431 = vmatprep.subr.bf16.mxu0 0
    %432 = vmatpush1.bf16.msra.mxu0 0
    %433 = vmatprep.subr.bf16.mxu0 0
    %434 = vmatpush1.bf16.msra.mxu0 0
    %435 = vmatprep.subr.bf16.mxu0 0
    %436 = vmatpush1.bf16.msra.mxu0 0
    %437 = vmatprep.subr.bf16.mxu0 0
    %438 = vmatpush1.bf16.msra.mxu0 0
    %439 = vmatprep.subr.bf16.mxu0 0
    %440 = vmatpush1.bf16.msra.mxu0 0
    %441 = vmatprep.subr.bf16.mxu0 0
    %442 = vmatpush1.bf16.msra.mxu0 0
    %443 = vmatprep.subr.bf16.mxu0 0
    %444 = vmatpush1.bf16.msra.mxu0 0
    %445 = vmatprep.mubr.bf16.mxu0 0
    %446 = vmatmul.mubr.bf16.gmra.mrb[0].mxu0 %v347
    %v447 = vpop.f32.mrb[0].mxu0
    %v448 = vadd.f32 0.0, %v447
    %v449 = vpop.f32.mrb[0].mxu0
    %v450 = vpop.f32.mrb[0].mxu0
    %v451 = vpop.f32.mrb[0].mxu0
    %452 = vdwg.mxu0
    %vm453 = vcmask 1041408
    %v454 = vsel %vm453, %v448, 0.0
    %v455 = vrot.slane %v454, 4
    %v456 = vadd.f32 %v454, %v455
    %v457 = vrot.slane %v456, 2
    %v458 = vadd.f32 %v456, %v457
    %v459 = vrot.slane %v458, 1
    %v460 = vadd.f32 %v458, %v459
    %v461 = vrcp.pop 2.0
    %v462 = vmul.f32 %v460, %v461
    %v463 = vsub.f32 %v448, %v462
    %v464 = vmul.f32 %v463, %v463
    %v465 = vsel %vm453, %v464, 0.0
    %v466 = vrot.slane %v465, 4
    %v467 = vadd.f32 %v465, %v466
    %v468 = vrot.slane %v467, 2
    %v469 = vadd.f32 %v467, %v468
    %v470 = vrot.slane %v469, 1
    %v471 = vadd.f32 %v469, %v470
    %v472 = vmul.f32 %v471, %v461
    %v473 = vadd.f32 %v472, 1e-05
    %v474 = vrsqrt.pop %v473
    %v475 = vmul.f32 %v463, %v474
    %v476 = vld [vmem:[%s5] sm:$0x1]
    %v478 = vlaneseq
    %v479 = vshrl.u32 %v478, 7
    %v480 = vsub.s32 0, %v479
    %v481 = vrot.slane %v476, %v480
    %v483 = vmul.f32 %v475, %v481
    %v484 = vld [vmem:[%s6] sm:$0x1]
    %v486 = vlaneseq
    %v487 = vshrl.u32 %v486, 7
    %v488 = vsub.s32 0, %v487
    %v489 = vrot.slane %v484, %v488
    %v491 = vadd.f32 %v483, %v489
    %vm492 = vcmp.gt.f32.partialorder %v491, 0.0
    %v493 = vmul.f32 %v491, 0.01
    %v494 = vsel %vm492, %v491, %v493
    %v495 = vpack.c.bf16 %v494, %v494
    %s496 = scalar_lea.vmem %s3, 128
    %v497 = vld [vmem:[%s496] sm:$0xf]
    %v498 = vld [vmem:[%s496 + $0x4] sm:$0xf]
    %v499 = vld [vmem:[%s496 + $0x8] sm:$0xf]
    %v500 = vld [vmem:[%s496 + $0xc] sm:$0xf]
    %v501 = vld [vmem:[%s496 + $0x10] sm:$0xf]
    %v502 = vld [vmem:[%s496 + $0x14] sm:$0xf]
    %v503 = vld [vmem:[%s496 + $0x18] sm:$0xf]
    %v504 = vld [vmem:[%s496 + $0x1c] sm:$0xf]
    %v505 = vld [vmem:[%s496 + $0x20] sm:$0xf]
    %v506 = vld [vmem:[%s496 + $0x24] sm:$0xf]
    %v507 = vld [vmem:[%s496 + $0x28] sm:$0xf]
    %v508 = vld [vmem:[%s496 + $0x2c] sm:$0xf]
    %v509 = vld [vmem:[%s496 + $0x30] sm:$0xf]
    %v510 = vld [vmem:[%s496 + $0x34] sm:$0xf]
    %v511 = vld [vmem:[%s496 + $0x38] sm:$0xf]
    %v512 = vld [vmem:[%s496 + $0x3c] sm:$0xf]
    %s513 = scalar_lea.vmem %s4, 2
    %v514 = vld [vmem:[%s513] sm:$0x1]
    %v516 = vlaneseq
    %v517 = vshrl.u32 %v516, 7
    %v518 = vsub.s32 0, %v517
    %v519 = vrot.slane %v514, %v518
    %v537 = vunpack.c.l.b16 %v497
    %v538 = vunpack.c.l.b16 %v498
    %v539 = vunpack.c.l.b16 %v499
    %v540 = vunpack.c.l.b16 %v500
    %v541 = vunpack.c.l.b16 %v501
    %v542 = vunpack.c.l.b16 %v502
    %v543 = vunpack.c.l.b16 %v503
    %v544 = vunpack.c.l.b16 %v504
    %v545 = vunpack.c.l.b16 %v505
    %v546 = vunpack.c.l.b16 %v506
    %v547 = vunpack.c.l.b16 %v507
    %v548 = vunpack.c.l.b16 %v508
    %v549 = vunpack.c.l.b16 %v509
    %v550 = vunpack.c.l.b16 %v510
    %v551 = vunpack.c.l.b16 %v511
    %v552 = vunpack.c.l.b16 %v512
    %v553 = vpack.c.b16 %v538, %v537
    %v554 = vpack.c.b16 %v540, %v539
    %v555 = vpack.c.b16 %v542, %v541
    %v556 = vpack.c.b16 %v544, %v543
    %v557 = vpack.c.b16 %v546, %v545
    %v558 = vpack.c.b16 %v548, %v547
    %v559 = vpack.c.b16 %v550, %v549
    %v560 = vpack.c.b16 %v552, %v551
    %569 = vmatprep.subr.bf16.mxu0 0
    %570 = vmatpush1.bf16.msra.mxu0 %v553
    %571 = vmatprep.subr.bf16.mxu0 0
    %572 = vmatpush1.bf16.msra.mxu0 %v554
    %573 = vmatprep.subr.bf16.mxu0 0
    %574 = vmatpush1.bf16.msra.mxu0 %v555
    %575 = vmatprep.subr.bf16.mxu0 0
    %576 = vmatpush1.bf16.msra.mxu0 %v556
    %577 = vmatprep.subr.bf16.mxu0 0
    %578 = vmatpush1.bf16.msra.mxu0 %v557
    %579 = vmatprep.subr.bf16.mxu0 0
    %580 = vmatpush1.bf16.msra.mxu0 %v558
    %581 = vmatprep.subr.bf16.mxu0 0
    %582 = vmatpush1.bf16.msra.mxu0 %v559
    %583 = vmatprep.subr.bf16.mxu0 0
    %584 = vmatpush1.bf16.msra.mxu0 %v560
    %585 = vmatprep.subr.bf16.mxu0 0
    %586 = vmatpush1.bf16.msra.mxu0 0
    %587 = vmatprep.subr.bf16.mxu0 0
    %588 = vmatpush1.bf16.msra.mxu0 0
    %589 = vmatprep.subr.bf16.mxu0 0
    %590 = vmatpush1.bf16.msra.mxu0 0
    %591 = vmatprep.subr.bf16.mxu0 0
    %592 = vmatpush1.bf16.msra.mxu0 0
    %593 = vmatprep.subr.bf16.mxu0 0
    %594 = vmatpush1.bf16.msra.mxu0 0
    %595 = vmatprep.subr.bf16.mxu0 0
    %596 = vmatpush1.bf16.msra.mxu0 0
    %597 = vmatprep.subr.bf16.mxu0 0
    %598 = vmatpush1.bf16.msra.mxu0 0
    %599 = vmatprep.subr.bf16.mxu0 0
    %600 = vmatpush1.bf16.msra.mxu0 0
    %601 = vmatprep.mubr.bf16.mxu0 0
    %602 = vmatmul.mubr.bf16.gmra.mrb[0].mxu0 %v495
    %v603 = vpop.f32.mrb[0].mxu0
    %v604 = vadd.f32 %v519, %v603
    %v605 = vpop.f32.mrb[0].mxu0
    %v606 = vpop.f32.mrb[0].mxu0
    %v607 = vpop.f32.mrb[0].mxu0
    %608 = vdwg.mxu0
    %vm609 = vcmp.gt.f32.partialorder %v604, 0.0
    %v610 = vmul.f32 %v604, 0.01
    %v611 = vsel %vm609, %v604, %v610
    %v612 = vpack.c.bf16 %v611, %v611
    %s613 = scalar_lea.vmem %s3, 192
    %v614 = vld [vmem:[%s613] sm:$0xf]
    %v615 = vld [vmem:[%s613 + $0x4] sm:$0xf]
    %v616 = vld [vmem:[%s613 + $0x8] sm:$0xf]
    %v617 = vld [vmem:[%s613 + $0xc] sm:$0xf]
    %v618 = vld [vmem:[%s613 + $0x10] sm:$0xf]
    %v619 = vld [vmem:[%s613 + $0x14] sm:$0xf]
    %v620 = vld [vmem:[%s613 + $0x18] sm:$0xf]
    %v621 = vld [vmem:[%s613 + $0x1c] sm:$0xf]
    %v622 = vld [vmem:[%s613 + $0x20] sm:$0xf]
    %v623 = vld [vmem:[%s613 + $0x24] sm:$0xf]
    %v624 = vld [vmem:[%s613 + $0x28] sm:$0xf]
    %v625 = vld [vmem:[%s613 + $0x2c] sm:$0xf]
    %v626 = vld [vmem:[%s613 + $0x30] sm:$0xf]
    %v627 = vld [vmem:[%s613 + $0x34] sm:$0xf]
    %v628 = vld [vmem:[%s613 + $0x38] sm:$0xf]
    %v629 = vld [vmem:[%s613 + $0x3c] sm:$0xf]
    %s630 = scalar_lea.vmem %s4, 3
    %v631 = vld [vmem:[%s630] sm:$0x1]
    %v633 = vlaneseq
    %v634 = vshrl.u32 %v633, 7
    %v635 = vsub.s32 0, %v634
    %v636 = vrot.slane %v631, %v635
    %v654 = vunpack.c.l.b16 %v614
    %v655 = vunpack.c.l.b16 %v615
    %v656 = vunpack.c.l.b16 %v616
    %v657 = vunpack.c.l.b16 %v617
    %v658 = vunpack.c.l.b16 %v618
    %v659 = vunpack.c.l.b16 %v619
    %v660 = vunpack.c.l.b16 %v620
    %v661 = vunpack.c.l.b16 %v621
    %v662 = vunpack.c.l.b16 %v622
    %v663 = vunpack.c.l.b16 %v623
    %v664 = vunpack.c.l.b16 %v624
    %v665 = vunpack.c.l.b16 %v625
    %v666 = vunpack.c.l.b16 %v626
    %v667 = vunpack.c.l.b16 %v627
    %v668 = vunpack.c.l.b16 %v628
    %v669 = vunpack.c.l.b16 %v629
    %v670 = vpack.c.b16 %v655, %v654
    %v671 = vpack.c.b16 %v657, %v656
    %v672 = vpack.c.b16 %v659, %v658
    %v673 = vpack.c.b16 %v661, %v660
    %v674 = vpack.c.b16 %v663, %v662
    %v675 = vpack.c.b16 %v665, %v664
    %v676 = vpack.c.b16 %v667, %v666
    %v677 = vpack.c.b16 %v669, %v668
    %686 = vmatprep.subr.bf16.mxu0 0
    %687 = vmatpush1.bf16.msra.mxu0 %v670
    %688 = vmatprep.subr.bf16.mxu0 0
    %689 = vmatpush1.bf16.msra.mxu0 %v671
    %690 = vmatprep.subr.bf16.mxu0 0
    %691 = vmatpush1.bf16.msra.mxu0 %v672
    %692 = vmatprep.subr.bf16.mxu0 0
    %693 = vmatpush1.bf16.msra.mxu0 %v673
    %694 = vmatprep.subr.bf16.mxu0 0
    %695 = vmatpush1.bf16.msra.mxu0 %v674
    %696 = vmatprep.subr.bf16.mxu0 0
    %697 = vmatpush1.bf16.msra.mxu0 %v675
    %698 = vmatprep.subr.bf16.mxu0 0
    %699 = vmatpush1.bf16.msra.mxu0 %v676
    %700 = vmatprep.subr.bf16.mxu0 0
    %701 = vmatpush1.bf16.msra.mxu0 %v677
    %702 = vmatprep.subr.bf16.mxu0 0
    %703 = vmatpush1.bf16.msra.mxu0 0
    %704 = vmatprep.subr.bf16.mxu0 0
    %705 = vmatpush1.bf16.msra.mxu0 0
    %706 = vmatprep.subr.bf16.mxu0 0
    %707 = vmatpush1.bf16.msra.mxu0 0
    %708 = vmatprep.subr.bf16.mxu0 0
    %709 = vmatpush1.bf16.msra.mxu0 0
    %710 = vmatprep.subr.bf16.mxu0 0
    %711 = vmatpush1.bf16.msra.mxu0 0
    %712 = vmatprep.subr.bf16.mxu0 0
    %713 = vmatpush1.bf16.msra.mxu0 0
    %714 = vmatprep.subr.bf16.mxu0 0
    %715 = vmatpush1.bf16.msra.mxu0 0
    %716 = vmatprep.subr.bf16.mxu0 0
    %717 = vmatpush1.bf16.msra.mxu0 0
    %718 = vmatprep.mubr.bf16.mxu0 0
    %719 = vmatmul.mubr.bf16.gmra.mrb[0].mxu0 %v612
    %v720 = vpop.f32.mrb[0].mxu0
    %v721 = vadd.f32 %v636, %v720
    %v722 = vpop.f32.mrb[0].mxu0
    %v723 = vpop.f32.mrb[0].mxu0
    %v724 = vpop.f32.mrb[0].mxu0
    %725 = vdwg.mxu0
    %vm726 = vcmp.gt.f32.partialorder %v721, 0.0
    %v727 = vmul.f32 %v721, 0.01
    %v728 = vsel %vm726, %v721, %v727
    %v729 = vpack.c.bf16 %v728, %v728
    %s730 = scalar_lea.vmem %s3, 256
    %v731 = vld [vmem:[%s730] sm:$0xf]
    %v732 = vld [vmem:[%s730 + $0x4] sm:$0xf]
    %v733 = vld [vmem:[%s730 + $0x8] sm:$0xf]
    %v734 = vld [vmem:[%s730 + $0xc] sm:$0xf]
    %v735 = vld [vmem:[%s730 + $0x10] sm:$0xf]
    %v736 = vld [vmem:[%s730 + $0x14] sm:$0xf]
    %v737 = vld [vmem:[%s730 + $0x18] sm:$0xf]
    %v738 = vld [vmem:[%s730 + $0x1c] sm:$0xf]
    %v739 = vld [vmem:[%s730 + $0x20] sm:$0xf]
    %v740 = vld [vmem:[%s730 + $0x24] sm:$0xf]
    %v741 = vld [vmem:[%s730 + $0x28] sm:$0xf]
    %v742 = vld [vmem:[%s730 + $0x2c] sm:$0xf]
    %v743 = vld [vmem:[%s730 + $0x30] sm:$0xf]
    %v744 = vld [vmem:[%s730 + $0x34] sm:$0xf]
    %v745 = vld [vmem:[%s730 + $0x38] sm:$0xf]
    %v746 = vld [vmem:[%s730 + $0x3c] sm:$0xf]
    %s747 = scalar_lea.vmem %s4, 4
    %v748 = vld [vmem:[%s747] sm:$0x1]
    %v750 = vlaneseq
    %v751 = vshrl.u32 %v750, 7
    %v752 = vsub.s32 0, %v751
    %v753 = vrot.slane %v748, %v752
    %v771 = vunpack.c.l.b16 %v731
    %v772 = vunpack.c.l.b16 %v732
    %v773 = vunpack.c.l.b16 %v733
    %v774 = vunpack.c.l.b16 %v734
    %v775 = vunpack.c.l.b16 %v735
    %v776 = vunpack.c.l.b16 %v736
    %v777 = vunpack.c.l.b16 %v737
    %v778 = vunpack.c.l.b16 %v738
    %v779 = vunpack.c.l.b16 %v739
    %v780 = vunpack.c.l.b16 %v740
    %v781 = vunpack.c.l.b16 %v741
    %v782 = vunpack.c.l.b16 %v742
    %v783 = vunpack.c.l.b16 %v743
    %v784 = vunpack.c.l.b16 %v744
    %v785 = vunpack.c.l.b16 %v745
    %v786 = vunpack.c.l.b16 %v746
    %v787 = vpack.c.b16 %v772, %v771
    %v788 = vpack.c.b16 %v774, %v773
    %v789 = vpack.c.b16 %v776, %v775
    %v790 = vpack.c.b16 %v778, %v777
    %v791 = vpack.c.b16 %v780, %v779
    %v792 = vpack.c.b16 %v782, %v781
    %v793 = vpack.c.b16 %v784, %v783
    %v794 = vpack.c.b16 %v786, %v785
    %803 = vmatprep.subr.bf16.mxu0 0
    %804 = vmatpush1.bf16.msra.mxu0 %v787
    %805 = vmatprep.subr.bf16.mxu0 0
    %806 = vmatpush1.bf16.msra.mxu0 %v788
    %807 = vmatprep.subr.bf16.mxu0 0
    %808 = vmatpush1.bf16.msra.mxu0 %v789
    %809 = vmatprep.subr.bf16.mxu0 0
    %810 = vmatpush1.bf16.msra.mxu0 %v790
    %811 = vmatprep.subr.bf16.mxu0 0
    %812 = vmatpush1.bf16.msra.mxu0 %v791
    %813 = vmatprep.subr.bf16.mxu0 0
    %814 = vmatpush1.bf16.msra.mxu0 %v792
    %815 = vmatprep.subr.bf16.mxu0 0
    %816 = vmatpush1.bf16.msra.mxu0 %v793
    %817 = vmatprep.subr.bf16.mxu0 0
    %818 = vmatpush1.bf16.msra.mxu0 %v794
    %819 = vmatprep.subr.bf16.mxu0 0
    %820 = vmatpush1.bf16.msra.mxu0 0
    %821 = vmatprep.subr.bf16.mxu0 0
    %822 = vmatpush1.bf16.msra.mxu0 0
    %823 = vmatprep.subr.bf16.mxu0 0
    %824 = vmatpush1.bf16.msra.mxu0 0
    %825 = vmatprep.subr.bf16.mxu0 0
    %826 = vmatpush1.bf16.msra.mxu0 0
    %827 = vmatprep.subr.bf16.mxu0 0
    %828 = vmatpush1.bf16.msra.mxu0 0
    %829 = vmatprep.subr.bf16.mxu0 0
    %830 = vmatpush1.bf16.msra.mxu0 0
    %831 = vmatprep.subr.bf16.mxu0 0
    %832 = vmatpush1.bf16.msra.mxu0 0
    %833 = vmatprep.subr.bf16.mxu0 0
    %834 = vmatpush1.bf16.msra.mxu0 0
    %835 = vmatprep.mubr.bf16.mxu0 0
    %836 = vmatmul.mubr.bf16.gmra.mrb[0].mxu0 %v729
    %v837 = vpop.f32.mrb[0].mxu0
    %v838 = vadd.f32 %v753, %v837
    %v839 = vpop.f32.mrb[0].mxu0
    %v840 = vpop.f32.mrb[0].mxu0
    %v841 = vpop.f32.mrb[0].mxu0
    %842 = vdwg.mxu0
    %vm843 = vcmp.gt.f32.partialorder %v838, 0.0
    %v844 = vmul.f32 %v838, 0.01
    %v845 = vsel %vm843, %v838, %v844
    %v846 = vpack.c.bf16 %v845, %v845
    %s847 = scalar_lea.vmem %s3, 320
    %v848 = vld [vmem:[%s847] sm:$0xf]
    %v849 = vld [vmem:[%s847 + $0x4] sm:$0xf]
    %v850 = vld [vmem:[%s847 + $0x8] sm:$0xf]
    %v851 = vld [vmem:[%s847 + $0xc] sm:$0xf]
    %v852 = vld [vmem:[%s847 + $0x10] sm:$0xf]
    %v853 = vld [vmem:[%s847 + $0x14] sm:$0xf]
    %v854 = vld [vmem:[%s847 + $0x18] sm:$0xf]
    %v855 = vld [vmem:[%s847 + $0x1c] sm:$0xf]
    %v856 = vld [vmem:[%s847 + $0x20] sm:$0xf]
    %v857 = vld [vmem:[%s847 + $0x24] sm:$0xf]
    %v858 = vld [vmem:[%s847 + $0x28] sm:$0xf]
    %v859 = vld [vmem:[%s847 + $0x2c] sm:$0xf]
    %v860 = vld [vmem:[%s847 + $0x30] sm:$0xf]
    %v861 = vld [vmem:[%s847 + $0x34] sm:$0xf]
    %v862 = vld [vmem:[%s847 + $0x38] sm:$0xf]
    %v863 = vld [vmem:[%s847 + $0x3c] sm:$0xf]
    %s864 = scalar_lea.vmem %s4, 5
    %v865 = vld [vmem:[%s864] sm:$0x1]
    %v867 = vlaneseq
    %v868 = vshrl.u32 %v867, 7
    %v869 = vsub.s32 0, %v868
    %v870 = vrot.slane %v865, %v869
    %v888 = vunpack.c.l.b16 %v848
    %v889 = vunpack.c.l.b16 %v849
    %v890 = vunpack.c.l.b16 %v850
    %v891 = vunpack.c.l.b16 %v851
    %v892 = vunpack.c.l.b16 %v852
    %v893 = vunpack.c.l.b16 %v853
    %v894 = vunpack.c.l.b16 %v854
    %v895 = vunpack.c.l.b16 %v855
    %v896 = vunpack.c.l.b16 %v856
    %v897 = vunpack.c.l.b16 %v857
    %v898 = vunpack.c.l.b16 %v858
    %v899 = vunpack.c.l.b16 %v859
    %v900 = vunpack.c.l.b16 %v860
    %v901 = vunpack.c.l.b16 %v861
    %v902 = vunpack.c.l.b16 %v862
    %v903 = vunpack.c.l.b16 %v863
    %v904 = vpack.c.b16 %v889, %v888
    %v905 = vpack.c.b16 %v891, %v890
    %v906 = vpack.c.b16 %v893, %v892
    %v907 = vpack.c.b16 %v895, %v894
    %v908 = vpack.c.b16 %v897, %v896
    %v909 = vpack.c.b16 %v899, %v898
    %v910 = vpack.c.b16 %v901, %v900
    %v911 = vpack.c.b16 %v903, %v902
    %920 = vmatprep.subr.bf16.mxu0 0
    %921 = vmatpush1.bf16.msra.mxu0 %v904
    %922 = vmatprep.subr.bf16.mxu0 0
    %923 = vmatpush1.bf16.msra.mxu0 %v905
    %924 = vmatprep.subr.bf16.mxu0 0
    %925 = vmatpush1.bf16.msra.mxu0 %v906
    %926 = vmatprep.subr.bf16.mxu0 0
    %927 = vmatpush1.bf16.msra.mxu0 %v907
    %928 = vmatprep.subr.bf16.mxu0 0
    %929 = vmatpush1.bf16.msra.mxu0 %v908
    %930 = vmatprep.subr.bf16.mxu0 0
    %931 = vmatpush1.bf16.msra.mxu0 %v909
    %932 = vmatprep.subr.bf16.mxu0 0
    %933 = vmatpush1.bf16.msra.mxu0 %v910
    %934 = vmatprep.subr.bf16.mxu0 0
    %935 = vmatpush1.bf16.msra.mxu0 %v911
    %936 = vmatprep.subr.bf16.mxu0 0
    %937 = vmatpush1.bf16.msra.mxu0 0
    %938 = vmatprep.subr.bf16.mxu0 0
    %939 = vmatpush1.bf16.msra.mxu0 0
    %940 = vmatprep.subr.bf16.mxu0 0
    %941 = vmatpush1.bf16.msra.mxu0 0
    %942 = vmatprep.subr.bf16.mxu0 0
    %943 = vmatpush1.bf16.msra.mxu0 0
    %944 = vmatprep.subr.bf16.mxu0 0
    %945 = vmatpush1.bf16.msra.mxu0 0
    %946 = vmatprep.subr.bf16.mxu0 0
    %947 = vmatpush1.bf16.msra.mxu0 0
    %948 = vmatprep.subr.bf16.mxu0 0
    %949 = vmatpush1.bf16.msra.mxu0 0
    %950 = vmatprep.subr.bf16.mxu0 0
    %951 = vmatpush1.bf16.msra.mxu0 0
    %952 = vmatprep.mubr.bf16.mxu0 0
    %953 = vmatmul.mubr.bf16.gmra.mrb[0].mxu0 %v846
    %v954 = vpop.f32.mrb[0].mxu0
    %v955 = vadd.f32 %v870, %v954
    %v956 = vpop.f32.mrb[0].mxu0
    %v957 = vpop.f32.mrb[0].mxu0
    %v958 = vpop.f32.mrb[0].mxu0
    %959 = vdwg.mxu0
    %960 = vst [vmem:[#allocation2] sm:$0x3] %v955
    // Predicated region
    $region30: #{el_paro_net_bigger.9} parent=1 // pred_check
      _
    $region31: #{el_paro_net_bigger.9} parent=1 // pred_check_branch
      %962 = sbr.rel (0) target = $region33
    $region32: #{el_paro_net_bigger.9} parent=1 // pred_region
      %s964 = ssub.s32 32, 32
      %965 = vsyncadd [#allocation3], %s964
      %s967 = sshll.u32 [#allocation2], 4
      %s968 = int_to_ptr.vmem [resolvable:$true] %s967
      %970 = dma.vmem_to_hbm [thread:$0]  %s968, 32, %s7, [#allocation3]
    $region33: #{el_paro_net_bigger.9} parent=1 // pred_fallthru
      _
    // Predicated region
    $region34: #{el_paro_net_bigger.9} parent=1 // pred_check
      _
    $region35: #{el_paro_net_bigger.9} parent=1 // pred_check_branch
      %972 = sbr.rel (0) target = $region37
    $region36: #{el_paro_net_bigger.9} parent=1 // pred_region
      %973 = dma.done [#allocation3], 32
    $region37: #{el_paro_net_bigger.9} parent=1 // pred_fallthru
      _
    %974 = vsyncpa [#allocation3], 1

// kernel: el_paro_net_bigger.8
$region0: #{el_paro_net_bigger.8}
  #allocation0 [shape = 'u32[]', space=smem, size = 0x4, offset = 0x4, fixed_abs, tag = 'smem constant byte address 0x4 - core index']
  #allocation1 [shape = 'u32[144,128]{1,0:T(1,128)}', space=vmem, size = 0x12000, scoped, tag = 'internal scratch']
  %s0 = inlined_call_operand.vmem [shape: bf16[2,2,1152], index: 0, kind: input, shape index: {}]
  %s1 = inlined_call_operand.vmem [shape: bf16[1152,128], index: 1, kind: input, shape index: {}]
  %s2 = inlined_call_operand.vmem [shape: f32[1,128], index: 2, kind: input, shape index: {}]
  %s3 = inlined_call_operand.vmem [shape: f32[1,128], index: 3, kind: input, shape index: {}]
  %s4 = inlined_call_operand.vmem [shape: bf16[2,2,128], index: 4, kind: output, shape index: {}]
  %s5 = sld [smem:[#allocation0]]
  $region49: #{el_paro_net_bigger.8} parent=0
    _
  %s7 = ssub.s32 1, %s5
  %s8 = scalar_select 0, %s7, %s5
  loop: start=0, step=1, limit=4
  $region2: #{el_paro_net_bigger.8} parent=0 // loop_pre_header
    _
  $region3: #{el_paro_net_bigger.8} parent=0 // loop_header
    %s10 = sphi 0, %s14
    %p11 = scmp.ge.s32.totalorder %s10, 4
    %s20 = sphi 0, %s22
    %s23 = sphi 0, %s20
    %s24 = sphi 0, %s23
    %s40 = sphi 0, %s24
    %s44 = sphi 0, %s44
    %s46 = sphi 0, %s44
    %s47 = sphi 0, %s46
    %s61 = sphi 0, %s47
    %s65 = sphi 0, %s65
    %s67 = sphi 0, %s65
    %s68 = sphi 0, %s67
    %s82 = sphi 0, %s68
    %s86 = sphi 0, %s86
    %s88 = sphi 0, %s86
    %s89 = sphi 0, %s88
    %s103 = sphi 0, %s89
    %s109 = sphi 0, %s111
    %s112 = sphi 0, %s109
    %s113 = sphi 0, %s112
    %s129 = sphi 0, %s113
  $region4: #{el_paro_net_bigger.8} parent=0 // loop_header_branch
    %13 = sbr.rel (%p11) target = $region8
  $region5: #{el_paro_net_bigger.8} parent=0 // loop_body
    %s15 = ssub.s32 %s10, 1
    %s16 = ssub.s32 %s10, 2
    %s17 = sadd.s32 %s10, 1
    %s18 = ssub.s32 %s10, %s17
    %p19 = scmp.eq.s32.totalorder %s18, 0
    %s21 = sadd.s32 %s20, 1
    %s22 = scalar_select %p19, %s20, %s21
    %p25 = pneg %p19
    %p26 = scmp.eq.s32.totalorder %s10, 1
    %p27 = por %p25, %p26
    %p28 = scmp.ne.s32.totalorder %s20, %s23
    %p29 = scmp.eq.s32.totalorder %s10, 0
    %p30 = por %p28, %p29
    %p31 = scmp.ne.s32.totalorder %s20, %s23
    %p32 = scmp.eq.s32.totalorder %s15, 1
    %p33 = por %p31, %p32
    %p34 = scmp.ne.s32.totalorder %s23, %s24
    %p35 = scmp.eq.s32.totalorder %s15, 0
    %p36 = por %p34, %p35
    %p37 = scmp.ne.s32.totalorder %s23, %s24
    %p38 = scmp.eq.s32.totalorder %s16, 1
    %p39 = por %p37, %p38
    %p41 = scmp.ne.s32.totalorder %s24, %s40
    %p42 = scmp.eq.s32.totalorder %s16, 0
    %p43 = por %p41, %p42
    %s45 = sadd.s32 %s44, 1
    %p48 = scmp.eq.s32.totalorder %s10, 1
    %p49 = scmp.ne.s32.totalorder %s44, %s46
    %p50 = scmp.eq.s32.totalorder %s10, 0
    %p51 = por %p49, %p50
    %p52 = scmp.ne.s32.totalorder %s44, %s46
    %p53 = scmp.eq.s32.totalorder %s15, 1
    %p54 = por %p52, %p53
    %p55 = scmp.ne.s32.totalorder %s46, %s47
    %p56 = scmp.eq.s32.totalorder %s15, 0
    %p57 = por %p55, %p56
    %p58 = scmp.ne.s32.totalorder %s46, %s47
    %p59 = scmp.eq.s32.totalorder %s16, 1
    %p60 = por %p58, %p59
    %p62 = scmp.ne.s32.totalorder %s47, %s61
    %p63 = scmp.eq.s32.totalorder %s16, 0
    %p64 = por %p62, %p63
    %s66 = sadd.s32 %s65, 1
    %p69 = scmp.eq.s32.totalorder %s10, 1
    %p70 = scmp.ne.s32.totalorder %s65, %s67
    %p71 = scmp.eq.s32.totalorder %s10, 0
    %p72 = por %p70, %p71
    %p73 = scmp.ne.s32.totalorder %s65, %s67
    %p74 = scmp.eq.s32.totalorder %s15, 1
    %p75 = por %p73, %p74
    %p76 = scmp.ne.s32.totalorder %s67, %s68
    %p77 = scmp.eq.s32.totalorder %s15, 0
    %p78 = por %p76, %p77
    %p79 = scmp.ne.s32.totalorder %s67, %s68
    %p80 = scmp.eq.s32.totalorder %s16, 1
    %p81 = por %p79, %p80
    %p83 = scmp.ne.s32.totalorder %s68, %s82
    %p84 = scmp.eq.s32.totalorder %s16, 0
    %p85 = por %p83, %p84
    %s87 = sadd.s32 %s86, 1
    %p90 = scmp.eq.s32.totalorder %s10, 1
    %p91 = scmp.ne.s32.totalorder %s86, %s88
    %p92 = scmp.eq.s32.totalorder %s10, 0
    %p93 = por %p91, %p92
    %p94 = scmp.ne.s32.totalorder %s86, %s88
    %p95 = scmp.eq.s32.totalorder %s15, 1
    %p96 = por %p94, %p95
    %p97 = scmp.ne.s32.totalorder %s88, %s89
    %p98 = scmp.eq.s32.totalorder %s15, 0
    %p99 = por %p97, %p98
    %p100 = scmp.ne.s32.totalorder %s88, %s89
    %p101 = scmp.eq.s32.totalorder %s16, 1
    %p102 = por %p100, %p101
    %p104 = scmp.ne.s32.totalorder %s89, %s103
    %p105 = scmp.eq.s32.totalorder %s16, 0
    %p106 = por %p104, %p105
    %s107 = ssub.s32 %s10, %s17
    %p108 = scmp.eq.s32.totalorder %s107, 0
    %s110 = sadd.s32 %s109, 1
    %s111 = scalar_select %p108, %s109, %s110
    %p114 = pneg %p108
    %p115 = scmp.eq.s32.totalorder %s10, 1
    %p116 = por %p114, %p115
    %p117 = scmp.ne.s32.totalorder %s109, %s112
    %p118 = scmp.eq.s32.totalorder %s10, 0
    %p119 = por %p117, %p118
    %p120 = scmp.ne.s32.totalorder %s109, %s112
    %p121 = scmp.eq.s32.totalorder %s15, 1
    %p122 = por %p120, %p121
    %p123 = scmp.ne.s32.totalorder %s112, %s113
    %p124 = scmp.eq.s32.totalorder %s15, 0
    %p125 = por %p123, %p124
    %p126 = scmp.ne.s32.totalorder %s112, %s113
    %p127 = scmp.eq.s32.totalorder %s16, 1
    %p128 = por %p126, %p127
    %p130 = scmp.ne.s32.totalorder %s113, %s129
    %p131 = scmp.eq.s32.totalorder %s16, 0
    %p132 = por %p130, %p131
    %p133 = scmp.le.s32.totalorder 1, %s10
    %p134 = scmp.lt.s32.totalorder %s10, 3
    %p135 = pnand %p133, %p134
    %p136 = pneg %p135
    // Predicated region
    $region9: #{el_paro_net_bigger.8} parent=5 // pred_check
      _
    $region10: #{el_paro_net_bigger.8} parent=5 // pred_check_branch
      %138 = sbr.rel (%p135) target = $region12
    $region11: #{el_paro_net_bigger.8} parent=5 // pred_region
      %s139 = ssub.s32 %s10, 1
      // Predicated region
      $region13: #{el_paro_net_bigger.8} parent=11 // pred_check
        %p140 = pneg %p57
      $region14: #{el_paro_net_bigger.8} parent=11 // pred_check_branch
        %142 = sbr.rel (%p140) target = $region16
      $region15: #{el_paro_net_bigger.8} parent=11 // pred_region
        _
      $region16: #{el_paro_net_bigger.8} parent=11 // pred_fallthru
        _
      // Predicated region
      $region17: #{el_paro_net_bigger.8} parent=11 // pred_check
        %p143 = pneg %p78
      $region18: #{el_paro_net_bigger.8} parent=11 // pred_check_branch
        %145 = sbr.rel (%p143) target = $region20
      $region19: #{el_paro_net_bigger.8} parent=11 // pred_region
        _
      $region20: #{el_paro_net_bigger.8} parent=11 // pred_fallthru
        _
      // Predicated region
      $region21: #{el_paro_net_bigger.8} parent=11 // pred_check
        %p146 = pneg %p99
      $region22: #{el_paro_net_bigger.8} parent=11 // pred_check_branch
        %148 = sbr.rel (%p146) target = $region24
      $region23: #{el_paro_net_bigger.8} parent=11 // pred_region
        _
      $region24: #{el_paro_net_bigger.8} parent=11 // pred_fallthru
        _
    $region12: #{el_paro_net_bigger.8} parent=5 // pred_fallthru
      _
    %p149 = scmp.lt.s32.totalorder %s10, 2
    // Predicated region
    $region25: #{el_paro_net_bigger.8} parent=5 // pred_check
      %p150 = pneg %p149
    $region26: #{el_paro_net_bigger.8} parent=5 // pred_check_branch
      %152 = sbr.rel (%p150) target = $region28
    $region27: #{el_paro_net_bigger.8} parent=5 // pred_region
      // Predicated region
      $region29: #{el_paro_net_bigger.8} parent=27 // pred_check
        %p153 = pneg %p30
      $region30: #{el_paro_net_bigger.8} parent=27 // pred_check_branch
        %155 = sbr.rel (%p153) target = $region32
      $region31: #{el_paro_net_bigger.8} parent=27 // pred_region
        %p156 = scmp.lt.s32.totalorder %s10, 1
        %s157 = scalar_select %p156, %s10, 1
        %s158 = smul.addr %s157, 9
        %s159 = scalar_lea.vmem %s0, %s158
      $region32: #{el_paro_net_bigger.8} parent=27 // pred_fallthru
        _
    $region28: #{el_paro_net_bigger.8} parent=5 // pred_fallthru
      _
    %p160 = scmp.le.s32.totalorder 1, %s10
    %p161 = scmp.lt.s32.totalorder %s10, 3
    %p162 = pnand %p160, %p161
    %p163 = pneg %p162
    // Predicated region
    $region33: #{el_paro_net_bigger.8} parent=5 // pred_check
      _
    $region34: #{el_paro_net_bigger.8} parent=5 // pred_check_branch
      %165 = sbr.rel (%p162) target = $region36
    $region35: #{el_paro_net_bigger.8} parent=5 // pred_region
      %s166 = ssub.s32 %s10, 1
      %p167 = scmp.lt.s32.totalorder %s15, 1
      %s168 = scalar_select %p167, %s15, 1
      %s169 = smul.addr %s168, 9
      %s170 = scalar_lea.vmem %s0, %s169
      %p171 = pneg %p36
      %p172 = pneg %p33
      %p173 = pneg %p57
      %p174 = pneg %p54
      %p175 = pneg %p78
      %p176 = pneg %p75
      %p177 = pneg %p99
      %p178 = pneg %p96
      %p179 = pneg %p125
      %p180 = pneg %p122
      %p181 = scmp.lt.s32.totalorder %s15, 1
      %s182 = scalar_select %p181, %s15, 1
      %s183 = scalar_lea.vmem %s4, %s182
      %p184 = scmp.lt.s32.totalorder %s15, 1
      %s185 = scalar_select %p184, %s15, 1
      %s186 = smul.addr %s185, 9
      %s187 = scalar_lea.vmem %s0, %s186
      %p188 = scmp.lt.s32.totalorder %s15, 1
      %s189 = scalar_select %p188, %s15, 1
      %s190 = scalar_lea.vmem %s4, %s189
      %v192 = vld [vmem:[%s187] sm:$0xff]
      %v193 = vld [vmem:[%s187 + $0x8] sm:$0x1]
      %v194 = vld [vmem:[%s1] sm:$0xf]
      %v195 = vld [vmem:[%s1 + $0x4] sm:$0xf]
      %v196 = vld [vmem:[%s1 + $0x8] sm:$0xf]
      %v197 = vld [vmem:[%s1 + $0xc] sm:$0xf]
      %v198 = vld [vmem:[%s1 + $0x10] sm:$0xf]
      %v199 = vld [vmem:[%s1 + $0x14] sm:$0xf]
      %v200 = vld [vmem:[%s1 + $0x18] sm:$0xf]
      %v201 = vld [vmem:[%s1 + $0x1c] sm:$0xf]
      %v202 = vld [vmem:[%s1 + $0x20] sm:$0xf]
      %v203 = vld [vmem:[%s1 + $0x24] sm:$0xf]
      %v204 = vld [vmem:[%s1 + $0x28] sm:$0xf]
      %v205 = vld [vmem:[%s1 + $0x2c] sm:$0xf]
      %v206 = vld [vmem:[%s1 + $0x30] sm:$0xf]
      %v207 = vld [vmem:[%s1 + $0x34] sm:$0xf]
      %v208 = vld [vmem:[%s1 + $0x38] sm:$0xf]
      %v209 = vld [vmem:[%s1 + $0x3c] sm:$0xf]
      %v210 = vld [vmem:[%s1 + $0x40] sm:$0xf]
      %v211 = vld [vmem:[%s1 + $0x44] sm:$0xf]
      %v212 = vld [vmem:[%s1 + $0x48] sm:$0xf]
      %v213 = vld [vmem:[%s1 + $0x4c] sm:$0xf]
      %v214 = vld [vmem:[%s1 + $0x50] sm:$0xf]
      %v215 = vld [vmem:[%s1 + $0x54] sm:$0xf]
      %v216 = vld [vmem:[%s1 + $0x58] sm:$0xf]
      %v217 = vld [vmem:[%s1 + $0x5c] sm:$0xf]
      %v218 = vld [vmem:[%s1 + $0x60] sm:$0xf]
      %v219 = vld [vmem:[%s1 + $0x64] sm:$0xf]
      %v220 = vld [vmem:[%s1 + $0x68] sm:$0xf]
      %v221 = vld [vmem:[%s1 + $0x6c] sm:$0xf]
      %v222 = vld [vmem:[%s1 + $0x70] sm:$0xf]
      %v223 = vld [vmem:[%s1 + $0x74] sm:$0xf]
      %v224 = vld [vmem:[%s1 + $0x78] sm:$0xf]
      %v225 = vld [vmem:[%s1 + $0x7c] sm:$0xf]
      %v226 = vld [vmem:[%s1 + $0x80] sm:$0xf]
      %v227 = vld [vmem:[%s1 + $0x84] sm:$0xf]
      %v228 = vld [vmem:[%s1 + $0x88] sm:$0xf]
      %v229 = vld [vmem:[%s1 + $0x8c] sm:$0xf]
      %v230 = vld [vmem:[%s1 + $0x90] sm:$0xf]
      %v231 = vld [vmem:[%s1 + $0x94] sm:$0xf]
      %v232 = vld [vmem:[%s1 + $0x98] sm:$0xf]
      %v233 = vld [vmem:[%s1 + $0x9c] sm:$0xf]
      %v234 = vld [vmem:[%s1 + $0xa0] sm:$0xf]
      %v235 = vld [vmem:[%s1 + $0xa4] sm:$0xf]
      %v236 = vld [vmem:[%s1 + $0xa8] sm:$0xf]
      %v237 = vld [vmem:[%s1 + $0xac] sm:$0xf]
      %v238 = vld [vmem:[%s1 + $0xb0] sm:$0xf]
      %v239 = vld [vmem:[%s1 + $0xb4] sm:$0xf]
      %v240 = vld [vmem:[%s1 + $0xb8] sm:$0xf]
      %v241 = vld [vmem:[%s1 + $0xbc] sm:$0xf]
      %v242 = vld [vmem:[%s1 + $0xc0] sm:$0xf]
      %v243 = vld [vmem:[%s1 + $0xc4] sm:$0xf]
      %v244 = vld [vmem:[%s1 + $0xc8] sm:$0xf]
      %v245 = vld [vmem:[%s1 + $0xcc] sm:$0xf]
      %v246 = vld [vmem:[%s1 + $0xd0] sm:$0xf]
      %v247 = vld [vmem:[%s1 + $0xd4] sm:$0xf]
      %v248 = vld [vmem:[%s1 + $0xd8] sm:$0xf]
      %v249 = vld [vmem:[%s1 + $0xdc] sm:$0xf]
      %v250 = vld [vmem:[%s1 + $0xe0] sm:$0xf]
      %v251 = vld [vmem:[%s1 + $0xe4] sm:$0xf]
      %v252 = vld [vmem:[%s1 + $0xe8] sm:$0xf]
      %v253 = vld [vmem:[%s1 + $0xec] sm:$0xf]
      %v254 = vld [vmem:[%s1 + $0xf0] sm:$0xf]
      %v255 = vld [vmem:[%s1 + $0xf4] sm:$0xf]
      %v256 = vld [vmem:[%s1 + $0xf8] sm:$0xf]
      %v257 = vld [vmem:[%s1 + $0xfc] sm:$0xf]
      %v258 = vld [vmem:[%s1 + $0x100] sm:$0xf]
      %v259 = vld [vmem:[%s1 + $0x104] sm:$0xf]
      %v260 = vld [vmem:[%s1 + $0x108] sm:$0xf]
      %v261 = vld [vmem:[%s1 + $0x10c] sm:$0xf]
      %v262 = vld [vmem:[%s1 + $0x110] sm:$0xf]
      %v263 = vld [vmem:[%s1 + $0x114] sm:$0xf]
      %v264 = vld [vmem:[%s1 + $0x118] sm:$0xf]
      %v265 = vld [vmem:[%s1 + $0x11c] sm:$0xf]
      %v266 = vld [vmem:[%s1 + $0x120] sm:$0xf]
      %v267 = vld [vmem:[%s1 + $0x124] sm:$0xf]
      %v268 = vld [vmem:[%s1 + $0x128] sm:$0xf]
      %v269 = vld [vmem:[%s1 + $0x12c] sm:$0xf]
      %v270 = vld [vmem:[%s1 + $0x130] sm:$0xf]
      %v271 = vld [vmem:[%s1 + $0x134] sm:$0xf]
      %v272 = vld [vmem:[%s1 + $0x138] sm:$0xf]
      %v273 = vld [vmem:[%s1 + $0x13c] sm:$0xf]
      %v274 = vld [vmem:[%s1 + $0x140] sm:$0xf]
      %v275 = vld [vmem:[%s1 + $0x144] sm:$0xf]
      %v276 = vld [vmem:[%s1 + $0x148] sm:$0xf]
      %v277 = vld [vmem:[%s1 + $0x14c] sm:$0xf]
      %v278 = vld [vmem:[%s1 + $0x150] sm:$0xf]
      %v279 = vld [vmem:[%s1 + $0x154] sm:$0xf]
      %v280 = vld [vmem:[%s1 + $0x158] sm:$0xf]
      %v281 = vld [vmem:[%s1 + $0x15c] sm:$0xf]
      %v282 = vld [vmem:[%s1 + $0x160] sm:$0xf]
      %v283 = vld [vmem:[%s1 + $0x164] sm:$0xf]
      %v284 = vld [vmem:[%s1 + $0x168] sm:$0xf]
      %v285 = vld [vmem:[%s1 + $0x16c] sm:$0xf]
      %v286 = vld [vmem:[%s1 + $0x170] sm:$0xf]
      %v287 = vld [vmem:[%s1 + $0x174] sm:$0xf]
      %v288 = vld [vmem:[%s1 + $0x178] sm:$0xf]
      %v289 = vld [vmem:[%s1 + $0x17c] sm:$0xf]
      %v290 = vld [vmem:[%s1 + $0x180] sm:$0xf]
      %v291 = vld [vmem:[%s1 + $0x184] sm:$0xf]
      %v292 = vld [vmem:[%s1 + $0x188] sm:$0xf]
      %v293 = vld [vmem:[%s1 + $0x18c] sm:$0xf]
      %v294 = vld [vmem:[%s1 + $0x190] sm:$0xf]
      %v295 = vld [vmem:[%s1 + $0x194] sm:$0xf]
      %v296 = vld [vmem:[%s1 + $0x198] sm:$0xf]
      %v297 = vld [vmem:[%s1 + $0x19c] sm:$0xf]
      %v298 = vld [vmem:[%s1 + $0x1a0] sm:$0xf]
      %v299 = vld [vmem:[%s1 + $0x1a4] sm:$0xf]
      %v300 = vld [vmem:[%s1 + $0x1a8] sm:$0xf]
      %v301 = vld [vmem:[%s1 + $0x1ac] sm:$0xf]
      %v302 = vld [vmem:[%s1 + $0x1b0] sm:$0xf]
      %v303 = vld [vmem:[%s1 + $0x1b4] sm:$0xf]
      %v304 = vld [vmem:[%s1 + $0x1b8] sm:$0xf]
      %v305 = vld [vmem:[%s1 + $0x1bc] sm:$0xf]
      %v306 = vld [vmem:[%s1 + $0x1c0] sm:$0xf]
      %v307 = vld [vmem:[%s1 + $0x1c4] sm:$0xf]
      %v308 = vld [vmem:[%s1 + $0x1c8] sm:$0xf]
      %v309 = vld [vmem:[%s1 + $0x1cc] sm:$0xf]
      %v310 = vld [vmem:[%s1 + $0x1d0] sm:$0xf]
      %v311 = vld [vmem:[%s1 + $0x1d4] sm:$0xf]
      %v312 = vld [vmem:[%s1 + $0x1d8] sm:$0xf]
      %v313 = vld [vmem:[%s1 + $0x1dc] sm:$0xf]
      %v314 = vld [vmem:[%s1 + $0x1e0] sm:$0xf]
      %v315 = vld [vmem:[%s1 + $0x1e4] sm:$0xf]
      %v316 = vld [vmem:[%s1 + $0x1e8] sm:$0xf]
      %v317 = vld [vmem:[%s1 + $0x1ec] sm:$0xf]
      %v318 = vld [vmem:[%s1 + $0x1f0] sm:$0xf]
      %v319 = vld [vmem:[%s1 + $0x1f4] sm:$0xf]
      %v320 = vld [vmem:[%s1 + $0x1f8] sm:$0xf]
      %v321 = vld [vmem:[%s1 + $0x1fc] sm:$0xf]
      %v322 = vld [vmem:[%s1 + $0x200] sm:$0xf]
      %v323 = vld [vmem:[%s1 + $0x204] sm:$0xf]
      %v324 = vld [vmem:[%s1 + $0x208] sm:$0xf]
      %v325 = vld [vmem:[%s1 + $0x20c] sm:$0xf]
      %v326 = vld [vmem:[%s1 + $0x210] sm:$0xf]
      %v327 = vld [vmem:[%s1 + $0x214] sm:$0xf]
      %v328 = vld [vmem:[%s1 + $0x218] sm:$0xf]
      %v329 = vld [vmem:[%s1 + $0x21c] sm:$0xf]
      %v330 = vld [vmem:[%s1 + $0x220] sm:$0xf]
      %v331 = vld [vmem:[%s1 + $0x224] sm:$0xf]
      %v332 = vld [vmem:[%s1 + $0x228] sm:$0xf]
      %v333 = vld [vmem:[%s1 + $0x22c] sm:$0xf]
      %v334 = vld [vmem:[%s1 + $0x230] sm:$0xf]
      %v335 = vld [vmem:[%s1 + $0x234] sm:$0xf]
      %v336 = vld [vmem:[%s1 + $0x238] sm:$0xf]
      %v337 = vld [vmem:[%s1 + $0x23c] sm:$0xf]
      %v340 = vcombine.high %v192, %v192
      %v342 = vunpack.c.l.s4 1966171168
      %v343 = vunpack.c.0.s8 %v342
      %v344 = vlaneseq
      %v345 = vshrl.u32 %v344, 7
      %v346 = vsub.s32 %v343, %v345
      %v347 = vrot.slane %v192, %v346
      %v349 = vunpack.c.l.s4 1966171168
      %v350 = vunpack.c.0.s8 %v349
      %v351 = vlaneseq
      %v352 = vshrl.u32 %v351, 7
      %v353 = vsub.s32 %v350, %v352
      %v354 = vrot.slane %v340, %v353
      %v355 = vcombine.high %v347, %v347
      %v356 = vcombine.high %v354, %v354
      %v358 = vunpack.c.l.s4 1966171168
      %v359 = vunpack.c.0.s8 %v358
      %v360 = vlaneseq
      %v361 = vshrl.u32 %v360, 7
      %v362 = vsub.s32 %v359, %v361
      %v363 = vrot.slane %v347, %v362
      %v365 = vunpack.c.l.s4 1966171168
      %v366 = vunpack.c.0.s8 %v365
      %v367 = vlaneseq
      %v368 = vshrl.u32 %v367, 7
      %v369 = vsub.s32 %v366, %v368
      %v370 = vrot.slane %v354, %v369
      %v372 = vunpack.c.l.s4 1966171168
      %v373 = vunpack.c.0.s8 %v372
      %v374 = vlaneseq
      %v375 = vshrl.u32 %v374, 7
      %v376 = vsub.s32 %v373, %v375
      %v377 = vrot.slane %v355, %v376
      %v379 = vunpack.c.l.s4 1966171168
      %v380 = vunpack.c.0.s8 %v379
      %v381 = vlaneseq
      %v382 = vshrl.u32 %v381, 7
      %v383 = vsub.s32 %v380, %v382
      %v384 = vrot.slane %v356, %v383
      %v385 = vcombine.high %v363, %v363
      %v386 = vcombine.high %v370, %v370
      %v387 = vcombine.high %v377, %v377
      %v388 = vcombine.high %v384, %v384
      %v390 = vunpack.c.l.s4 1966171168
      %v391 = vunpack.c.0.s8 %v390
      %v392 = vlaneseq
      %v393 = vshrl.u32 %v392, 7
      %v394 = vsub.s32 %v391, %v393
      %v395 = vrot.slane %v193, %v394
      %v397 = vunpack.c.l.s4 1966171168
      %v398 = vunpack.c.0.s8 %v397
      %v399 = vlaneseq
      %v400 = vshrl.u32 %v399, 7
      %v401 = vsub.s32 %v398, %v400
      %v402 = vrot.slane %v395, %v401
      %v556 = vunpack.c.l.b16 %v194
      %v557 = vunpack.c.l.b16 %v195
      %v558 = vunpack.c.l.b16 %v196
      %v559 = vunpack.c.l.b16 %v197
      %v560 = vunpack.c.l.b16 %v198
      %v561 = vunpack.c.l.b16 %v199
      %v562 = vunpack.c.l.b16 %v200
      %v563 = vunpack.c.l.b16 %v201
      %v564 = vunpack.c.l.b16 %v202
      %v565 = vunpack.c.l.b16 %v203
      %v566 = vunpack.c.l.b16 %v204
      %v567 = vunpack.c.l.b16 %v205
      %v568 = vunpack.c.l.b16 %v206
      %v569 = vunpack.c.l.b16 %v207
      %v570 = vunpack.c.l.b16 %v208
      %v571 = vunpack.c.l.b16 %v209
      %v572 = vunpack.c.l.b16 %v210
      %v573 = vunpack.c.l.b16 %v211
      %v574 = vunpack.c.l.b16 %v212
      %v575 = vunpack.c.l.b16 %v213
      %v576 = vunpack.c.l.b16 %v214
      %v577 = vunpack.c.l.b16 %v215
      %v578 = vunpack.c.l.b16 %v216
      %v579 = vunpack.c.l.b16 %v217
      %v580 = vunpack.c.l.b16 %v218
      %v581 = vunpack.c.l.b16 %v219
      %v582 = vunpack.c.l.b16 %v220
      %v583 = vunpack.c.l.b16 %v221
      %v584 = vunpack.c.l.b16 %v222
      %v585 = vunpack.c.l.b16 %v223
      %v586 = vunpack.c.l.b16 %v224
      %v587 = vunpack.c.l.b16 %v225
      %v588 = vunpack.c.l.b16 %v226
      %v589 = vunpack.c.l.b16 %v227
      %v590 = vunpack.c.l.b16 %v228
      %v591 = vunpack.c.l.b16 %v229
      %v592 = vunpack.c.l.b16 %v230
      %v593 = vunpack.c.l.b16 %v231
      %v594 = vunpack.c.l.b16 %v232
      %v595 = vunpack.c.l.b16 %v233
      %v596 = vunpack.c.l.b16 %v234
      %v597 = vunpack.c.l.b16 %v235
      %v598 = vunpack.c.l.b16 %v236
      %v599 = vunpack.c.l.b16 %v237
      %v600 = vunpack.c.l.b16 %v238
      %v601 = vunpack.c.l.b16 %v239
      %v602 = vunpack.c.l.b16 %v240
      %v603 = vunpack.c.l.b16 %v241
      %v604 = vunpack.c.l.b16 %v242
      %v605 = vunpack.c.l.b16 %v243
      %v606 = vunpack.c.l.b16 %v244
      %v607 = vunpack.c.l.b16 %v245
      %v608 = vunpack.c.l.b16 %v246
      %v609 = vunpack.c.l.b16 %v247
      %v610 = vunpack.c.l.b16 %v248
      %v611 = vunpack.c.l.b16 %v249
      %v612 = vunpack.c.l.b16 %v250
      %v613 = vunpack.c.l.b16 %v251
      %v614 = vunpack.c.l.b16 %v252
      %v615 = vunpack.c.l.b16 %v253
      %v616 = vunpack.c.l.b16 %v254
      %v617 = vunpack.c.l.b16 %v255
      %v618 = vunpack.c.l.b16 %v256
      %v619 = vunpack.c.l.b16 %v257
      %v620 = vunpack.c.l.b16 %v258
      %v621 = vunpack.c.l.b16 %v259
      %v622 = vunpack.c.l.b16 %v260
      %v623 = vunpack.c.l.b16 %v261
      %v624 = vunpack.c.l.b16 %v262
      %v625 = vunpack.c.l.b16 %v263
      %v626 = vunpack.c.l.b16 %v264
      %v627 = vunpack.c.l.b16 %v265
      %v628 = vunpack.c.l.b16 %v266
      %v629 = vunpack.c.l.b16 %v267
      %v630 = vunpack.c.l.b16 %v268
      %v631 = vunpack.c.l.b16 %v269
      %v632 = vunpack.c.l.b16 %v270
      %v633 = vunpack.c.l.b16 %v271
      %v634 = vunpack.c.l.b16 %v272
      %v635 = vunpack.c.l.b16 %v273
      %v636 = vunpack.c.l.b16 %v274
      %v637 = vunpack.c.l.b16 %v275
      %v638 = vunpack.c.l.b16 %v276
      %v639 = vunpack.c.l.b16 %v277
      %v640 = vunpack.c.l.b16 %v278
      %v641 = vunpack.c.l.b16 %v279
      %v642 = vunpack.c.l.b16 %v280
      %v643 = vunpack.c.l.b16 %v281
      %v644 = vunpack.c.l.b16 %v282
      %v645 = vunpack.c.l.b16 %v283
      %v646 = vunpack.c.l.b16 %v284
      %v647 = vunpack.c.l.b16 %v285
      %v648 = vunpack.c.l.b16 %v286
      %v649 = vunpack.c.l.b16 %v287
      %v650 = vunpack.c.l.b16 %v288
      %v651 = vunpack.c.l.b16 %v289
      %v652 = vunpack.c.l.b16 %v290
      %v653 = vunpack.c.l.b16 %v291
      %v654 = vunpack.c.l.b16 %v292
      %v655 = vunpack.c.l.b16 %v293
      %v656 = vunpack.c.l.b16 %v294
      %v657 = vunpack.c.l.b16 %v295
      %v658 = vunpack.c.l.b16 %v296
      %v659 = vunpack.c.l.b16 %v297
      %v660 = vunpack.c.l.b16 %v298
      %v661 = vunpack.c.l.b16 %v299
      %v662 = vunpack.c.l.b16 %v300
      %v663 = vunpack.c.l.b16 %v301
      %v664 = vunpack.c.l.b16 %v302
      %v665 = vunpack.c.l.b16 %v303
      %v666 = vunpack.c.l.b16 %v304
      %v667 = vunpack.c.l.b16 %v305
      %v668 = vunpack.c.l.b16 %v306
      %v669 = vunpack.c.l.b16 %v307
      %v670 = vunpack.c.l.b16 %v308
      %v671 = vunpack.c.l.b16 %v309
      %v672 = vunpack.c.l.b16 %v310
      %v673 = vunpack.c.l.b16 %v311
      %v674 = vunpack.c.l.b16 %v312
      %v675 = vunpack.c.l.b16 %v313
      %v676 = vunpack.c.l.b16 %v314
      %v677 = vunpack.c.l.b16 %v315
      %v678 = vunpack.c.l.b16 %v316
      %v679 = vunpack.c.l.b16 %v317
      %v680 = vunpack.c.l.b16 %v318
      %v681 = vunpack.c.l.b16 %v319
      %v682 = vunpack.c.l.b16 %v320
      %v683 = vunpack.c.l.b16 %v321
      %v684 = vunpack.c.l.b16 %v322
      %v685 = vunpack.c.l.b16 %v323
      %v686 = vunpack.c.l.b16 %v324
      %v687 = vunpack.c.l.b16 %v325
      %v688 = vunpack.c.l.b16 %v326
      %v689 = vunpack.c.l.b16 %v327
      %v690 = vunpack.c.l.b16 %v328
      %v691 = vunpack.c.l.b16 %v329
      %v692 = vunpack.c.l.b16 %v330
      %v693 = vunpack.c.l.b16 %v331
      %v694 = vunpack.c.l.b16 %v332
      %v695 = vunpack.c.l.b16 %v333
      %v696 = vunpack.c.l.b16 %v334
      %v697 = vunpack.c.l.b16 %v335
      %v698 = vunpack.c.l.b16 %v336
      %v699 = vunpack.c.l.b16 %v337
      %v700 = vpack.c.b16 %v557, %v556
      %v701 = vpack.c.b16 %v559, %v558
      %v702 = vpack.c.b16 %v561, %v560
      %v703 = vpack.c.b16 %v563, %v562
      %v704 = vpack.c.b16 %v565, %v564
      %v705 = vpack.c.b16 %v567, %v566
      %v706 = vpack.c.b16 %v569, %v568
      %v707 = vpack.c.b16 %v571, %v570
      %v708 = vpack.c.b16 %v573, %v572
      %v709 = vpack.c.b16 %v575, %v574
      %v710 = vpack.c.b16 %v577, %v576
      %v711 = vpack.c.b16 %v579, %v578
      %v712 = vpack.c.b16 %v581, %v580
      %v713 = vpack.c.b16 %v583, %v582
      %v714 = vpack.c.b16 %v585, %v584
      %v715 = vpack.c.b16 %v587, %v586
      %v716 = vpack.c.b16 %v589, %v588
      %v717 = vpack.c.b16 %v591, %v590
      %v718 = vpack.c.b16 %v593, %v592
      %v719 = vpack.c.b16 %v595, %v594
      %v720 = vpack.c.b16 %v597, %v596
      %v721 = vpack.c.b16 %v599, %v598
      %v722 = vpack.c.b16 %v601, %v600
      %v723 = vpack.c.b16 %v603, %v602
      %v724 = vpack.c.b16 %v605, %v604
      %v725 = vpack.c.b16 %v607, %v606
      %v726 = vpack.c.b16 %v609, %v608
      %v727 = vpack.c.b16 %v611, %v610
      %v728 = vpack.c.b16 %v613, %v612
      %v729 = vpack.c.b16 %v615, %v614
      %v730 = vpack.c.b16 %v617, %v616
      %v731 = vpack.c.b16 %v619, %v618
      %v732 = vpack.c.b16 %v621, %v620
      %v733 = vpack.c.b16 %v623, %v622
      %v734 = vpack.c.b16 %v625, %v624
      %v735 = vpack.c.b16 %v627, %v626
      %v736 = vpack.c.b16 %v629, %v628
      %v737 = vpack.c.b16 %v631, %v630
      %v738 = vpack.c.b16 %v633, %v632
      %v739 = vpack.c.b16 %v635, %v634
      %v740 = vpack.c.b16 %v637, %v636
      %v741 = vpack.c.b16 %v639, %v638
      %v742 = vpack.c.b16 %v641, %v640
      %v743 = vpack.c.b16 %v643, %v642
      %v744 = vpack.c.b16 %v645, %v644
      %v745 = vpack.c.b16 %v647, %v646
      %v746 = vpack.c.b16 %v649, %v648
      %v747 = vpack.c.b16 %v651, %v650
      %v748 = vpack.c.b16 %v653, %v652
      %v749 = vpack.c.b16 %v655, %v654
      %v750 = vpack.c.b16 %v657, %v656
      %v751 = vpack.c.b16 %v659, %v658
      %v752 = vpack.c.b16 %v661, %v660
      %v753 = vpack.c.b16 %v663, %v662
      %v754 = vpack.c.b16 %v665, %v664
      %v755 = vpack.c.b16 %v667, %v666
      %v756 = vpack.c.b16 %v669, %v668
      %v757 = vpack.c.b16 %v671, %v670
      %v758 = vpack.c.b16 %v673, %v672
      %v759 = vpack.c.b16 %v675, %v674
      %v760 = vpack.c.b16 %v677, %v676
      %v761 = vpack.c.b16 %v679, %v678
      %v762 = vpack.c.b16 %v681, %v680
      %v763 = vpack.c.b16 %v683, %v682
      %v764 = vpack.c.b16 %v685, %v684
      %v765 = vpack.c.b16 %v687, %v686
      %v766 = vpack.c.b16 %v689, %v688
      %v767 = vpack.c.b16 %v691, %v690
      %v768 = vpack.c.b16 %v693, %v692
      %v769 = vpack.c.b16 %v695, %v694
      %v770 = vpack.c.b16 %v697, %v696
      %v771 = vpack.c.b16 %v699, %v698
      %844 = vmatprep.subr.bf16.mxu0 0
      %845 = vmatpush1.bf16.msra.mxu0 %v700
      %846 = vmatprep.subr.bf16.mxu0 0
      %847 = vmatpush1.bf16.msra.mxu0 %v701
      %848 = vmatprep.subr.bf16.mxu0 0
      %849 = vmatpush1.bf16.msra.mxu0 %v702
      %850 = vmatprep.subr.bf16.mxu0 0
      %851 = vmatpush1.bf16.msra.mxu0 %v703
      %852 = vmatprep.subr.bf16.mxu0 0
      %853 = vmatpush1.bf16.msra.mxu0 %v704
      %854 = vmatprep.subr.bf16.mxu0 0
      %855 = vmatpush1.bf16.msra.mxu0 %v705
      %856 = vmatprep.subr.bf16.mxu0 0
      %857 = vmatpush1.bf16.msra.mxu0 %v706
      %858 = vmatprep.subr.bf16.mxu0 0
      %859 = vmatpush1.bf16.msra.mxu0 %v707
      %860 = vmatprep.subr.bf16.mxu0 0
      %861 = vmatpush1.bf16.msra.mxu0 %v708
      %862 = vmatprep.subr.bf16.mxu0 0
      %863 = vmatpush1.bf16.msra.mxu0 %v709
      %864 = vmatprep.subr.bf16.mxu0 0
      %865 = vmatpush1.bf16.msra.mxu0 %v710
      %866 = vmatprep.subr.bf16.mxu0 0
      %867 = vmatpush1.bf16.msra.mxu0 %v711
      %868 = vmatprep.subr.bf16.mxu0 0
      %869 = vmatpush1.bf16.msra.mxu0 %v712
      %870 = vmatprep.subr.bf16.mxu0 0
      %871 = vmatpush1.bf16.msra.mxu0 %v713
      %872 = vmatprep.subr.bf16.mxu0 0
      %873 = vmatpush1.bf16.msra.mxu0 %v714
      %874 = vmatprep.subr.bf16.mxu0 0
      %875 = vmatpush1.bf16.msra.mxu0 %v715
      %876 = vmatprep.mubr.bf16.mxu0 %v377
      %877 = vmatmul.mubr.bf16.gmra.mrb[0].mxu0 %v363
      %v878 = vpop.f32.mrb[0].mxu0
      %v879 = vadd.f32 0.0, %v878
      %v880 = vpop.f32.mrb[0].mxu0
      %v881 = vpop.f32.mrb[0].mxu0
      %v882 = vpop.f32.mrb[0].mxu0
      %883 = vdwg.mxu0
      %884 = vmatprep.subr.bf16.mxu0 0
      %885 = vmatpush1.bf16.msra.mxu0 %v716
      %886 = vmatprep.subr.bf16.mxu0 0
      %887 = vmatpush1.bf16.msra.mxu0 %v717
      %888 = vmatprep.subr.bf16.mxu0 0
      %889 = vmatpush1.bf16.msra.mxu0 %v718
      %890 = vmatprep.subr.bf16.mxu0 0
      %891 = vmatpush1.bf16.msra.mxu0 %v719
      %892 = vmatprep.subr.bf16.mxu0 0
      %893 = vmatpush1.bf16.msra.mxu0 %v720
      %894 = vmatprep.subr.bf16.mxu0 0
      %895 = vmatpush1.bf16.msra.mxu0 %v721
      %896 = vmatprep.subr.bf16.mxu0 0
      %897 = vmatpush1.bf16.msra.mxu0 %v722
      %898 = vmatprep.subr.bf16.mxu0 0
      %899 = vmatpush1.bf16.msra.mxu0 %v723
      %900 = vmatprep.subr.bf16.mxu0 0
      %901 = vmatpush1.bf16.msra.mxu0 %v724
      %902 = vmatprep.subr.bf16.mxu0 0
      %903 = vmatpush1.bf16.msra.mxu0 %v725
      %904 = vmatprep.subr.bf16.mxu0 0
      %905 = vmatpush1.bf16.msra.mxu0 %v726
      %906 = vmatprep.subr.bf16.mxu0 0
      %907 = vmatpush1.bf16.msra.mxu0 %v727
      %908 = vmatprep.subr.bf16.mxu0 0
      %909 = vmatpush1.bf16.msra.mxu0 %v728
      %910 = vmatprep.subr.bf16.mxu0 0
      %911 = vmatpush1.bf16.msra.mxu0 %v729
      %912 = vmatprep.subr.bf16.mxu0 0
      %913 = vmatpush1.bf16.msra.mxu0 %v730
      %914 = vmatprep.subr.bf16.mxu0 0
      %915 = vmatpush1.bf16.msra.mxu0 %v731
      %916 = vmatprep.mubr.bf16.mxu0 %v387
      %917 = vmatmul.mubr.bf16.gmra.mrb[0].mxu0 %v385
      %v918 = vpop.f32.mrb[0].mxu0
      %v919 = vadd.f32 %v879, %v918
      %v920 = vpop.f32.mrb[0].mxu0
      %v921 = vpop.f32.mrb[0].mxu0
      %v922 = vpop.f32.mrb[0].mxu0
      %923 = vdwg.mxu0
      %924 = vmatprep.subr.bf16.mxu0 0
      %925 = vmatpush1.bf16.msra.mxu0 %v732
      %926 = vmatprep.subr.bf16.mxu0 0
      %927 = vmatpush1.bf16.msra.mxu0 %v733
      %928 = vmatprep.subr.bf16.mxu0 0
      %929 = vmatpush1.bf16.msra.mxu0 %v734
      %930 = vmatprep.subr.bf16.mxu0 0
      %931 = vmatpush1.bf16.msra.mxu0 %v735
      %932 = vmatprep.subr.bf16.mxu0 0
      %933 = vmatpush1.bf16.msra.mxu0 %v736
      %934 = vmatprep.subr.bf16.mxu0 0
      %935 = vmatpush1.bf16.msra.mxu0 %v737
      %936 = vmatprep.subr.bf16.mxu0 0
      %937 = vmatpush1.bf16.msra.mxu0 %v738
      %938 = vmatprep.subr.bf16.mxu0 0
      %939 = vmatpush1.bf16.msra.mxu0 %v739
      %940 = vmatprep.subr.bf16.mxu0 0
      %941 = vmatpush1.bf16.msra.mxu0 %v740
      %942 = vmatprep.subr.bf16.mxu0 0
      %943 = vmatpush1.bf16.msra.mxu0 %v741
      %944 = vmatprep.subr.bf16.mxu0 0
      %945 = vmatpush1.bf16.msra.mxu0 %v742
      %946 = vmatprep.subr.bf16.mxu0 0
      %947 = vmatpush1.bf16.msra.mxu0 %v743
      %948 = vmatprep.subr.bf16.mxu0 0
      %949 = vmatpush1.bf16.msra.mxu0 %v744
      %950 = vmatprep.subr.bf16.mxu0 0
      %951 = vmatpush1.bf16.msra.mxu0 %v745
      %952 = vmatprep.subr.bf16.mxu0 0
      %953 = vmatpush1.bf16.msra.mxu0 %v746
      %954 = vmatprep.subr.bf16.mxu0 0
      %955 = vmatpush1.bf16.msra.mxu0 %v747
      %956 = vmatprep.mubr.bf16.mxu0 %v384
      %957 = vmatmul.mubr.bf16.gmra.mrb[0].mxu0 %v370
      %v958 = vpop.f32.mrb[0].mxu0
      %v959 = vadd.f32 %v919, %v958
      %v960 = vpop.f32.mrb[0].mxu0
      %v961 = vpop.f32.mrb[0].mxu0
      %v962 = vpop.f32.mrb[0].mxu0
      %963 = vdwg.mxu0
      %964 = vmatprep.subr.bf16.mxu0 0
      %965 = vmatpush1.bf16.msra.mxu0 %v748
      %966 = vmatprep.subr.bf16.mxu0 0
      %967 = vmatpush1.bf16.msra.mxu0 %v749
      %968 = vmatprep.subr.bf16.mxu0 0
      %969 = vmatpush1.bf16.msra.mxu0 %v750
      %970 = vmatprep.subr.bf16.mxu0 0
      %971 = vmatpush1.bf16.msra.mxu0 %v751
      %972 = vmatprep.subr.bf16.mxu0 0
      %973 = vmatpush1.bf16.msra.mxu0 %v752
      %974 = vmatprep.subr.bf16.mxu0 0
      %975 = vmatpush1.bf16.msra.mxu0 %v753
      %976 = vmatprep.subr.bf16.mxu0 0
      %977 = vmatpush1.bf16.msra.mxu0 %v754
      %978 = vmatprep.subr.bf16.mxu0 0
      %979 = vmatpush1.bf16.msra.mxu0 %v755
      %980 = vmatprep.subr.bf16.mxu0 0
      %981 = vmatpush1.bf16.msra.mxu0 %v756
      %982 = vmatprep.subr.bf16.mxu0 0
      %983 = vmatpush1.bf16.msra.mxu0 %v757
      %984 = vmatprep.subr.bf16.mxu0 0
      %985 = vmatpush1.bf16.msra.mxu0 %v758
      %986 = vmatprep.subr.bf16.mxu0 0
      %987 = vmatpush1.bf16.msra.mxu0 %v759
      %988 = vmatprep.subr.bf16.mxu0 0
      %989 = vmatpush1.bf16.msra.mxu0 %v760
      %990 = vmatprep.subr.bf16.mxu0 0
      %991 = vmatpush1.bf16.msra.mxu0 %v761
      %992 = vmatprep.subr.bf16.mxu0 0
      %993 = vmatpush1.bf16.msra.mxu0 %v762
      %994 = vmatprep.subr.bf16.mxu0 0
      %995 = vmatpush1.bf16.msra.mxu0 %v763
      %996 = vmatprep.mubr.bf16.mxu0 %v388
      %997 = vmatmul.mubr.bf16.gmra.mrb[0].mxu0 %v386
      %v998 = vpop.f32.mrb[0].mxu0
      %v999 = vadd.f32 %v959, %v998
      %v1000 = vpop.f32.mrb[0].mxu0
      %v1001 = vpop.f32.mrb[0].mxu0
      %v1002 = vpop.f32.mrb[0].mxu0
      %1003 = vdwg.mxu0
      %1004 = vmatprep.subr.bf16.mxu0 0
      %1005 = vmatpush1.bf16.msra.mxu0 %v764
      %1006 = vmatprep.subr.bf16.mxu0 0
      %1007 = vmatpush1.bf16.msra.mxu0 %v765
      %1008 = vmatprep.subr.bf16.mxu0 0
      %1009 = vmatpush1.bf16.msra.mxu0 %v766
      %1010 = vmatprep.subr.bf16.mxu0 0
      %1011 = vmatpush1.bf16.msra.mxu0 %v767
      %1012 = vmatprep.subr.bf16.mxu0 0
      %1013 = vmatpush1.bf16.msra.mxu0 %v768
      %1014 = vmatprep.subr.bf16.mxu0 0
      %1015 = vmatpush1.bf16.msra.mxu0 %v769
      %1016 = vmatprep.subr.bf16.mxu0 0
      %1017 = vmatpush1.bf16.msra.mxu0 %v770
      %1018 = vmatprep.subr.bf16.mxu0 0
      %1019 = vmatpush1.bf16.msra.mxu0 %v771
      %1020 = vmatprep.subr.bf16.mxu0 0
      %1021 = vmatpush1.bf16.msra.mxu0 0
      %1022 = vmatprep.subr.bf16.mxu0 0
      %1023 = vmatpush1.bf16.msra.mxu0 0
      %1024 = vmatprep.subr.bf16.mxu0 0
      %1025 = vmatpush1.bf16.msra.mxu0 0
      %1026 = vmatprep.subr.bf16.mxu0 0
      %1027 = vmatpush1.bf16.msra.mxu0 0
      %1028 = vmatprep.subr.bf16.mxu0 0
      %1029 = vmatpush1.bf16.msra.mxu0 0
      %1030 = vmatprep.subr.bf16.mxu0 0
      %1031 = vmatpush1.bf16.msra.mxu0 0
      %1032 = vmatprep.subr.bf16.mxu0 0
      %1033 = vmatpush1.bf16.msra.mxu0 0
      %1034 = vmatprep.subr.bf16.mxu0 0
      %1035 = vmatpush1.bf16.msra.mxu0 0
      %1036 = vmatprep.mubr.bf16.mxu0 0
      %1037 = vmatmul.mubr.bf16.gmra.mrb[0].mxu0 %v402
      %v1038 = vpop.f32.mrb[0].mxu0
      %v1039 = vadd.f32 %v999, %v1038
      %v1040 = vpop.f32.mrb[0].mxu0
      %v1041 = vpop.f32.mrb[0].mxu0
      %v1042 = vpop.f32.mrb[0].mxu0
      %1043 = vdwg.mxu0
      %vm1044 = vcmask 1041408
      %v1045 = vsel %vm1044, %v1039, 0.0
      %v1046 = vrot.slane %v1045, 4
      %v1047 = vadd.f32 %v1045, %v1046
      %v1048 = vrot.slane %v1047, 2
      %v1049 = vadd.f32 %v1047, %v1048
      %v1050 = vrot.slane %v1049, 1
      %v1051 = vadd.f32 %v1049, %v1050
      %v1052 = vrcp.pop 2.0
      %v1053 = vmul.f32 %v1051, %v1052
      %v1054 = vsub.f32 %v1039, %v1053
      %v1055 = vmul.f32 %v1054, %v1054
      %v1056 = vsel %vm1044, %v1055, 0.0
      %v1057 = vrot.slane %v1056, 4
      %v1058 = vadd.f32 %v1056, %v1057
      %v1059 = vrot.slane %v1058, 2
      %v1060 = vadd.f32 %v1058, %v1059
      %v1061 = vrot.slane %v1060, 1
      %v1062 = vadd.f32 %v1060, %v1061
      %v1063 = vmul.f32 %v1062, %v1052
      %v1064 = vadd.f32 %v1063, 1e-05
      %v1065 = vrsqrt.pop %v1064
      %v1066 = vmul.f32 %v1054, %v1065
      %v1067 = vld [vmem:[%s2] sm:$0x1]
      %v1069 = vlaneseq
      %v1070 = vshrl.u32 %v1069, 7
      %v1071 = vsub.s32 0, %v1070
      %v1072 = vrot.slane %v1067, %v1071
      %v1074 = vmul.f32 %v1066, %v1072
      %v1075 = vld [vmem:[%s3] sm:$0x1]
      %v1077 = vlaneseq
      %v1078 = vshrl.u32 %v1077, 7
      %v1079 = vsub.s32 0, %v1078
      %v1080 = vrot.slane %v1075, %v1079
      %v1082 = vadd.f32 %v1074, %v1080
      %vm1083 = vcmp.gt.f32.partialorder %v1082, 0.0
      %v1084 = vmul.f32 %v1082, 0.01
      %v1085 = vsel %vm1083, %v1082, %v1084
      %v1086 = vpack.c.bf16 %v1085, %v1085
      %1087 = vst [vmem:[%s190] sm:$0x1] %v1086
      %p1088 = scmp.lt.s32.totalorder %s15, 1
      %s1089 = scalar_select %p1088, %s15, 1
      %s1090 = scalar_lea.vmem %s4, %s1089
      // Predicated region
      $region37: #{el_paro_net_bigger.8} parent=35 // pred_check
        %p1091 = pneg %p122
      $region38: #{el_paro_net_bigger.8} parent=35 // pred_check_branch
        %1093 = sbr.rel (%p1091) target = $region40
      $region39: #{el_paro_net_bigger.8} parent=35 // pred_region
        _
      $region40: #{el_paro_net_bigger.8} parent=35 // pred_fallthru
        _
    $region36: #{el_paro_net_bigger.8} parent=5 // pred_fallthru
      _
    %p1094 = scmp.le.s32.totalorder 2, %s10
    // Predicated region
    $region41: #{el_paro_net_bigger.8} parent=5 // pred_check
      %p1095 = pneg %p1094
    $region42: #{el_paro_net_bigger.8} parent=5 // pred_check_branch
      %1097 = sbr.rel (%p1095) target = $region44
    $region43: #{el_paro_net_bigger.8} parent=5 // pred_region
      %s1098 = ssub.s32 %s10, 2
      // Predicated region
      $region45: #{el_paro_net_bigger.8} parent=43 // pred_check
        %p1099 = pneg %p128
      $region46: #{el_paro_net_bigger.8} parent=43 // pred_check_branch
        %1101 = sbr.rel (%p1099) target = $region48
      $region47: #{el_paro_net_bigger.8} parent=43 // pred_region
        %p1102 = scmp.lt.s32.totalorder %s16, 1
        %s1103 = scalar_select %p1102, %s16, 1
        %s1104 = scalar_lea.vmem %s4, %s1103
      $region48: #{el_paro_net_bigger.8} parent=43 // pred_fallthru
        _
    $region44: #{el_paro_net_bigger.8} parent=5 // pred_fallthru
      _
  $region6: #{el_paro_net_bigger.8} parent=0 // loop_footer
    %s14 = sadd.s32 1, %s10
  $region7: #{el_paro_net_bigger.8} parent=0 // loop_footer_branch
    %9 = sbr.rel target = $region3
  $region8: #{el_paro_net_bigger.8} parent=0 // loop_exit
    _

</llo_original>
